<compile_context>
chip_gen: v7x
topology: tpu7x:2x2x1
jax: 0.10.0
libtpu: 0.0.40
codegen_flags: <defaults>
</compile_context>

<pallas_src>
import jax
import jax.numpy as jnp
import numpy as np
from jax.experimental import pallas as pl
from jax.experimental.pallas import tpu as pltpu

LANE = 128  # last-dim (lane) blocks are padded to a multiple of this


def _round_up(v, m):
    return (v + m - 1) // m * m


def _pick_row_tile(h, target=8):
    """Largest divisor of h that is <= target (row-block height)."""
    if h <= target:
        return h
    for t in range(target, 0, -1):
        if h % t == 0:
            return t
    return h


# --------------------------------------------------------------------------
# Fused Pallas kernel:
#   conv1x1+BN+ReLU -> conv3x3+BN+ReLU -> conv1x1+BN -> +identity -> ReLU
# for one (batch, row-block) grid point.
# --------------------------------------------------------------------------
def _bottleneck_kernel(x_ref, w1_ref, w2_ref, w3_ref, b1_ref, b2_ref, b3_ref,
                       o_ref, y1_ref):
    # x_ref : (H, W, Cp)       bf16  (resident across the row-block axis)
    # w1_ref: (Cp, Wp)         bf16  (BN1 scale folded in)
    # w2_ref: (3, 3, Wp, Wp)   bf16  (HWIO, BN2 scale folded in)
    # w3_ref: (Wp, Cp)         bf16  (BN3 scale folded in)
    # b1/b2 : (1, Wp) f32,  b3: (1, Cp) f32
    # o_ref : (TH, W, Cp)      f32   output row block
    # y1_ref: (H+2, W+2, Wp)   f32   scratch: conv1 output with zero halo
    r = pl.program_id(1)
    H, W, Cp = x_ref.shape
    Wp = w1_ref.shape[1]
    TH = o_ref.shape[0]

    # ---- stage 1 (once per image): 1x1 conv + bias + ReLU into padded scratch
    @pl.when(r == 0)
    def _():
        y1_ref[...] = jnp.zeros_like(y1_ref)          # also zeroes the 1-px halo
        x_full = x_ref[...].reshape(H * W, Cp)
        y1 = jnp.dot(x_full, w1_ref[...], preferred_element_type=jnp.float32)
        y1 = jnp.maximum(y1 + b1_ref[...], 0.0)
        y1_ref[pl.ds(1, H), pl.ds(1, W), :] = y1.reshape(H, W, Wp)

    row0 = r * TH
    if TH % 8 == 0:
        row0 = pl.multiple_of(row0, 8)

    # ---- stage 2: 3x3 conv + bias + ReLU on this row block
    acc = jnp.zeros((TH * W, Wp), jnp.float32)
    for kh in range(3):
        for kw in range(3):
            win = y1_ref[pl.ds(row0 + kh, TH), pl.ds(kw, W), :]
            acc = acc + jnp.dot(
                win.astype(jnp.bfloat16).reshape(TH * W, Wp),
                w2_ref[kh, kw], preferred_element_type=jnp.float32)
    # TODO(synk): per-tap slice+reshape still relayouts inside VMEM; a
    # roll/dot_general formulation would shave remaining vld/XLU work.
    y2 = jnp.maximum(acc + b2_ref[...], 0.0).astype(jnp.bfloat16)

    # ---- stage 3: 1x1 conv + bias + residual add + ReLU
    y3 = jnp.dot(y2, w3_ref[...], preferred_element_type=jnp.float32)
    ident = x_ref[pl.ds(row0, TH), :, :].reshape(TH * W, Cp).astype(jnp.float32)
    y3 = jnp.maximum(y3 + b3_ref[...] + ident, 0.0)
    o_ref[...] = y3.reshape(TH, W, Cp)


# --------------------------------------------------------------------------
# Parameter preparation (BN fold, bf16 cast) -- shared with the reference.
# --------------------------------------------------------------------------
def _bn_fold(gamma, beta, mean, var, eps=1e-5):
    scale = gamma / jnp.sqrt(var + eps)
    bias = beta - mean * scale
    return scale.astype(jnp.float32), bias.astype(jnp.float32)


def _prepare_weights(params, eps=1e-5):
    """Fold inference-mode BN scale into conv weights; bf16 weights, f32 biases."""
    s1, b1 = _bn_fold(params["g1"], params["be1"], params["m1"], params["v1"], eps)
    s2, b2 = _bn_fold(params["g2"], params["be2"], params["m2"], params["v2"], eps)
    s3, b3 = _bn_fold(params["g3"], params["be3"], params["m3"], params["v3"], eps)
    w1 = (params["w1"] * s1[None, :]).astype(jnp.bfloat16)               # (Cin, width)
    w2 = (params["w2"] * s2[None, None, None, :]).astype(jnp.bfloat16)   # (3,3,width,width)
    w3 = (params["w3"] * s3[None, :]).astype(jnp.bfloat16)               # (width, Cout)
    return (w1, w2, w3), (b1, b2, b3)


# --------------------------------------------------------------------------
# Bottleneck forward (Pallas)
# --------------------------------------------------------------------------
@jax.jit
def bottleneck_forward(x_nchw, params):
    x = jnp.transpose(x_nchw, (0, 2, 3, 1)).astype(jnp.float32)   # NCHW -> NHWC
    N, H, W, Cin = x.shape
    width = params["w1"].shape[1]
    Cout = params["w3"].shape[1]
    assert Cin == Cout, "downsample=None requires inplanes == planes * expansion"

    (w1, w2, w3), (b1, b2, b3) = _prepare_weights(params)

    # Lane-dense channel padding (no-op when channels are already x128).
    Cp = _round_up(Cin, LANE)
    Wp = _round_up(width, LANE)
    w1 = jnp.pad(w1, ((0, Cp - Cin), (0, Wp - width)))
    w2 = jnp.pad(w2, ((0, 0), (0, 0), (0, Wp - width), (0, Wp - width)))
    w3 = jnp.pad(w3, ((0, Wp - width), (0, Cp - Cout)))
    b1 = jnp.pad(b1, (0, Wp - width)).reshape(1, Wp)
    b2 = jnp.pad(b2, (0, Wp - width)).reshape(1, Wp)
    b3 = jnp.pad(b3, (0, Cp - Cout)).reshape(1, Cp)
    xb = jnp.pad(x, ((0, 0), (0, 0), (0, 0), (0, Cp - Cin))).astype(jnp.bfloat16)

    TH = _pick_row_tile(H)     # row-block height (divides H)
    R = H // TH

    out = pl.pallas_call(
        _bottleneck_kernel,
        out_shape=jax.ShapeDtypeStruct((N, H, W, Cp), jnp.float32),
        grid=(N, R),
        in_specs=[
            # per-image input block, resident across the row-block axis
            pl.BlockSpec((None, H, W, Cp), lambda b, r: (b, 0, 0, 0)),
            pl.BlockSpec((Cp, Wp), lambda b, r: (0, 0)),
            pl.BlockSpec((3, 3, Wp, Wp), lambda b, r: (0, 0, 0, 0)),
            pl.BlockSpec((Wp, Cp), lambda b, r: (0, 0)),
            pl.BlockSpec((1, Wp), lambda b, r: (0, 0)),
            pl.BlockSpec((1, Wp), lambda b, r: (0, 0)),
            pl.BlockSpec((1, Cp), lambda b, r: (0, 0)),
        ],
        out_specs=pl.BlockSpec((None, TH, W, Cp), lambda b, r: (b, r, 0, 0)),
        scratch_shapes=[pltpu.VMEM((H + 2, W + 2, Wp), jnp.float32)],
        compiler_params=pltpu.CompilerParams(
            dimension_semantics=("parallel", "arbitrary")),
    )(xb, w1, w2, w3, b1, b2, b3)

    out = out[..., :Cout]                       # drop lane padding
    return jnp.transpose(out, (0, 3, 1, 2))     # back to NCHW


# --------------------------------------------------------------------------
# References (for verification)
# --------------------------------------------------------------------------
def _conv_nhwc(y, w_hwio, padding, precision=None, preferred=None):
    return jax.lax.conv_general_dilated(
        y, w_hwio, window_strides=(1, 1), padding=padding,
        dimension_numbers=("NHWC", "HWIO", "NHWC"),
        precision=precision, preferred_element_type=preferred)


@jax.jit
def reference_forward_mixed(x_nchw, params):
    """lax.conv reference using the kernel's numerical policy
    (bf16 matmul operands, f32 accumulation, BN scale folded into weights)."""
    x = jnp.transpose(x_nchw, (0, 2, 3, 1)).astype(jnp.float32)
    (w1, w2, w3), (b1, b2, b3) = _prepare_weights(params)
    Cin, width = params["w1"].shape
    Cout = params["w3"].shape[1]
    xb = x.astype(jnp.bfloat16)
    y1 = jax.nn.relu(_conv_nhwc(xb, w1.reshape(1, 1, Cin, width), "VALID",
                                preferred=jnp.float32) + b1)
    y2 = jax.nn.relu(_conv_nhwc(y1.astype(jnp.bfloat16), w2, [(1, 1), (1, 1)],
                                preferred=jnp.float32) + b2)
    y3 = _conv_nhwc(y2.astype(jnp.bfloat16), w3.reshape(1, 1, width, Cout),
                    "VALID", preferred=jnp.float32) + b3
    y3 = jax.nn.relu(y3 + xb.astype(jnp.float32))
    return jnp.transpose(y3, (0, 3, 1, 2))


@jax.jit
def reference_forward_f32(x_nchw, params):
    """Full-precision reference matching the PyTorch module exactly."""
    x = jnp.transpose(x_nchw, (0, 2, 3, 1)).astype(jnp.float32)

    def bn(y, g, be, m, v, eps=1e-5):
        return (y - m) / jnp.sqrt(v + eps) * g + be

    Cin, width = params["w1"].shape
    Cout = params["w3"].shape[1]
    hp = jax.lax.Precision.HIGHEST
    o = _conv_nhwc(x, params["w1"].reshape(1, 1, Cin, width), "VALID", precision=hp)
    o = jax.nn.relu(bn(o, params["g1"], params["be1"], params["m1"], params["v1"]))
    o = _conv_nhwc(o, params["w2"], [(1, 1), (1, 1)], precision=hp)
    o = jax.nn.relu(bn(o, params["g2"], params["be2"], params["m2"], params["v2"]))
    o = _conv_nhwc(o, params["w3"].reshape(1, 1, width, Cout), "VALID", precision=hp)
    o = bn(o, params["g3"], params["be3"], params["m3"], params["v3"])
    o = jax.nn.relu(o + x)
    return jnp.transpose(o, (0, 3, 1, 2))


# --------------------------------------------------------------------------
# Deterministic synthetic parameters
# --------------------------------------------------------------------------
def make_params(key, inplanes, planes):
    width = planes          # base_width=64, groups=1 -> width = planes
    cout = planes * 4       # expansion
    keys = jax.random.split(key, 6)

    def bn_params(k, c):
        k1, k2, k3, k4 = jax.random.split(k, 4)
        return dict(
            g=jax.random.uniform(k1, (c,), jnp.float32, 0.8, 1.2),
            be=0.1 * jax.random.normal(k2, (c,), jnp.float32),
            m=0.1 * jax.random.normal(k3, (c,), jnp.float32),
            v=jax.random.uniform(k4, (c,), jnp.float32, 0.8, 1.2),
        )

    bn1 = bn_params(keys[3], width)
    bn2 = bn_params(keys[4], width)
    bn3 = bn_params(keys[5], cout)

    return {
        # conv weights stored ready for NHWC matmul / HWIO conv
        # (torch conv1x1 weight (Cout,Cin,1,1) <-> (Cin,Cout) transpose here).
        "w1": 0.2 * jax.random.normal(keys[0], (inplanes, width), jnp.float32),
        "w2": 0.2 * jax.random.normal(keys[1], (3, 3, width, width), jnp.float32),
        "w3": 0.2 * jax.random.normal(keys[2], (width, cout), jnp.float32),
        "g1": bn1["g"], "be1": bn1["be"], "m1": bn1["m"], "v1": bn1["v"],
        "g2": bn2["g"], "be2": bn2["be"], "m2": bn2["m"], "v2": bn2["v"],
        "g3": bn3["g"], "be3": bn3["be"], "m3": bn3["m"], "v3": bn3["v"],
    }


# --------------------------------------------------------------------------
if __name__ == "__main__":
    key = jax.random.PRNGKey(0)
    k_x, k_p = jax.random.split(key)

    batch, planes, spatial = 2, 4, 16
    inplanes = planes * 4          # identity path matches (downsample=None)

    x = jax.random.normal(k_x, (batch, inplanes, spatial, spatial), jnp.float32)
    params = make_params(k_p, inplanes, planes)

    out = jax.block_until_ready(bottleneck_forward(x, params))
    assert out.shape == (batch, planes * 4, spatial, spatial)

    # Strict check vs a lax.conv reference with the same numerical policy
    # (bf16 MXU operands, f32 accumulation, BN scale folded into weights).
    ref_mixed = jax.block_until_ready(reference_forward_mixed(x, params))
    np.testing.assert_allclose(np.asarray(out), np.asarray(ref_mixed),
                               atol=5e-3, rtol=5e-3)

    # Loose sanity check vs the exact f32 PyTorch-equivalent forward
    # (difference is only the bf16 rounding of the matmul operands).
    ref_f32 = jax.block_until_ready(reference_forward_f32(x, params))
    np.testing.assert_allclose(np.asarray(out), np.asarray(ref_f32),
                               atol=1e-1, rtol=1e-1)

    print("KERNEL_OK")
</pallas_src>

<mosaic_0001>
module attributes {stable_mosaic.version = 11 : i64} {
  func.func @_bottleneck_kernel(%arg0: i32, %arg1: i32, %arg2: memref<1x16x16x128xbf16, #tpu.memory_space<vmem>>, %arg3: memref<128x128xbf16, #tpu.memory_space<vmem>>, %arg4: memref<3x3x128x128xbf16, #tpu.memory_space<vmem>>, %arg5: memref<128x128xbf16, #tpu.memory_space<vmem>>, %arg6: memref<1x128xf32, #tpu.memory_space<vmem>>, %arg7: memref<1x128xf32, #tpu.memory_space<vmem>>, %arg8: memref<1x128xf32, #tpu.memory_space<vmem>>, %arg9: memref<1x8x16x128xf32, #tpu.memory_space<vmem>>, %arg10: memref<18x18x128xf32, #tpu.memory_space<vmem>>) attributes {dimension_semantics = [#tpu.dimension_semantics<parallel>, #tpu.dimension_semantics<arbitrary>], iteration_bounds = array<i64: 2, 2>, scalar_prefetch = 0 : i64, scratch_operands = 1 : i64, tpu.core_type = #tpu.core_type<tc>, window_params = [{transform_indices = @transform_0, window_bounds = array<i64: 1, 16, 16, 128>}, {pipeline_mode = #tpu.pipeline_mode<synchronous>, transform_indices = @transform_1, window_bounds = array<i64: 128, 128>}, {pipeline_mode = #tpu.pipeline_mode<synchronous>, transform_indices = @transform_2, window_bounds = array<i64: 3, 3, 128, 128>}, {pipeline_mode = #tpu.pipeline_mode<synchronous>, transform_indices = @transform_3, window_bounds = array<i64: 128, 128>}, {pipeline_mode = #tpu.pipeline_mode<synchronous>, transform_indices = @transform_4, window_bounds = array<i64: 1, 128>}, {pipeline_mode = #tpu.pipeline_mode<synchronous>, transform_indices = @transform_5, window_bounds = array<i64: 1, 128>}, {pipeline_mode = #tpu.pipeline_mode<synchronous>, transform_indices = @transform_6, window_bounds = array<i64: 1, 128>}, {transform_indices = @transform_7, window_bounds = array<i64: 1, 8, 16, 128>}]} {
    %c0_i32 = arith.constant 0 : i32
    %0 = arith.cmpi eq, %arg1, %c0_i32 : i32
    %1 = arith.extui %0 : i1 to i32
    %c0_i32_0 = arith.constant 0 : i32
    %2 = arith.cmpi ne, %1, %c0_i32_0 : i32
    scf.if %2 {
      %cst_84 = arith.constant 0.000000e+00 : f32
      %110 = vector.broadcast %cst_84 : f32 to vector<18x18x128xf32>
      %c0_85 = arith.constant 0 : index
      %c0_86 = arith.constant 0 : index
      %c0_87 = arith.constant 0 : index
      %111 = vector.load %arg10[%c0_85, %c0_86, %c0_87] : memref<18x18x128xf32, #tpu.memory_space<vmem>>, vector<18x18x128xf32>
      tpu.vector_store %arg10[%c0_85, %c0_86, %c0_87], %110 {strides = array<i32>} : memref<18x18x128xf32, #tpu.memory_space<vmem>>, vector<18x18x128xf32>,
      %c0_88 = arith.constant 0 : index
      %c0_89 = arith.constant 0 : index
      %c0_90 = arith.constant 0 : index
      %c0_91 = arith.constant 0 : index
      %112 = vector.load %arg2[%c0_88, %c0_89, %c0_90, %c0_91] : memref<1x16x16x128xbf16, #tpu.memory_space<vmem>>, vector<1x16x16x128xbf16>
      %113 = vector.shape_cast %112 : vector<1x16x16x128xbf16> to vector<16x16x128xbf16>
      %114 = vector.shape_cast %113 : vector<16x16x128xbf16> to vector<256x128xbf16>
      %c0_92 = arith.constant 0 : index
      %c0_93 = arith.constant 0 : index
      %115 = vector.load %arg3[%c0_92, %c0_93] : memref<128x128xbf16, #tpu.memory_space<vmem>>, vector<128x128xbf16>
      %cst_94 = arith.constant dense<0.000000e+00> : vector<256x128xf32>
      %116 = tpu.matmul %114, %115, %cst_94 {dimension_numbers = #tpu.dot_dimension_numbers<[1], [0], [0], [1], [0, 0, 1, 1], [], []>} : vector<256x128xbf16>, vector<128x128xbf16>, vector<256x128xf32> -> vector<256x128xf32>
      %c0_95 = arith.constant 0 : index
      %c0_96 = arith.constant 0 : index
      %117 = vector.load %arg6[%c0_95, %c0_96] : memref<1x128xf32, #tpu.memory_space<vmem>>, vector<1x128xf32>
      %118 = vector.broadcast %117 : vector<1x128xf32> to vector<256x128xf32>
      %119 = arith.addf %116, %118 : vector<256x128xf32>
      %cst_97 = arith.constant 0.000000e+00 : f32
      %120 = vector.broadcast %cst_97 : f32 to vector<256x128xf32>
      %121 = arith.maximumf %119, %120 : vector<256x128xf32>
      %122 = vector.shape_cast %121 : vector<256x128xf32> to vector<16x16x128xf32>
      %c1_98 = arith.constant 1 : index
      %c1_99 = arith.constant 1 : index
      %c0_100 = arith.constant 0 : index
      %123 = vector.load %arg10[%c1_98, %c1_99, %c0_100] : memref<18x18x128xf32, #tpu.memory_space<vmem>>, vector<16x16x128xf32>
      tpu.vector_store %arg10[%c1_98, %c1_99, %c0_100], %122 {strides = array<i32>} : memref<18x18x128xf32, #tpu.memory_space<vmem>>, vector<16x16x128xf32>,
    } else {
    }
    %c8_i32 = arith.constant 8 : i32
    %3 = arith.muli %arg1, %c8_i32 : i32
    %4 = tpu.assume_multiple %3, 8 : i32
    %cst = arith.constant 0.000000e+00 : f32
    %5 = vector.broadcast %cst : f32 to vector<128x128xf32>
    %c0_i32_1 = arith.constant 0 : i32
    %6 = arith.addi %4, %c0_i32_1 : i32
    %7 = arith.index_cast %6 : i32 to index
    %c0 = arith.constant 0 : index
    %c0_2 = arith.constant 0 : index
    %8 = vector.load %arg10[%7, %c0, %c0_2] : memref<18x18x128xf32, #tpu.memory_space<vmem>>, vector<8x16x128xf32>
    %9 = arith.truncf %8 : vector<8x16x128xf32> to vector<8x16x128xbf16>
    %10 = vector.shape_cast %9 : vector<8x16x128xbf16> to vector<128x128xbf16>
    %c0_3 = arith.constant 0 : index
    %c0_4 = arith.constant 0 : index
    %c0_5 = arith.constant 0 : index
    %c0_6 = arith.constant 0 : index
    %11 = vector.load %arg4[%c0_3, %c0_4, %c0_5, %c0_6] : memref<3x3x128x128xbf16, #tpu.memory_space<vmem>>, vector<1x1x128x128xbf16>
    %12 = vector.shape_cast %11 : vector<1x1x128x128xbf16> to vector<128x128xbf16>
    %cst_7 = arith.constant dense<0.000000e+00> : vector<128x128xf32>
    %13 = tpu.matmul %10, %12, %cst_7 {dimension_numbers = #tpu.dot_dimension_numbers<[1], [0], [0], [1], [0, 0, 1, 1], [], []>} : vector<128x128xbf16>, vector<128x128xbf16>, vector<128x128xf32> -> vector<128x128xf32>
    %14 = arith.addf %5, %13 : vector<128x128xf32>
    %c0_i32_8 = arith.constant 0 : i32
    %15 = arith.addi %4, %c0_i32_8 : i32
    %16 = arith.index_cast %15 : i32 to index
    %c1 = arith.constant 1 : index
    %c0_9 = arith.constant 0 : index
    %17 = vector.load %arg10[%16, %c1, %c0_9] : memref<18x18x128xf32, #tpu.memory_space<vmem>>, vector<8x16x128xf32>
    %18 = arith.truncf %17 : vector<8x16x128xf32> to vector<8x16x128xbf16>
    %19 = vector.shape_cast %18 : vector<8x16x128xbf16> to vector<128x128xbf16>
    %c0_10 = arith.constant 0 : index
    %c1_11 = arith.constant 1 : index
    %c0_12 = arith.constant 0 : index
    %c0_13 = arith.constant 0 : index
    %20 = vector.load %arg4[%c0_10, %c1_11, %c0_12, %c0_13] : memref<3x3x128x128xbf16, #tpu.memory_space<vmem>>, vector<1x1x128x128xbf16>
    %21 = vector.shape_cast %20 : vector<1x1x128x128xbf16> to vector<128x128xbf16>
    %cst_14 = arith.constant dense<0.000000e+00> : vector<128x128xf32>
    %22 = tpu.matmul %19, %21, %cst_14 {dimension_numbers = #tpu.dot_dimension_numbers<[1], [0], [0], [1], [0, 0, 1, 1], [], []>} : vector<128x128xbf16>, vector<128x128xbf16>, vector<128x128xf32> -> vector<128x128xf32>
    %23 = arith.addf %14, %22 : vector<128x128xf32>
    %c0_i32_15 = arith.constant 0 : i32
    %24 = arith.addi %4, %c0_i32_15 : i32
    %25 = arith.index_cast %24 : i32 to index
    %c2 = arith.constant 2 : index
    %c0_16 = arith.constant 0 : index
    %26 = vector.load %arg10[%25, %c2, %c0_16] : memref<18x18x128xf32, #tpu.memory_space<vmem>>, vector<8x16x128xf32>
    %27 = arith.truncf %26 : vector<8x16x128xf32> to vector<8x16x128xbf16>
    %28 = vector.shape_cast %27 : vector<8x16x128xbf16> to vector<128x128xbf16>
    %c0_17 = arith.constant 0 : index
    %c2_18 = arith.constant 2 : index
    %c0_19 = arith.constant 0 : index
    %c0_20 = arith.constant 0 : index
    %29 = vector.load %arg4[%c0_17, %c2_18, %c0_19, %c0_20] : memref<3x3x128x128xbf16, #tpu.memory_space<vmem>>, vector<1x1x128x128xbf16>
    %30 = vector.shape_cast %29 : vector<1x1x128x128xbf16> to vector<128x128xbf16>
    %cst_21 = arith.constant dense<0.000000e+00> : vector<128x128xf32>
    %31 = tpu.matmul %28, %30, %cst_21 {dimension_numbers = #tpu.dot_dimension_numbers<[1], [0], [0], [1], [0, 0, 1, 1], [], []>} : vector<128x128xbf16>, vector<128x128xbf16>, vector<128x128xf32> -> vector<128x128xf32>
    %32 = arith.addf %23, %31 : vector<128x128xf32>
    %c1_i32 = arith.constant 1 : i32
    %33 = arith.addi %4, %c1_i32 : i32
    %34 = arith.index_cast %33 : i32 to index
    %c0_22 = arith.constant 0 : index
    %c0_23 = arith.constant 0 : index
    %35 = vector.load %arg10[%34, %c0_22, %c0_23] : memref<18x18x128xf32, #tpu.memory_space<vmem>>, vector<8x16x128xf32>
    %36 = arith.truncf %35 : vector<8x16x128xf32> to vector<8x16x128xbf16>
    %37 = vector.shape_cast %36 : vector<8x16x128xbf16> to vector<128x128xbf16>
    %c1_24 = arith.constant 1 : index
    %c0_25 = arith.constant 0 : index
    %c0_26 = arith.constant 0 : index
    %c0_27 = arith.constant 0 : index
    %38 = vector.load %arg4[%c1_24, %c0_25, %c0_26, %c0_27] : memref<3x3x128x128xbf16, #tpu.memory_space<vmem>>, vector<1x1x128x128xbf16>
    %39 = vector.shape_cast %38 : vector<1x1x128x128xbf16> to vector<128x128xbf16>
    %cst_28 = arith.constant dense<0.000000e+00> : vector<128x128xf32>
    %40 = tpu.matmul %37, %39, %cst_28 {dimension_numbers = #tpu.dot_dimension_numbers<[1], [0], [0], [1], [0, 0, 1, 1], [], []>} : vector<128x128xbf16>, vector<128x128xbf16>, vector<128x128xf32> -> vector<128x128xf32>
    %41 = arith.addf %32, %40 : vector<128x128xf32>
    %c1_i32_29 = arith.constant 1 : i32
    %42 = arith.addi %4, %c1_i32_29 : i32
    %43 = arith.index_cast %42 : i32 to index
    %c1_30 = arith.constant 1 : index
    %c0_31 = arith.constant 0 : index
    %44 = vector.load %arg10[%43, %c1_30, %c0_31] : memref<18x18x128xf32, #tpu.memory_space<vmem>>, vector<8x16x128xf32>
    %45 = arith.truncf %44 : vector<8x16x128xf32> to vector<8x16x128xbf16>
    %46 = vector.shape_cast %45 : vector<8x16x128xbf16> to vector<128x128xbf16>
    %c1_32 = arith.constant 1 : index
    %c1_33 = arith.constant 1 : index
    %c0_34 = arith.constant 0 : index
    %c0_35 = arith.constant 0 : index
    %47 = vector.load %arg4[%c1_32, %c1_33, %c0_34, %c0_35] : memref<3x3x128x128xbf16, #tpu.memory_space<vmem>>, vector<1x1x128x128xbf16>
    %48 = vector.shape_cast %47 : vector<1x1x128x128xbf16> to vector<128x128xbf16>
    %cst_36 = arith.constant dense<0.000000e+00> : vector<128x128xf32>
    %49 = tpu.matmul %46, %48, %cst_36 {dimension_numbers = #tpu.dot_dimension_numbers<[1], [0], [0], [1], [0, 0, 1, 1], [], []>} : vector<128x128xbf16>, vector<128x128xbf16>, vector<128x128xf32> -> vector<128x128xf32>
    %50 = arith.addf %41, %49 : vector<128x128xf32>
    %c1_i32_37 = arith.constant 1 : i32
    %51 = arith.addi %4, %c1_i32_37 : i32
    %52 = arith.index_cast %51 : i32 to index
    %c2_38 = arith.constant 2 : index
    %c0_39 = arith.constant 0 : index
    %53 = vector.load %arg10[%52, %c2_38, %c0_39] : memref<18x18x128xf32, #tpu.memory_space<vmem>>, vector<8x16x128xf32>
    %54 = arith.truncf %53 : vector<8x16x128xf32> to vector<8x16x128xbf16>
    %55 = vector.shape_cast %54 : vector<8x16x128xbf16> to vector<128x128xbf16>
    %c1_40 = arith.constant 1 : index
    %c2_41 = arith.constant 2 : index
    %c0_42 = arith.constant 0 : index
    %c0_43 = arith.constant 0 : index
    %56 = vector.load %arg4[%c1_40, %c2_41, %c0_42, %c0_43] : memref<3x3x128x128xbf16, #tpu.memory_space<vmem>>, vector<1x1x128x128xbf16>
    %57 = vector.shape_cast %56 : vector<1x1x128x128xbf16> to vector<128x128xbf16>
    %cst_44 = arith.constant dense<0.000000e+00> : vector<128x128xf32>
    %58 = tpu.matmul %55, %57, %cst_44 {dimension_numbers = #tpu.dot_dimension_numbers<[1], [0], [0], [1], [0, 0, 1, 1], [], []>} : vector<128x128xbf16>, vector<128x128xbf16>, vector<128x128xf32> -> vector<128x128xf32>
    %59 = arith.addf %50, %58 : vector<128x128xf32>
    %c2_i32 = arith.constant 2 : i32
    %60 = arith.addi %4, %c2_i32 : i32
    %61 = arith.index_cast %60 : i32 to index
    %c0_45 = arith.constant 0 : index
    %c0_46 = arith.constant 0 : index
    %62 = vector.load %arg10[%61, %c0_45, %c0_46] : memref<18x18x128xf32, #tpu.memory_space<vmem>>, vector<8x16x128xf32>
    %63 = arith.truncf %62 : vector<8x16x128xf32> to vector<8x16x128xbf16>
    %64 = vector.shape_cast %63 : vector<8x16x128xbf16> to vector<128x128xbf16>
    %c2_47 = arith.constant 2 : index
    %c0_48 = arith.constant 0 : index
    %c0_49 = arith.constant 0 : index
    %c0_50 = arith.constant 0 : index
    %65 = vector.load %arg4[%c2_47, %c0_48, %c0_49, %c0_50] : memref<3x3x128x128xbf16, #tpu.memory_space<vmem>>, vector<1x1x128x128xbf16>
    %66 = vector.shape_cast %65 : vector<1x1x128x128xbf16> to vector<128x128xbf16>
    %cst_51 = arith.constant dense<0.000000e+00> : vector<128x128xf32>
    %67 = tpu.matmul %64, %66, %cst_51 {dimension_numbers = #tpu.dot_dimension_numbers<[1], [0], [0], [1], [0, 0, 1, 1], [], []>} : vector<128x128xbf16>, vector<128x128xbf16>, vector<128x128xf32> -> vector<128x128xf32>
    %68 = arith.addf %59, %67 : vector<128x128xf32>
    %c2_i32_52 = arith.constant 2 : i32
    %69 = arith.addi %4, %c2_i32_52 : i32
    %70 = arith.index_cast %69 : i32 to index
    %c1_53 = arith.constant 1 : index
    %c0_54 = arith.constant 0 : index
    %71 = vector.load %arg10[%70, %c1_53, %c0_54] : memref<18x18x128xf32, #tpu.memory_space<vmem>>, vector<8x16x128xf32>
    %72 = arith.truncf %71 : vector<8x16x128xf32> to vector<8x16x128xbf16>
    %73 = vector.shape_cast %72 : vector<8x16x128xbf16> to vector<128x128xbf16>
    %c2_55 = arith.constant 2 : index
    %c1_56 = arith.constant 1 : index
    %c0_57 = arith.constant 0 : index
    %c0_58 = arith.constant 0 : index
    %74 = vector.load %arg4[%c2_55, %c1_56, %c0_57, %c0_58] : memref<3x3x128x128xbf16, #tpu.memory_space<vmem>>, vector<1x1x128x128xbf16>
    %75 = vector.shape_cast %74 : vector<1x1x128x128xbf16> to vector<128x128xbf16>
    %cst_59 = arith.constant dense<0.000000e+00> : vector<128x128xf32>
    %76 = tpu.matmul %73, %75, %cst_59 {dimension_numbers = #tpu.dot_dimension_numbers<[1], [0], [0], [1], [0, 0, 1, 1], [], []>} : vector<128x128xbf16>, vector<128x128xbf16>, vector<128x128xf32> -> vector<128x128xf32>
    %77 = arith.addf %68, %76 : vector<128x128xf32>
    %c2_i32_60 = arith.constant 2 : i32
    %78 = arith.addi %4, %c2_i32_60 : i32
    %79 = arith.index_cast %78 : i32 to index
    %c2_61 = arith.constant 2 : index
    %c0_62 = arith.constant 0 : index
    %80 = vector.load %arg10[%79, %c2_61, %c0_62] : memref<18x18x128xf32, #tpu.memory_space<vmem>>, vector<8x16x128xf32>
    %81 = arith.truncf %80 : vector<8x16x128xf32> to vector<8x16x128xbf16>
    %82 = vector.shape_cast %81 : vector<8x16x128xbf16> to vector<128x128xbf16>
    %c2_63 = arith.constant 2 : index
    %c2_64 = arith.constant 2 : index
    %c0_65 = arith.constant 0 : index
    %c0_66 = arith.constant 0 : index
    %83 = vector.load %arg4[%c2_63, %c2_64, %c0_65, %c0_66] : memref<3x3x128x128xbf16, #tpu.memory_space<vmem>>, vector<1x1x128x128xbf16>
    %84 = vector.shape_cast %83 : vector<1x1x128x128xbf16> to vector<128x128xbf16>
    %cst_67 = arith.constant dense<0.000000e+00> : vector<128x128xf32>
    %85 = tpu.matmul %82, %84, %cst_67 {dimension_numbers = #tpu.dot_dimension_numbers<[1], [0], [0], [1], [0, 0, 1, 1], [], []>} : vector<128x128xbf16>, vector<128x128xbf16>, vector<128x128xf32> -> vector<128x128xf32>
    %86 = arith.addf %77, %85 : vector<128x128xf32>
    %c0_68 = arith.constant 0 : index
    %c0_69 = arith.constant 0 : index
    %87 = vector.load %arg7[%c0_68, %c0_69] : memref<1x128xf32, #tpu.memory_space<vmem>>, vector<1x128xf32>
    %88 = vector.broadcast %87 : vector<1x128xf32> to vector<128x128xf32>
    %89 = arith.addf %86, %88 : vector<128x128xf32>
    %cst_70 = arith.constant 0.000000e+00 : f32
    %90 = vector.broadcast %cst_70 : f32 to vector<128x128xf32>
    %91 = arith.maximumf %89, %90 : vector<128x128xf32>
    %92 = arith.truncf %91 : vector<128x128xf32> to vector<128x128xbf16>
    %c0_71 = arith.constant 0 : index
    %c0_72 = arith.constant 0 : index
    %93 = vector.load %arg5[%c0_71, %c0_72] : memref<128x128xbf16, #tpu.memory_space<vmem>>, vector<128x128xbf16>
    %cst_73 = arith.constant dense<0.000000e+00> : vector<128x128xf32>
    %94 = tpu.matmul %92, %93, %cst_73 {dimension_numbers = #tpu.dot_dimension_numbers<[1], [0], [0], [1], [0, 0, 1, 1], [], []>} : vector<128x128xbf16>, vector<128x128xbf16>, vector<128x128xf32> -> vector<128x128xf32>
    %c0_74 = arith.constant 0 : index
    %95 = arith.index_cast %4 : i32 to index
    %c0_75 = arith.constant 0 : index
    %c0_76 = arith.constant 0 : index
    %96 = vector.load %arg2[%c0_74, %95, %c0_75, %c0_76] : memref<1x16x16x128xbf16, #tpu.memory_space<vmem>>, vector<1x8x16x128xbf16>
    %97 = vector.shape_cast %96 : vector<1x8x16x128xbf16> to vector<8x16x128xbf16>
    %98 = vector.shape_cast %97 : vector<8x16x128xbf16> to vector<128x128xbf16>
    %99 = arith.extf %98 : vector<128x128xbf16> to vector<128x128xf32>
    %c0_77 = arith.constant 0 : index
    %c0_78 = arith.constant 0 : index
    %100 = vector.load %arg8[%c0_77, %c0_78] : memref<1x128xf32, #tpu.memory_space<vmem>>, vector<1x128xf32>
    %101 = vector.broadcast %100 : vector<1x128xf32> to vector<128x128xf32>
    %102 = arith.addf %94, %101 : vector<128x128xf32>
    %103 = arith.addf %102, %99 : vector<128x128xf32>
    %cst_79 = arith.constant 0.000000e+00 : f32
    %104 = vector.broadcast %cst_79 : f32 to vector<128x128xf32>
    %105 = arith.maximumf %103, %104 : vector<128x128xf32>
    %106 = vector.shape_cast %105 : vector<128x128xf32> to vector<8x16x128xf32>
    %c0_80 = arith.constant 0 : index
    %c0_81 = arith.constant 0 : index
    %c0_82 = arith.constant 0 : index
    %c0_83 = arith.constant 0 : index
    %107 = vector.load %arg9[%c0_80, %c0_81, %c0_82, %c0_83] : memref<1x8x16x128xf32, #tpu.memory_space<vmem>>, vector<1x8x16x128xf32>
    %108 = vector.shape_cast %107 : vector<1x8x16x128xf32> to vector<8x16x128xf32>
    %109 = vector.shape_cast %106 : vector<8x16x128xf32> to vector<1x8x16x128xf32>
    tpu.vector_store %arg9[%c0_80, %c0_81, %c0_82, %c0_83], %109 {strides = array<i32>} : memref<1x8x16x128xf32, #tpu.memory_space<vmem>>, vector<1x8x16x128xf32>,
    return
  }
  func.func @transform_0(%arg0: i32, %arg1: i32) -> (i32, i32, i32, i32) {
    %c0_i32 = arith.constant 0 : i32
    %c0_i32_0 = arith.constant 0 : i32
    %c0_i32_1 = arith.constant 0 : i32
    %c0_i32_2 = arith.constant 0 : i32
    return %arg0, %c0_i32, %c0_i32_0, %c0_i32_1 : i32, i32, i32, i32
  }
  func.func @transform_1(%arg0: i32, %arg1: i32) -> (i32, i32) {
    %c0_i32 = arith.constant 0 : i32
    %c0_i32_0 = arith.constant 0 : i32
    %c0_i32_1 = arith.constant 0 : i32
    return %c0_i32, %c0_i32_0 : i32, i32
  }
  func.func @transform_2(%arg0: i32, %arg1: i32) -> (i32, i32, i32, i32) {
    %c0_i32 = arith.constant 0 : i32
    %c0_i32_0 = arith.constant 0 : i32
    %c0_i32_1 = arith.constant 0 : i32
    %c0_i32_2 = arith.constant 0 : i32
    %c0_i32_3 = arith.constant 0 : i32
    return %c0_i32, %c0_i32_0, %c0_i32_1, %c0_i32_2 : i32, i32, i32, i32
  }
  func.func @transform_3(%arg0: i32, %arg1: i32) -> (i32, i32) {
    %c0_i32 = arith.constant 0 : i32
    %c0_i32_0 = arith.constant 0 : i32
    %c0_i32_1 = arith.constant 0 : i32
    return %c0_i32, %c0_i32_0 : i32, i32
  }
  func.func @transform_4(%arg0: i32, %arg1: i32) -> (i32, i32) {
    %c0_i32 = arith.constant 0 : i32
    %c0_i32_0 = arith.constant 0 : i32
    %c0_i32_1 = arith.constant 0 : i32
    return %c0_i32, %c0_i32_0 : i32, i32
  }
  func.func @transform_5(%arg0: i32, %arg1: i32) -> (i32, i32) {
    %c0_i32 = arith.constant 0 : i32
    %c0_i32_0 = arith.constant 0 : i32
    %c0_i32_1 = arith.constant 0 : i32
    return %c0_i32, %c0_i32_0 : i32, i32
  }
  func.func @transform_6(%arg0: i32, %arg1: i32) -> (i32, i32) {
    %c0_i32 = arith.constant 0 : i32
    %c0_i32_0 = arith.constant 0 : i32
    %c0_i32_1 = arith.constant 0 : i32
    return %c0_i32, %c0_i32_0 : i32, i32
  }
  func.func @transform_7(%arg0: i32, %arg1: i32) -> (i32, i32, i32, i32) {
    %c0_i32 = arith.constant 0 : i32
    %c0_i32_0 = arith.constant 0 : i32
    %c0_i32_1 = arith.constant 0 : i32
    return %arg0, %arg1, %c0_i32, %c0_i32_0 : i32, i32, i32, i32
  }
}

</mosaic_0001>

<llo_original>
// kernel: bottleneck_forward.1
$region0: #{bottleneck_forward.1}
  #allocation0 [shape = 'u32[]', space=smem, size = 0x4, offset = 0x4, fixed_abs, tag = 'smem constant byte address 0x4 - core index']
  #allocation1 [shape = 'u32[144,128]{1,0:T(1,128)}', space=vmem, size = 0x12000, scoped, tag = 'internal scratch']
  #allocation2 [shape = 'f32[18,18,128]{2,1,0:T(8,128)}', space=vmem, size = 0x36000, scoped, tag = 'scratch operand']
  %s0 = inlined_call_operand.vmem [shape: bf16[2,16,16,128], index: 0, kind: input, shape index: {}]
  %s1 = inlined_call_operand.vmem [shape: bf16[128,128], index: 1, kind: input, shape index: {}]
  %s2 = inlined_call_operand.vmem [shape: bf16[3,3,128,128], index: 2, kind: input, shape index: {}]
  %s3 = inlined_call_operand.vmem [shape: bf16[128,128], index: 3, kind: input, shape index: {}]
  %s4 = inlined_call_operand.vmem [shape: f32[1,128], index: 4, kind: input, shape index: {}]
  %s5 = inlined_call_operand.vmem [shape: f32[1,128], index: 5, kind: input, shape index: {}]
  %s6 = inlined_call_operand.vmem [shape: f32[1,128], index: 6, kind: input, shape index: {}]
  %s7 = inlined_call_operand.vmem [shape: f32[2,16,16,128], index: 7, kind: output, shape index: {}]
  %s8 = sld [smem:[#allocation0]]
  $region65: #{bottleneck_forward.1} parent=0
    _
  %s10 = ssub.s32 1, %s8
  %s11 = scalar_select 0, %s10, %s8
  loop: start=0, step=1, limit=6
  $region2: #{bottleneck_forward.1} parent=0 // loop_pre_header
    _
  $region3: #{bottleneck_forward.1} parent=0 // loop_header
    %s13 = sphi 0, %s17
    %p14 = scmp.ge.s32.totalorder %s13, 6
    %s20 = sphi 0, %s32
    %s21 = sphi 0, %s28
    %s22 = sphi 0, %s20
    %s23 = sphi 0, %s21
    %s24 = sphi 0, %s22
    %s25 = sphi 0, %s23
    %s35 = sphi 0, %s37
    %s38 = sphi 0, %s35
    %s39 = sphi 0, %s38
    %s55 = sphi 0, %s39
    %s59 = sphi 0, %s59
    %s61 = sphi 0, %s59
    %s62 = sphi 0, %s61
    %s76 = sphi 0, %s62
    %s80 = sphi 0, %s80
    %s82 = sphi 0, %s80
    %s83 = sphi 0, %s82
    %s97 = sphi 0, %s83
    %s101 = sphi 0, %s101
    %s103 = sphi 0, %s101
    %s104 = sphi 0, %s103
    %s118 = sphi 0, %s104
    %s122 = sphi 0, %s122
    %s124 = sphi 0, %s122
    %s125 = sphi 0, %s124
    %s139 = sphi 0, %s125
    %s143 = sphi 0, %s143
    %s145 = sphi 0, %s143
    %s146 = sphi 0, %s145
    %s160 = sphi 0, %s146
    %s164 = sphi 0, %s164
    %s166 = sphi 0, %s164
    %s167 = sphi 0, %s166
    %s181 = sphi 0, %s167
    %s189 = sphi 0, %s191
    %s192 = sphi 0, %s189
    %s193 = sphi 0, %s192
    %s209 = sphi 0, %s193
  $region4: #{bottleneck_forward.1} parent=0 // loop_header_branch
    %16 = sbr.rel (%p14) target = $region8
  $region5: #{bottleneck_forward.1} parent=0 // loop_body
    %s18 = ssub.s32 %s13, 1
    %s19 = ssub.s32 %s13, 2
    %s26 = sadd.s32 1, %s21
    %p27 = scmp.ge.s32.totalorder %s26, 2
    %s28 = scalar_select %p27, 0, %s26
    %s29 = sadd.s32 1, %s20
    %s30 = scalar_select %p27, %s29, %s20
    %p31 = scmp.ge.s32.totalorder %s30, 2
    %s32 = scalar_select %p31, 0, %s30
    %s33 = ssub.s32 %s20, %s32
    %p34 = scmp.eq.s32.totalorder %s33, 0
    %s36 = sadd.s32 %s35, 1
    %s37 = scalar_select %p34, %s35, %s36
    %p40 = pneg %p34
    %p41 = scmp.eq.s32.totalorder %s13, 3
    %p42 = por %p40, %p41
    %p43 = scmp.ne.s32.totalorder %s35, %s38
    %p44 = scmp.eq.s32.totalorder %s13, 0
    %p45 = por %p43, %p44
    %p46 = scmp.ne.s32.totalorder %s35, %s38
    %p47 = scmp.eq.s32.totalorder %s18, 3
    %p48 = por %p46, %p47
    %p49 = scmp.ne.s32.totalorder %s38, %s39
    %p50 = scmp.eq.s32.totalorder %s18, 0
    %p51 = por %p49, %p50
    %p52 = scmp.ne.s32.totalorder %s38, %s39
    %p53 = scmp.eq.s32.totalorder %s19, 3
    %p54 = por %p52, %p53
    %p56 = scmp.ne.s32.totalorder %s39, %s55
    %p57 = scmp.eq.s32.totalorder %s19, 0
    %p58 = por %p56, %p57
    %s60 = sadd.s32 %s59, 1
    %p63 = scmp.eq.s32.totalorder %s13, 3
    %p64 = scmp.ne.s32.totalorder %s59, %s61
    %p65 = scmp.eq.s32.totalorder %s13, 0
    %p66 = por %p64, %p65
    %p67 = scmp.ne.s32.totalorder %s59, %s61
    %p68 = scmp.eq.s32.totalorder %s18, 3
    %p69 = por %p67, %p68
    %p70 = scmp.ne.s32.totalorder %s61, %s62
    %p71 = scmp.eq.s32.totalorder %s18, 0
    %p72 = por %p70, %p71
    %p73 = scmp.ne.s32.totalorder %s61, %s62
    %p74 = scmp.eq.s32.totalorder %s19, 3
    %p75 = por %p73, %p74
    %p77 = scmp.ne.s32.totalorder %s62, %s76
    %p78 = scmp.eq.s32.totalorder %s19, 0
    %p79 = por %p77, %p78
    %s81 = sadd.s32 %s80, 1
    %p84 = scmp.eq.s32.totalorder %s13, 3
    %p85 = scmp.ne.s32.totalorder %s80, %s82
    %p86 = scmp.eq.s32.totalorder %s13, 0
    %p87 = por %p85, %p86
    %p88 = scmp.ne.s32.totalorder %s80, %s82
    %p89 = scmp.eq.s32.totalorder %s18, 3
    %p90 = por %p88, %p89
    %p91 = scmp.ne.s32.totalorder %s82, %s83
    %p92 = scmp.eq.s32.totalorder %s18, 0
    %p93 = por %p91, %p92
    %p94 = scmp.ne.s32.totalorder %s82, %s83
    %p95 = scmp.eq.s32.totalorder %s19, 3
    %p96 = por %p94, %p95
    %p98 = scmp.ne.s32.totalorder %s83, %s97
    %p99 = scmp.eq.s32.totalorder %s19, 0
    %p100 = por %p98, %p99
    %s102 = sadd.s32 %s101, 1
    %p105 = scmp.eq.s32.totalorder %s13, 3
    %p106 = scmp.ne.s32.totalorder %s101, %s103
    %p107 = scmp.eq.s32.totalorder %s13, 0
    %p108 = por %p106, %p107
    %p109 = scmp.ne.s32.totalorder %s101, %s103
    %p110 = scmp.eq.s32.totalorder %s18, 3
    %p111 = por %p109, %p110
    %p112 = scmp.ne.s32.totalorder %s103, %s104
    %p113 = scmp.eq.s32.totalorder %s18, 0
    %p114 = por %p112, %p113
    %p115 = scmp.ne.s32.totalorder %s103, %s104
    %p116 = scmp.eq.s32.totalorder %s19, 3
    %p117 = por %p115, %p116
    %p119 = scmp.ne.s32.totalorder %s104, %s118
    %p120 = scmp.eq.s32.totalorder %s19, 0
    %p121 = por %p119, %p120
    %s123 = sadd.s32 %s122, 1
    %p126 = scmp.eq.s32.totalorder %s13, 3
    %p127 = scmp.ne.s32.totalorder %s122, %s124
    %p128 = scmp.eq.s32.totalorder %s13, 0
    %p129 = por %p127, %p128
    %p130 = scmp.ne.s32.totalorder %s122, %s124
    %p131 = scmp.eq.s32.totalorder %s18, 3
    %p132 = por %p130, %p131
    %p133 = scmp.ne.s32.totalorder %s124, %s125
    %p134 = scmp.eq.s32.totalorder %s18, 0
    %p135 = por %p133, %p134
    %p136 = scmp.ne.s32.totalorder %s124, %s125
    %p137 = scmp.eq.s32.totalorder %s19, 3
    %p138 = por %p136, %p137
    %p140 = scmp.ne.s32.totalorder %s125, %s139
    %p141 = scmp.eq.s32.totalorder %s19, 0
    %p142 = por %p140, %p141
    %s144 = sadd.s32 %s143, 1
    %p147 = scmp.eq.s32.totalorder %s13, 3
    %p148 = scmp.ne.s32.totalorder %s143, %s145
    %p149 = scmp.eq.s32.totalorder %s13, 0
    %p150 = por %p148, %p149
    %p151 = scmp.ne.s32.totalorder %s143, %s145
    %p152 = scmp.eq.s32.totalorder %s18, 3
    %p153 = por %p151, %p152
    %p154 = scmp.ne.s32.totalorder %s145, %s146
    %p155 = scmp.eq.s32.totalorder %s18, 0
    %p156 = por %p154, %p155
    %p157 = scmp.ne.s32.totalorder %s145, %s146
    %p158 = scmp.eq.s32.totalorder %s19, 3
    %p159 = por %p157, %p158
    %p161 = scmp.ne.s32.totalorder %s146, %s160
    %p162 = scmp.eq.s32.totalorder %s19, 0
    %p163 = por %p161, %p162
    %s165 = sadd.s32 %s164, 1
    %p168 = scmp.eq.s32.totalorder %s13, 3
    %p169 = scmp.ne.s32.totalorder %s164, %s166
    %p170 = scmp.eq.s32.totalorder %s13, 0
    %p171 = por %p169, %p170
    %p172 = scmp.ne.s32.totalorder %s164, %s166
    %p173 = scmp.eq.s32.totalorder %s18, 3
    %p174 = por %p172, %p173
    %p175 = scmp.ne.s32.totalorder %s166, %s167
    %p176 = scmp.eq.s32.totalorder %s18, 0
    %p177 = por %p175, %p176
    %p178 = scmp.ne.s32.totalorder %s166, %s167
    %p179 = scmp.eq.s32.totalorder %s19, 3
    %p180 = por %p178, %p179
    %p182 = scmp.ne.s32.totalorder %s167, %s181
    %p183 = scmp.eq.s32.totalorder %s19, 0
    %p184 = por %p182, %p183
    %s185 = ssub.s32 %s20, %s32
    %s186 = ssub.s32 %s21, %s28
    %s187 = sor.u32 %s185, %s186
    %p188 = scmp.eq.s32.totalorder %s187, 0
    %s190 = sadd.s32 %s189, 1
    %s191 = scalar_select %p188, %s189, %s190
    %p194 = pneg %p188
    %p195 = scmp.eq.s32.totalorder %s13, 3
    %p196 = por %p194, %p195
    %p197 = scmp.ne.s32.totalorder %s189, %s192
    %p198 = scmp.eq.s32.totalorder %s13, 0
    %p199 = por %p197, %p198
    %p200 = scmp.ne.s32.totalorder %s189, %s192
    %p201 = scmp.eq.s32.totalorder %s18, 3
    %p202 = por %p200, %p201
    %p203 = scmp.ne.s32.totalorder %s192, %s193
    %p204 = scmp.eq.s32.totalorder %s18, 0
    %p205 = por %p203, %p204
    %p206 = scmp.ne.s32.totalorder %s192, %s193
    %p207 = scmp.eq.s32.totalorder %s19, 3
    %p208 = por %p206, %p207
    %p210 = scmp.ne.s32.totalorder %s193, %s209
    %p211 = scmp.eq.s32.totalorder %s19, 0
    %p212 = por %p210, %p211
    %p213 = scmp.le.s32.totalorder 1, %s13
    %p214 = scmp.lt.s32.totalorder %s13, 5
    %p215 = pnand %p213, %p214
    %p216 = pneg %p215
    // Predicated region
    $region9: #{bottleneck_forward.1} parent=5 // pred_check
      _
    $region10: #{bottleneck_forward.1} parent=5 // pred_check_branch
      %218 = sbr.rel (%p215) target = $region12
    $region11: #{bottleneck_forward.1} parent=5 // pred_region
      %s219 = ssub.s32 %s13, 1
      // Predicated region
      $region13: #{bottleneck_forward.1} parent=11 // pred_check
        %p220 = pneg %p72
      $region14: #{bottleneck_forward.1} parent=11 // pred_check_branch
        %222 = sbr.rel (%p220) target = $region16
      $region15: #{bottleneck_forward.1} parent=11 // pred_region
        _
      $region16: #{bottleneck_forward.1} parent=11 // pred_fallthru
        _
      // Predicated region
      $region17: #{bottleneck_forward.1} parent=11 // pred_check
        %p223 = pneg %p93
      $region18: #{bottleneck_forward.1} parent=11 // pred_check_branch
        %225 = sbr.rel (%p223) target = $region20
      $region19: #{bottleneck_forward.1} parent=11 // pred_region
        _
      $region20: #{bottleneck_forward.1} parent=11 // pred_fallthru
        _
      // Predicated region
      $region21: #{bottleneck_forward.1} parent=11 // pred_check
        %p226 = pneg %p114
      $region22: #{bottleneck_forward.1} parent=11 // pred_check_branch
        %228 = sbr.rel (%p226) target = $region24
      $region23: #{bottleneck_forward.1} parent=11 // pred_region
        _
      $region24: #{bottleneck_forward.1} parent=11 // pred_fallthru
        _
      // Predicated region
      $region25: #{bottleneck_forward.1} parent=11 // pred_check
        %p229 = pneg %p135
      $region26: #{bottleneck_forward.1} parent=11 // pred_check_branch
        %231 = sbr.rel (%p229) target = $region28
      $region27: #{bottleneck_forward.1} parent=11 // pred_region
        _
      $region28: #{bottleneck_forward.1} parent=11 // pred_fallthru
        _
      // Predicated region
      $region29: #{bottleneck_forward.1} parent=11 // pred_check
        %p232 = pneg %p156
      $region30: #{bottleneck_forward.1} parent=11 // pred_check_branch
        %234 = sbr.rel (%p232) target = $region32
      $region31: #{bottleneck_forward.1} parent=11 // pred_region
        _
      $region32: #{bottleneck_forward.1} parent=11 // pred_fallthru
        _
      // Predicated region
      $region33: #{bottleneck_forward.1} parent=11 // pred_check
        %p235 = pneg %p177
      $region34: #{bottleneck_forward.1} parent=11 // pred_check_branch
        %237 = sbr.rel (%p235) target = $region36
      $region35: #{bottleneck_forward.1} parent=11 // pred_region
        _
      $region36: #{bottleneck_forward.1} parent=11 // pred_fallthru
        _
    $region12: #{bottleneck_forward.1} parent=5 // pred_fallthru
      _
    %p238 = scmp.lt.s32.totalorder %s13, 4
    // Predicated region
    $region37: #{bottleneck_forward.1} parent=5 // pred_check
      %p239 = pneg %p238
    $region38: #{bottleneck_forward.1} parent=5 // pred_check_branch
      %241 = sbr.rel (%p239) target = $region40
    $region39: #{bottleneck_forward.1} parent=5 // pred_region
      // Predicated region
      $region41: #{bottleneck_forward.1} parent=39 // pred_check
        %p242 = pneg %p45
      $region42: #{bottleneck_forward.1} parent=39 // pred_check_branch
        %244 = sbr.rel (%p242) target = $region44
      $region43: #{bottleneck_forward.1} parent=39 // pred_region
        %p245 = scmp.lt.s32.totalorder %s20, 1
        %s246 = scalar_select %p245, %s20, 1
        %s247 = smul.addr %s246, 32
        %s248 = smul.addr %s247, 4
        %s249 = scalar_lea.vmem %s0, %s248
      $region44: #{bottleneck_forward.1} parent=39 // pred_fallthru
        _
    $region40: #{bottleneck_forward.1} parent=5 // pred_fallthru
      _
    %p250 = scmp.le.s32.totalorder 1, %s13
    %p251 = scmp.lt.s32.totalorder %s13, 5
    %p252 = pnand %p250, %p251
    %p253 = pneg %p252
    // Predicated region
    $region45: #{bottleneck_forward.1} parent=5 // pred_check
      _
    $region46: #{bottleneck_forward.1} parent=5 // pred_check_branch
      %255 = sbr.rel (%p252) target = $region48
    $region47: #{bottleneck_forward.1} parent=5 // pred_region
      %s256 = ssub.s32 %s13, 1
      %p257 = scmp.lt.s32.totalorder %s22, 1
      %s258 = scalar_select %p257, %s22, 1
      %s259 = smul.addr %s258, 32
      %s260 = smul.addr %s259, 4
      %s261 = scalar_lea.vmem %s0, %s260
      %p262 = pneg %p51
      %p263 = pneg %p48
      %p264 = pneg %p72
      %p265 = pneg %p69
      %p266 = pneg %p93
      %p267 = pneg %p90
      %p268 = pneg %p114
      %p269 = pneg %p111
      %p270 = pneg %p135
      %p271 = pneg %p132
      %p272 = pneg %p156
      %p273 = pneg %p153
      %p274 = pneg %p177
      %p275 = pneg %p174
      %p276 = pneg %p205
      %p277 = pneg %p202
      %s278 = smul.u32 8, %s23
      %p279 = scmp.lt.s32.totalorder %s22, 1
      %s280 = scalar_select %p279, %s22, 1
      %p281 = scmp.lt.s32.totalorder %s278, 15
      %s282 = scalar_select %p281, %s278, 15
      %s283 = smul.addr %s282, 2
      %s284 = smul.addr %s280, 32
      %s285 = sadd.s32 %s283, %s284
      %s286 = smul.addr %s285, 8
      %s287 = scalar_lea.vmem %s7, %s286
      %p288 = scmp.lt.s32.totalorder %s22, 1
      %s289 = scalar_select %p288, %s22, 1
      %s290 = smul.addr %s289, 32
      %s291 = smul.addr %s290, 4
      %s292 = scalar_lea.vmem %s0, %s291
      %s293 = smul.u32 8, %s23
      %p294 = scmp.lt.s32.totalorder %s22, 1
      %s295 = scalar_select %p294, %s22, 1
      %p296 = scmp.lt.s32.totalorder %s293, 15
      %s297 = scalar_select %p296, %s293, 15
      %s298 = smul.addr %s297, 2
      %s299 = smul.addr %s295, 32
      %s300 = sadd.s32 %s298, %s299
      %s301 = smul.addr %s300, 8
      %s302 = scalar_lea.vmem %s7, %s301
      %s303 = smul.u32 8, %s23
      %p305 = scmp.eq.s32.totalorder %s23, 0
      // Predicated region
      $region49: #{bottleneck_forward.1} parent=47 // pred_check
        %p306 = pneg %p305
      $region50: #{bottleneck_forward.1} parent=47 // pred_check_branch
        %308 = sbr.rel (%p306) target = $region52
      $region51: #{bottleneck_forward.1} parent=47 // pred_region
        %309 = vst [vmem:[#allocation2] sm:$0xff] 0.0
        %310 = vst [vmem:[#allocation2 + $0x8] sm:$0xff] 0.0
        %311 = vst [vmem:[#allocation2 + $0x10] sm:$0x3] 0.0
        %312 = vst [vmem:[#allocation2 + $0x18] sm:$0xff] 0.0
        %313 = vst [vmem:[#allocation2 + $0x20] sm:$0xff] 0.0
        %314 = vst [vmem:[#allocation2 + $0x28] sm:$0x3] 0.0
        %315 = vst [vmem:[#allocation2 + $0x30] sm:$0xff] 0.0
        %316 = vst [vmem:[#allocation2 + $0x38] sm:$0xff] 0.0
        %317 = vst [vmem:[#allocation2 + $0x40] sm:$0x3] 0.0
        %318 = vst [vmem:[#allocation2 + $0x48] sm:$0xff] 0.0
        %319 = vst [vmem:[#allocation2 + $0x50] sm:$0xff] 0.0
        %320 = vst [vmem:[#allocation2 + $0x58] sm:$0x3] 0.0
        %321 = vst [vmem:[#allocation2 + $0x60] sm:$0xff] 0.0
        %322 = vst [vmem:[#allocation2 + $0x68] sm:$0xff] 0.0
        %323 = vst [vmem:[#allocation2 + $0x70] sm:$0x3] 0.0
        %324 = vst [vmem:[#allocation2 + $0x78] sm:$0xff] 0.0
        %325 = vst [vmem:[#allocation2 + $0x80] sm:$0xff] 0.0
        %326 = vst [vmem:[#allocation2 + $0x88] sm:$0x3] 0.0
        %327 = vst [vmem:[#allocation2 + $0x90] sm:$0xff] 0.0
        %328 = vst [vmem:[#allocation2 + $0x98] sm:$0xff] 0.0
        %329 = vst [vmem:[#allocation2 + $0xa0] sm:$0x3] 0.0
        %330 = vst [vmem:[#allocation2 + $0xa8] sm:$0xff] 0.0
        %331 = vst [vmem:[#allocation2 + $0xb0] sm:$0xff] 0.0
        %332 = vst [vmem:[#allocation2 + $0xb8] sm:$0x3] 0.0
        %333 = vst [vmem:[#allocation2 + $0xc0] sm:$0xff] 0.0
        %334 = vst [vmem:[#allocation2 + $0xc8] sm:$0xff] 0.0
        %335 = vst [vmem:[#allocation2 + $0xd0] sm:$0x3] 0.0
        %336 = vst [vmem:[#allocation2 + $0xd8] sm:$0xff] 0.0
        %337 = vst [vmem:[#allocation2 + $0xe0] sm:$0xff] 0.0
        %338 = vst [vmem:[#allocation2 + $0xe8] sm:$0x3] 0.0
        %339 = vst [vmem:[#allocation2 + $0xf0] sm:$0xff] 0.0
        %340 = vst [vmem:[#allocation2 + $0xf8] sm:$0xff] 0.0
        %341 = vst [vmem:[#allocation2 + $0x100] sm:$0x3] 0.0
        %342 = vst [vmem:[#allocation2 + $0x108] sm:$0xff] 0.0
        %343 = vst [vmem:[#allocation2 + $0x110] sm:$0xff] 0.0
        %344 = vst [vmem:[#allocation2 + $0x118] sm:$0x3] 0.0
        %345 = vst [vmem:[#allocation2 + $0x120] sm:$0xff] 0.0
        %346 = vst [vmem:[#allocation2 + $0x128] sm:$0xff] 0.0
        %347 = vst [vmem:[#allocation2 + $0x130] sm:$0x3] 0.0
        %348 = vst [vmem:[#allocation2 + $0x138] sm:$0xff] 0.0
        %349 = vst [vmem:[#allocation2 + $0x140] sm:$0xff] 0.0
        %350 = vst [vmem:[#allocation2 + $0x148] sm:$0x3] 0.0
        %351 = vst [vmem:[#allocation2 + $0x150] sm:$0xff] 0.0
        %352 = vst [vmem:[#allocation2 + $0x158] sm:$0xff] 0.0
        %353 = vst [vmem:[#allocation2 + $0x160] sm:$0x3] 0.0
        %354 = vst [vmem:[#allocation2 + $0x168] sm:$0xff] 0.0
        %355 = vst [vmem:[#allocation2 + $0x170] sm:$0xff] 0.0
        %356 = vst [vmem:[#allocation2 + $0x178] sm:$0x3] 0.0
        %357 = vst [vmem:[#allocation2 + $0x180] sm:$0xff] 0.0
        %358 = vst [vmem:[#allocation2 + $0x188] sm:$0xff] 0.0
        %359 = vst [vmem:[#allocation2 + $0x190] sm:$0x3] 0.0
        %360 = vst [vmem:[#allocation2 + $0x198] sm:$0xff] 0.0
        %361 = vst [vmem:[#allocation2 + $0x1a0] sm:$0xff] 0.0
        %362 = vst [vmem:[#allocation2 + $0x1a8] sm:$0x3] 0.0
        %v363 = vld [vmem:[%s292] sm:$0xf]
        %v364 = vld [vmem:[%s292 + $0x4] sm:$0xf]
        %v365 = vld [vmem:[%s292 + $0x8] sm:$0xf]
        %v366 = vld [vmem:[%s292 + $0xc] sm:$0xf]
        %v367 = vld [vmem:[%s292 + $0x10] sm:$0xf]
        %v368 = vld [vmem:[%s292 + $0x14] sm:$0xf]
        %v369 = vld [vmem:[%s292 + $0x18] sm:$0xf]
        %v370 = vld [vmem:[%s292 + $0x1c] sm:$0xf]
        %v371 = vld [vmem:[%s292 + $0x20] sm:$0xf]
        %v372 = vld [vmem:[%s292 + $0x24] sm:$0xf]
        %v373 = vld [vmem:[%s292 + $0x28] sm:$0xf]
        %v374 = vld [vmem:[%s292 + $0x2c] sm:$0xf]
        %v375 = vld [vmem:[%s292 + $0x30] sm:$0xf]
        %v376 = vld [vmem:[%s292 + $0x34] sm:$0xf]
        %v377 = vld [vmem:[%s292 + $0x38] sm:$0xf]
        %v378 = vld [vmem:[%s292 + $0x3c] sm:$0xf]
        %v379 = vld [vmem:[%s292 + $0x40] sm:$0xf]
        %v380 = vld [vmem:[%s292 + $0x44] sm:$0xf]
        %v381 = vld [vmem:[%s292 + $0x48] sm:$0xf]
        %v382 = vld [vmem:[%s292 + $0x4c] sm:$0xf]
        %v383 = vld [vmem:[%s292 + $0x50] sm:$0xf]
        %v384 = vld [vmem:[%s292 + $0x54] sm:$0xf]
        %v385 = vld [vmem:[%s292 + $0x58] sm:$0xf]
        %v386 = vld [vmem:[%s292 + $0x5c] sm:$0xf]
        %v387 = vld [vmem:[%s292 + $0x60] sm:$0xf]
        %v388 = vld [vmem:[%s292 + $0x64] sm:$0xf]
        %v389 = vld [vmem:[%s292 + $0x68] sm:$0xf]
        %v390 = vld [vmem:[%s292 + $0x6c] sm:$0xf]
        %v391 = vld [vmem:[%s292 + $0x70] sm:$0xf]
        %v392 = vld [vmem:[%s292 + $0x74] sm:$0xf]
        %v393 = vld [vmem:[%s292 + $0x78] sm:$0xf]
        %v394 = vld [vmem:[%s292 + $0x7c] sm:$0xf]
        %v395 = vld [vmem:[%s1] sm:$0xf]
        %v396 = vld [vmem:[%s1 + $0x4] sm:$0xf]
        %v397 = vld [vmem:[%s1 + $0x8] sm:$0xf]
        %v398 = vld [vmem:[%s1 + $0xc] sm:$0xf]
        %v399 = vld [vmem:[%s1 + $0x10] sm:$0xf]
        %v400 = vld [vmem:[%s1 + $0x14] sm:$0xf]
        %v401 = vld [vmem:[%s1 + $0x18] sm:$0xf]
        %v402 = vld [vmem:[%s1 + $0x1c] sm:$0xf]
        %v403 = vld [vmem:[%s1 + $0x20] sm:$0xf]
        %v404 = vld [vmem:[%s1 + $0x24] sm:$0xf]
        %v405 = vld [vmem:[%s1 + $0x28] sm:$0xf]
        %v406 = vld [vmem:[%s1 + $0x2c] sm:$0xf]
        %v407 = vld [vmem:[%s1 + $0x30] sm:$0xf]
        %v408 = vld [vmem:[%s1 + $0x34] sm:$0xf]
        %v409 = vld [vmem:[%s1 + $0x38] sm:$0xf]
        %v410 = vld [vmem:[%s1 + $0x3c] sm:$0xf]
        %v411 = vld [vmem:[%s4] sm:$0x1]
        %v413 = vlaneseq
        %v414 = vshrl.u32 %v413, 7
        %v415 = vsub.s32 0, %v414
        %v416 = vrot.slane %v411, %v415
        %v450 = vunpack.c.l.b16 %v363
        %v451 = vunpack.c.l.b16 %v364
        %v452 = vunpack.c.l.b16 %v365
        %v453 = vunpack.c.l.b16 %v366
        %v454 = vunpack.c.l.b16 %v367
        %v455 = vunpack.c.l.b16 %v368
        %v456 = vunpack.c.l.b16 %v369
        %v457 = vunpack.c.l.b16 %v370
        %v458 = vunpack.c.l.b16 %v371
        %v459 = vunpack.c.l.b16 %v372
        %v460 = vunpack.c.l.b16 %v373
        %v461 = vunpack.c.l.b16 %v374
        %v462 = vunpack.c.l.b16 %v375
        %v463 = vunpack.c.l.b16 %v376
        %v464 = vunpack.c.l.b16 %v377
        %v465 = vunpack.c.l.b16 %v378
        %v466 = vunpack.c.l.b16 %v379
        %v467 = vunpack.c.l.b16 %v380
        %v468 = vunpack.c.l.b16 %v381
        %v469 = vunpack.c.l.b16 %v382
        %v470 = vunpack.c.l.b16 %v383
        %v471 = vunpack.c.l.b16 %v384
        %v472 = vunpack.c.l.b16 %v385
        %v473 = vunpack.c.l.b16 %v386
        %v474 = vunpack.c.l.b16 %v387
        %v475 = vunpack.c.l.b16 %v388
        %v476 = vunpack.c.l.b16 %v389
        %v477 = vunpack.c.l.b16 %v390
        %v478 = vunpack.c.l.b16 %v391
        %v479 = vunpack.c.l.b16 %v392
        %v480 = vunpack.c.l.b16 %v393
        %v481 = vunpack.c.l.b16 %v394
        %v482 = vpack.c.b16 %v451, %v450
        %v483 = vpack.c.b16 %v453, %v452
        %v484 = vpack.c.b16 %v455, %v454
        %v485 = vpack.c.b16 %v457, %v456
        %v486 = vpack.c.b16 %v459, %v458
        %v487 = vpack.c.b16 %v461, %v460
        %v488 = vpack.c.b16 %v463, %v462
        %v489 = vpack.c.b16 %v465, %v464
        %v490 = vpack.c.b16 %v467, %v466
        %v491 = vpack.c.b16 %v469, %v468
        %v492 = vpack.c.b16 %v471, %v470
        %v493 = vpack.c.b16 %v473, %v472
        %v494 = vpack.c.b16 %v475, %v474
        %v495 = vpack.c.b16 %v477, %v476
        %v496 = vpack.c.b16 %v479, %v478
        %v497 = vpack.c.b16 %v481, %v480
        %v530 = vunpack.c.l.b16 %v395
        %v531 = vunpack.c.l.b16 %v396
        %v532 = vunpack.c.l.b16 %v397
        %v533 = vunpack.c.l.b16 %v398
        %v534 = vunpack.c.l.b16 %v399
        %v535 = vunpack.c.l.b16 %v400
        %v536 = vunpack.c.l.b16 %v401
        %v537 = vunpack.c.l.b16 %v402
        %v538 = vunpack.c.l.b16 %v403
        %v539 = vunpack.c.l.b16 %v404
        %v540 = vunpack.c.l.b16 %v405
        %v541 = vunpack.c.l.b16 %v406
        %v542 = vunpack.c.l.b16 %v407
        %v543 = vunpack.c.l.b16 %v408
        %v544 = vunpack.c.l.b16 %v409
        %v545 = vunpack.c.l.b16 %v410
        %v546 = vpack.c.b16 %v531, %v530
        %v547 = vpack.c.b16 %v533, %v532
        %v548 = vpack.c.b16 %v535, %v534
        %v549 = vpack.c.b16 %v537, %v536
        %v550 = vpack.c.b16 %v539, %v538
        %v551 = vpack.c.b16 %v541, %v540
        %v552 = vpack.c.b16 %v543, %v542
        %v553 = vpack.c.b16 %v545, %v544
        %562 = vmatprep.subr.bf16.mxu0 0
        %563 = vmatpush1.bf16.msra.mxu0 %v546
        %564 = vmatprep.subr.bf16.mxu0 0
        %565 = vmatpush1.bf16.msra.mxu0 %v547
        %566 = vmatprep.subr.bf16.mxu0 0
        %567 = vmatpush1.bf16.msra.mxu0 %v548
        %568 = vmatprep.subr.bf16.mxu0 0
        %569 = vmatpush1.bf16.msra.mxu0 %v549
        %570 = vmatprep.subr.bf16.mxu0 0
        %571 = vmatpush1.bf16.msra.mxu0 %v550
        %572 = vmatprep.subr.bf16.mxu0 0
        %573 = vmatpush1.bf16.msra.mxu0 %v551
        %574 = vmatprep.subr.bf16.mxu0 0
        %575 = vmatpush1.bf16.msra.mxu0 %v552
        %576 = vmatprep.subr.bf16.mxu0 0
        %577 = vmatpush1.bf16.msra.mxu0 %v553
        %578 = vmatprep.subr.bf16.mxu0 0
        %579 = vmatpush1.bf16.msra.mxu0 0
        %580 = vmatprep.subr.bf16.mxu0 0
        %581 = vmatpush1.bf16.msra.mxu0 0
        %582 = vmatprep.subr.bf16.mxu0 0
        %583 = vmatpush1.bf16.msra.mxu0 0
        %584 = vmatprep.subr.bf16.mxu0 0
        %585 = vmatpush1.bf16.msra.mxu0 0
        %586 = vmatprep.subr.bf16.mxu0 0
        %587 = vmatpush1.bf16.msra.mxu0 0
        %588 = vmatprep.subr.bf16.mxu0 0
        %589 = vmatpush1.bf16.msra.mxu0 0
        %590 = vmatprep.subr.bf16.mxu0 0
        %591 = vmatpush1.bf16.msra.mxu0 0
        %592 = vmatprep.subr.bf16.mxu0 0
        %593 = vmatpush1.bf16.msra.mxu0 0
        %594 = vmatprep.mubr.bf16.mxu0 0
        %595 = vmatmul.mubr.bf16.gmra.mrb[0].mxu0 %v482
        %v596 = vpop.f32.mrb[0].mxu0
        %v597 = vadd.f32 %v416, %v596
        %v598 = vpop.f32.mrb[0].mxu0
        %v599 = vpop.f32.mrb[0].mxu0
        %v600 = vadd.f32 %v416, %v599
        %v601 = vpop.f32.mrb[0].mxu0
        %602 = vmatprep.mubr.bf16.mxu0 0
        %603 = vmatmul.mubr.bf16.gmra.mrb[0].mxu0 %v483
        %v604 = vpop.f32.mrb[0].mxu0
        %v605 = vadd.f32 %v416, %v604
        %v606 = vpop.f32.mrb[0].mxu0
        %v607 = vpop.f32.mrb[0].mxu0
        %v608 = vadd.f32 %v416, %v607
        %v609 = vpop.f32.mrb[0].mxu0
        %610 = vmatprep.mubr.bf16.mxu0 0
        %611 = vmatmul.mubr.bf16.gmra.mrb[0].mxu0 %v484
        %v612 = vpop.f32.mrb[0].mxu0
        %v613 = vadd.f32 %v416, %v612
        %v614 = vpop.f32.mrb[0].mxu0
        %v615 = vpop.f32.mrb[0].mxu0
        %v616 = vadd.f32 %v416, %v615
        %v617 = vpop.f32.mrb[0].mxu0
        %618 = vmatprep.mubr.bf16.mxu0 0
        %619 = vmatmul.mubr.bf16.gmra.mrb[0].mxu0 %v485
        %v620 = vpop.f32.mrb[0].mxu0
        %v621 = vadd.f32 %v416, %v620
        %v622 = vpop.f32.mrb[0].mxu0
        %v623 = vpop.f32.mrb[0].mxu0
        %v624 = vadd.f32 %v416, %v623
        %v625 = vpop.f32.mrb[0].mxu0
        %626 = vmatprep.mubr.bf16.mxu0 0
        %627 = vmatmul.mubr.bf16.gmra.mrb[0].mxu0 %v486
        %v628 = vpop.f32.mrb[0].mxu0
        %v629 = vadd.f32 %v416, %v628
        %v630 = vpop.f32.mrb[0].mxu0
        %v631 = vpop.f32.mrb[0].mxu0
        %v632 = vadd.f32 %v416, %v631
        %v633 = vpop.f32.mrb[0].mxu0
        %634 = vmatprep.mubr.bf16.mxu0 0
        %635 = vmatmul.mubr.bf16.gmra.mrb[0].mxu0 %v487
        %v636 = vpop.f32.mrb[0].mxu0
        %v637 = vadd.f32 %v416, %v636
        %v638 = vpop.f32.mrb[0].mxu0
        %v639 = vpop.f32.mrb[0].mxu0
        %v640 = vadd.f32 %v416, %v639
        %v641 = vpop.f32.mrb[0].mxu0
        %642 = vmatprep.mubr.bf16.mxu0 0
        %643 = vmatmul.mubr.bf16.gmra.mrb[0].mxu0 %v488
        %v644 = vpop.f32.mrb[0].mxu0
        %v645 = vadd.f32 %v416, %v644
        %v646 = vpop.f32.mrb[0].mxu0
        %v647 = vpop.f32.mrb[0].mxu0
        %v648 = vadd.f32 %v416, %v647
        %v649 = vpop.f32.mrb[0].mxu0
        %650 = vmatprep.mubr.bf16.mxu0 0
        %651 = vmatmul.mubr.bf16.gmra.mrb[0].mxu0 %v489
        %v652 = vpop.f32.mrb[0].mxu0
        %v653 = vadd.f32 %v416, %v652
        %v654 = vpop.f32.mrb[0].mxu0
        %v655 = vpop.f32.mrb[0].mxu0
        %v656 = vadd.f32 %v416, %v655
        %v657 = vpop.f32.mrb[0].mxu0
        %658 = vmatprep.mubr.bf16.mxu0 0
        %659 = vmatmul.mubr.bf16.gmra.mrb[0].mxu0 %v490
        %v660 = vpop.f32.mrb[0].mxu0
        %v661 = vadd.f32 %v416, %v660
        %v662 = vpop.f32.mrb[0].mxu0
        %v663 = vpop.f32.mrb[0].mxu0
        %v664 = vadd.f32 %v416, %v663
        %v665 = vpop.f32.mrb[0].mxu0
        %666 = vmatprep.mubr.bf16.mxu0 0
        %667 = vmatmul.mubr.bf16.gmra.mrb[0].mxu0 %v491
        %v668 = vpop.f32.mrb[0].mxu0
        %v669 = vadd.f32 %v416, %v668
        %v670 = vpop.f32.mrb[0].mxu0
        %v671 = vpop.f32.mrb[0].mxu0
        %v672 = vadd.f32 %v416, %v671
        %v673 = vpop.f32.mrb[0].mxu0
        %674 = vmatprep.mubr.bf16.mxu0 0
        %675 = vmatmul.mubr.bf16.gmra.mrb[0].mxu0 %v492
        %v676 = vpop.f32.mrb[0].mxu0
        %v677 = vadd.f32 %v416, %v676
        %v678 = vpop.f32.mrb[0].mxu0
        %v679 = vpop.f32.mrb[0].mxu0
        %v680 = vadd.f32 %v416, %v679
        %v681 = vpop.f32.mrb[0].mxu0
        %682 = vmatprep.mubr.bf16.mxu0 0
        %683 = vmatmul.mubr.bf16.gmra.mrb[0].mxu0 %v493
        %v684 = vpop.f32.mrb[0].mxu0
        %v685 = vadd.f32 %v416, %v684
        %v686 = vpop.f32.mrb[0].mxu0
        %v687 = vpop.f32.mrb[0].mxu0
        %v688 = vadd.f32 %v416, %v687
        %v689 = vpop.f32.mrb[0].mxu0
        %690 = vmatprep.mubr.bf16.mxu0 0
        %691 = vmatmul.mubr.bf16.gmra.mrb[0].mxu0 %v494
        %v692 = vpop.f32.mrb[0].mxu0
        %v693 = vadd.f32 %v416, %v692
        %v694 = vpop.f32.mrb[0].mxu0
        %v695 = vpop.f32.mrb[0].mxu0
        %v696 = vadd.f32 %v416, %v695
        %v697 = vpop.f32.mrb[0].mxu0
        %698 = vmatprep.mubr.bf16.mxu0 0
        %699 = vmatmul.mubr.bf16.gmra.mrb[0].mxu0 %v495
        %v700 = vpop.f32.mrb[0].mxu0
        %v701 = vadd.f32 %v416, %v700
        %v702 = vpop.f32.mrb[0].mxu0
        %v703 = vpop.f32.mrb[0].mxu0
        %v704 = vadd.f32 %v416, %v703
        %v705 = vpop.f32.mrb[0].mxu0
        %706 = vmatprep.mubr.bf16.mxu0 0
        %707 = vmatmul.mubr.bf16.gmra.mrb[0].mxu0 %v496
        %v708 = vpop.f32.mrb[0].mxu0
        %v709 = vadd.f32 %v416, %v708
        %v710 = vpop.f32.mrb[0].mxu0
        %v711 = vpop.f32.mrb[0].mxu0
        %v712 = vadd.f32 %v416, %v711
        %v713 = vpop.f32.mrb[0].mxu0
        %714 = vmatprep.mubr.bf16.mxu0 0
        %715 = vmatmul.mubr.bf16.gmra.mrb[0].mxu0 %v497
        %v716 = vpop.f32.mrb[0].mxu0
        %v717 = vadd.f32 %v416, %v716
        %v718 = vpop.f32.mrb[0].mxu0
        %v719 = vpop.f32.mrb[0].mxu0
        %v720 = vadd.f32 %v416, %v719
        %v721 = vpop.f32.mrb[0].mxu0
        %722 = vdwg.mxu0
        %v723 = vmax.f32 %v597, 0.0
        %v724 = vmax.f32 %v600, 0.0
        %v725 = vmax.f32 %v605, 0.0
        %v726 = vmax.f32 %v608, 0.0
        %v727 = vmax.f32 %v613, 0.0
        %v728 = vmax.f32 %v616, 0.0
        %v729 = vmax.f32 %v621, 0.0
        %v730 = vmax.f32 %v624, 0.0
        %v731 = vmax.f32 %v629, 0.0
        %v732 = vmax.f32 %v632, 0.0
        %v733 = vmax.f32 %v637, 0.0
        %v734 = vmax.f32 %v640, 0.0
        %v735 = vmax.f32 %v645, 0.0
        %v736 = vmax.f32 %v648, 0.0
        %v737 = vmax.f32 %v653, 0.0
        %v738 = vmax.f32 %v656, 0.0
        %v739 = vmax.f32 %v661, 0.0
        %v740 = vmax.f32 %v664, 0.0
        %v741 = vmax.f32 %v669, 0.0
        %v742 = vmax.f32 %v672, 0.0
        %v743 = vmax.f32 %v677, 0.0
        %v744 = vmax.f32 %v680, 0.0
        %v745 = vmax.f32 %v685, 0.0
        %v746 = vmax.f32 %v688, 0.0
        %v747 = vmax.f32 %v693, 0.0
        %v748 = vmax.f32 %v696, 0.0
        %v749 = vmax.f32 %v701, 0.0
        %v750 = vmax.f32 %v704, 0.0
        %v751 = vmax.f32 %v709, 0.0
        %v752 = vmax.f32 %v712, 0.0
        %v753 = vmax.f32 %v717, 0.0
        %v754 = vmax.f32 %v720, 0.0
        %s755 = scalar_lea.vmem [#allocation2], 24
        %756 = vst [vmem:[%s755 + $0x1] sm:$0xff] %v723
        %757 = vst [vmem:[%s755 + $0x9] sm:$0xff] %v724
        %758 = vst [vmem:[%s755 + $0x19] sm:$0xff] %v725
        %759 = vst [vmem:[%s755 + $0x21] sm:$0xff] %v726
        %760 = vst [vmem:[%s755 + $0x31] sm:$0xff] %v727
        %761 = vst [vmem:[%s755 + $0x39] sm:$0xff] %v728
        %762 = vst [vmem:[%s755 + $0x49] sm:$0xff] %v729
        %763 = vst [vmem:[%s755 + $0x51] sm:$0xff] %v730
        %764 = vst [vmem:[%s755 + $0x61] sm:$0xff] %v731
        %765 = vst [vmem:[%s755 + $0x69] sm:$0xff] %v732
        %766 = vst [vmem:[%s755 + $0x79] sm:$0xff] %v733
        %767 = vst [vmem:[%s755 + $0x81] sm:$0xff] %v734
        %768 = vst [vmem:[%s755 + $0x91] sm:$0xff] %v735
        %769 = vst [vmem:[%s755 + $0x99] sm:$0xff] %v736
        %770 = vst [vmem:[%s755 + $0xa9] sm:$0xff] %v737
        %771 = vst [vmem:[%s755 + $0xb1] sm:$0xff] %v738
        %772 = vst [vmem:[%s755 + $0xc1] sm:$0xff] %v739
        %773 = vst [vmem:[%s755 + $0xc9] sm:$0xff] %v740
        %774 = vst [vmem:[%s755 + $0xd9] sm:$0xff] %v741
        %775 = vst [vmem:[%s755 + $0xe1] sm:$0xff] %v742
        %776 = vst [vmem:[%s755 + $0xf1] sm:$0xff] %v743
        %777 = vst [vmem:[%s755 + $0xf9] sm:$0xff] %v744
        %778 = vst [vmem:[%s755 + $0x109] sm:$0xff] %v745
        %779 = vst [vmem:[%s755 + $0x111] sm:$0xff] %v746
        %780 = vst [vmem:[%s755 + $0x121] sm:$0xff] %v747
        %781 = vst [vmem:[%s755 + $0x129] sm:$0xff] %v748
        %782 = vst [vmem:[%s755 + $0x139] sm:$0xff] %v749
        %783 = vst [vmem:[%s755 + $0x141] sm:$0xff] %v750
        %784 = vst [vmem:[%s755 + $0x151] sm:$0xff] %v751
        %785 = vst [vmem:[%s755 + $0x159] sm:$0xff] %v752
        %786 = vst [vmem:[%s755 + $0x169] sm:$0xff] %v753
        %787 = vst [vmem:[%s755 + $0x171] sm:$0xff] %v754
      $region52: #{bottleneck_forward.1} parent=47 // pred_fallthru
        _
      %s788 = smul.u32 %s23, 8
      %s789 = smul.u32 %s788, 24
      %s790 = scalar_lea.vmem [#allocation2], %s789
      %v791 = vld [vmem:[%s790] sm:$0xff]
      %v792 = vld [vmem:[%s790 + $0x8] sm:$0xff]
      %v793 = vld [vmem:[%s790 + $0x18] sm:$0xff]
      %v794 = vld [vmem:[%s790 + $0x20] sm:$0xff]
      %v795 = vld [vmem:[%s790 + $0x30] sm:$0xff]
      %v796 = vld [vmem:[%s790 + $0x38] sm:$0xff]
      %v797 = vld [vmem:[%s790 + $0x48] sm:$0xff]
      %v798 = vld [vmem:[%s790 + $0x50] sm:$0xff]
      %v799 = vld [vmem:[%s790 + $0x60] sm:$0xff]
      %v800 = vld [vmem:[%s790 + $0x68] sm:$0xff]
      %v801 = vld [vmem:[%s790 + $0x78] sm:$0xff]
      %v802 = vld [vmem:[%s790 + $0x80] sm:$0xff]
      %v803 = vld [vmem:[%s790 + $0x90] sm:$0xff]
      %v804 = vld [vmem:[%s790 + $0x98] sm:$0xff]
      %v805 = vld [vmem:[%s790 + $0xa8] sm:$0xff]
      %v806 = vld [vmem:[%s790 + $0xb0] sm:$0xff]
      %v807 = vpack.c.bf16 %v792, %v791
      %v808 = vpack.c.bf16 %v794, %v793
      %v809 = vpack.c.bf16 %v796, %v795
      %v810 = vpack.c.bf16 %v798, %v797
      %v811 = vpack.c.bf16 %v800, %v799
      %v812 = vpack.c.bf16 %v802, %v801
      %v813 = vpack.c.bf16 %v804, %v803
      %v814 = vpack.c.bf16 %v806, %v805
      %v815 = vld [vmem:[%s2] sm:$0xf]
      %v816 = vld [vmem:[%s2 + $0x4] sm:$0xf]
      %v817 = vld [vmem:[%s2 + $0x8] sm:$0xf]
      %v818 = vld [vmem:[%s2 + $0xc] sm:$0xf]
      %v819 = vld [vmem:[%s2 + $0x10] sm:$0xf]
      %v820 = vld [vmem:[%s2 + $0x14] sm:$0xf]
      %v821 = vld [vmem:[%s2 + $0x18] sm:$0xf]
      %v822 = vld [vmem:[%s2 + $0x1c] sm:$0xf]
      %v823 = vld [vmem:[%s2 + $0x20] sm:$0xf]
      %v824 = vld [vmem:[%s2 + $0x24] sm:$0xf]
      %v825 = vld [vmem:[%s2 + $0x28] sm:$0xf]
      %v826 = vld [vmem:[%s2 + $0x2c] sm:$0xf]
      %v827 = vld [vmem:[%s2 + $0x30] sm:$0xf]
      %v828 = vld [vmem:[%s2 + $0x34] sm:$0xf]
      %v829 = vld [vmem:[%s2 + $0x38] sm:$0xf]
      %v830 = vld [vmem:[%s2 + $0x3c] sm:$0xf]
      %v831 = vld [vmem:[%s790 + $0x1] sm:$0xff]
      %v832 = vld [vmem:[%s790 + $0x9] sm:$0xff]
      %v833 = vld [vmem:[%s790 + $0x19] sm:$0xff]
      %v834 = vld [vmem:[%s790 + $0x21] sm:$0xff]
      %v835 = vld [vmem:[%s790 + $0x31] sm:$0xff]
      %v836 = vld [vmem:[%s790 + $0x39] sm:$0xff]
      %v837 = vld [vmem:[%s790 + $0x49] sm:$0xff]
      %v838 = vld [vmem:[%s790 + $0x51] sm:$0xff]
      %v839 = vld [vmem:[%s790 + $0x61] sm:$0xff]
      %v840 = vld [vmem:[%s790 + $0x69] sm:$0xff]
      %v841 = vld [vmem:[%s790 + $0x79] sm:$0xff]
      %v842 = vld [vmem:[%s790 + $0x81] sm:$0xff]
      %v843 = vld [vmem:[%s790 + $0x91] sm:$0xff]
      %v844 = vld [vmem:[%s790 + $0x99] sm:$0xff]
      %v845 = vld [vmem:[%s790 + $0xa9] sm:$0xff]
      %v846 = vld [vmem:[%s790 + $0xb1] sm:$0xff]
      %v847 = vpack.c.bf16 %v832, %v831
      %v848 = vpack.c.bf16 %v834, %v833
      %v849 = vpack.c.bf16 %v836, %v835
      %v850 = vpack.c.bf16 %v838, %v837
      %v851 = vpack.c.bf16 %v840, %v839
      %v852 = vpack.c.bf16 %v842, %v841
      %v853 = vpack.c.bf16 %v844, %v843
      %v854 = vpack.c.bf16 %v846, %v845
      %s855 = scalar_lea.vmem %s2, 64
      %v856 = vld [vmem:[%s855] sm:$0xf]
      %v857 = vld [vmem:[%s855 + $0x4] sm:$0xf]
      %v858 = vld [vmem:[%s855 + $0x8] sm:$0xf]
      %v859 = vld [vmem:[%s855 + $0xc] sm:$0xf]
      %v860 = vld [vmem:[%s855 + $0x10] sm:$0xf]
      %v861 = vld [vmem:[%s855 + $0x14] sm:$0xf]
      %v862 = vld [vmem:[%s855 + $0x18] sm:$0xf]
      %v863 = vld [vmem:[%s855 + $0x1c] sm:$0xf]
      %v864 = vld [vmem:[%s855 + $0x20] sm:$0xf]
      %v865 = vld [vmem:[%s855 + $0x24] sm:$0xf]
      %v866 = vld [vmem:[%s855 + $0x28] sm:$0xf]
      %v867 = vld [vmem:[%s855 + $0x2c] sm:$0xf]
      %v868 = vld [vmem:[%s855 + $0x30] sm:$0xf]
      %v869 = vld [vmem:[%s855 + $0x34] sm:$0xf]
      %v870 = vld [vmem:[%s855 + $0x38] sm:$0xf]
      %v871 = vld [vmem:[%s855 + $0x3c] sm:$0xf]
      %v888 = vunpack.c.l.b16 %v856
      %v889 = vunpack.c.l.b16 %v857
      %v890 = vunpack.c.l.b16 %v858
      %v891 = vunpack.c.l.b16 %v859
      %v892 = vunpack.c.l.b16 %v860
      %v893 = vunpack.c.l.b16 %v861
      %v894 = vunpack.c.l.b16 %v862
      %v895 = vunpack.c.l.b16 %v863
      %v896 = vunpack.c.l.b16 %v864
      %v897 = vunpack.c.l.b16 %v865
      %v898 = vunpack.c.l.b16 %v866
      %v899 = vunpack.c.l.b16 %v867
      %v900 = vunpack.c.l.b16 %v868
      %v901 = vunpack.c.l.b16 %v869
      %v902 = vunpack.c.l.b16 %v870
      %v903 = vunpack.c.l.b16 %v871
      %v904 = vpack.c.b16 %v889, %v888
      %v905 = vpack.c.b16 %v891, %v890
      %v906 = vpack.c.b16 %v893, %v892
      %v907 = vpack.c.b16 %v895, %v894
      %v908 = vpack.c.b16 %v897, %v896
      %v909 = vpack.c.b16 %v899, %v898
      %v910 = vpack.c.b16 %v901, %v900
      %v911 = vpack.c.b16 %v903, %v902
      %920 = vmatprep.subr.bf16.mxu0 0
      %921 = vmatpush1.bf16.msra.mxu0 %v904
      %922 = vmatprep.subr.bf16.mxu0 0
      %923 = vmatpush1.bf16.msra.mxu0 %v905
      %924 = vmatprep.subr.bf16.mxu0 0
      %925 = vmatpush1.bf16.msra.mxu0 %v906
      %926 = vmatprep.subr.bf16.mxu0 0
      %927 = vmatpush1.bf16.msra.mxu0 %v907
      %928 = vmatprep.subr.bf16.mxu0 0
      %929 = vmatpush1.bf16.msra.mxu0 %v908
      %930 = vmatprep.subr.bf16.mxu0 0
      %931 = vmatpush1.bf16.msra.mxu0 %v909
      %932 = vmatprep.subr.bf16.mxu0 0
      %933 = vmatpush1.bf16.msra.mxu0 %v910
      %934 = vmatprep.subr.bf16.mxu0 0
      %935 = vmatpush1.bf16.msra.mxu0 %v911
      %936 = vmatprep.subr.bf16.mxu0 0
      %937 = vmatpush1.bf16.msra.mxu0 0
      %938 = vmatprep.subr.bf16.mxu0 0
      %939 = vmatpush1.bf16.msra.mxu0 0
      %940 = vmatprep.subr.bf16.mxu0 0
      %941 = vmatpush1.bf16.msra.mxu0 0
      %942 = vmatprep.subr.bf16.mxu0 0
      %943 = vmatpush1.bf16.msra.mxu0 0
      %944 = vmatprep.subr.bf16.mxu0 0
      %945 = vmatpush1.bf16.msra.mxu0 0
      %946 = vmatprep.subr.bf16.mxu0 0
      %947 = vmatpush1.bf16.msra.mxu0 0
      %948 = vmatprep.subr.bf16.mxu0 0
      %949 = vmatpush1.bf16.msra.mxu0 0
      %950 = vmatprep.subr.bf16.mxu0 0
      %951 = vmatpush1.bf16.msra.mxu0 0
      %952 = vmatprep.mubr.bf16.mxu0 0
      %953 = vmatmul.mubr.bf16.gmra.mrb[0].mxu0 %v847
      %v954 = vpop.f32.mrb[0].mxu0
      %v955 = vadd.f32 0.0, %v954
      %v956 = vpop.f32.mrb[0].mxu0
      %v957 = vpop.f32.mrb[0].mxu0
      %v958 = vadd.f32 0.0, %v957
      %v959 = vpop.f32.mrb[0].mxu0
      %960 = vmatprep.mubr.bf16.mxu0 0
      %961 = vmatmul.mubr.bf16.gmra.mrb[0].mxu0 %v848
      %v962 = vpop.f32.mrb[0].mxu0
      %v963 = vadd.f32 0.0, %v962
      %v964 = vpop.f32.mrb[0].mxu0
      %v965 = vpop.f32.mrb[0].mxu0
      %v966 = vadd.f32 0.0, %v965
      %v967 = vpop.f32.mrb[0].mxu0
      %968 = vmatprep.mubr.bf16.mxu0 0
      %969 = vmatmul.mubr.bf16.gmra.mrb[0].mxu0 %v849
      %v970 = vpop.f32.mrb[0].mxu0
      %v971 = vadd.f32 0.0, %v970
      %v972 = vpop.f32.mrb[0].mxu0
      %v973 = vpop.f32.mrb[0].mxu0
      %v974 = vadd.f32 0.0, %v973
      %v975 = vpop.f32.mrb[0].mxu0
      %976 = vmatprep.mubr.bf16.mxu0 0
      %977 = vmatmul.mubr.bf16.gmra.mrb[0].mxu0 %v850
      %v978 = vpop.f32.mrb[0].mxu0
      %v979 = vadd.f32 0.0, %v978
      %v980 = vpop.f32.mrb[0].mxu0
      %v981 = vpop.f32.mrb[0].mxu0
      %v982 = vadd.f32 0.0, %v981
      %v983 = vpop.f32.mrb[0].mxu0
      %984 = vmatprep.mubr.bf16.mxu0 0
      %985 = vmatmul.mubr.bf16.gmra.mrb[0].mxu0 %v851
      %v986 = vpop.f32.mrb[0].mxu0
      %v987 = vadd.f32 0.0, %v986
      %v988 = vpop.f32.mrb[0].mxu0
      %v989 = vpop.f32.mrb[0].mxu0
      %v990 = vadd.f32 0.0, %v989
      %v991 = vpop.f32.mrb[0].mxu0
      %992 = vmatprep.mubr.bf16.mxu0 0
      %993 = vmatmul.mubr.bf16.gmra.mrb[0].mxu0 %v852
      %v994 = vpop.f32.mrb[0].mxu0
      %v995 = vadd.f32 0.0, %v994
      %v996 = vpop.f32.mrb[0].mxu0
      %v997 = vpop.f32.mrb[0].mxu0
      %v998 = vadd.f32 0.0, %v997
      %v999 = vpop.f32.mrb[0].mxu0
      %1000 = vmatprep.mubr.bf16.mxu0 0
      %1001 = vmatmul.mubr.bf16.gmra.mrb[0].mxu0 %v853
      %v1002 = vpop.f32.mrb[0].mxu0
      %v1003 = vadd.f32 0.0, %v1002
      %v1004 = vpop.f32.mrb[0].mxu0
      %v1005 = vpop.f32.mrb[0].mxu0
      %v1006 = vadd.f32 0.0, %v1005
      %v1007 = vpop.f32.mrb[0].mxu0
      %1008 = vmatprep.mubr.bf16.mxu0 0
      %1009 = vmatmul.mubr.bf16.gmra.mrb[0].mxu0 %v854
      %v1010 = vpop.f32.mrb[0].mxu0
      %v1011 = vadd.f32 0.0, %v1010
      %v1012 = vpop.f32.mrb[0].mxu0
      %v1013 = vpop.f32.mrb[0].mxu0
      %v1014 = vadd.f32 0.0, %v1013
      %v1015 = vpop.f32.mrb[0].mxu0
      %1016 = vdwg.mxu0
      %v1033 = vunpack.c.l.b16 %v815
      %v1034 = vunpack.c.l.b16 %v816
      %v1035 = vunpack.c.l.b16 %v817
      %v1036 = vunpack.c.l.b16 %v818
      %v1037 = vunpack.c.l.b16 %v819
      %v1038 = vunpack.c.l.b16 %v820
      %v1039 = vunpack.c.l.b16 %v821
      %v1040 = vunpack.c.l.b16 %v822
      %v1041 = vunpack.c.l.b16 %v823
      %v1042 = vunpack.c.l.b16 %v824
      %v1043 = vunpack.c.l.b16 %v825
      %v1044 = vunpack.c.l.b16 %v826
      %v1045 = vunpack.c.l.b16 %v827
      %v1046 = vunpack.c.l.b16 %v828
      %v1047 = vunpack.c.l.b16 %v829
      %v1048 = vunpack.c.l.b16 %v830
      %v1049 = vpack.c.b16 %v1034, %v1033
      %v1050 = vpack.c.b16 %v1036, %v1035
      %v1051 = vpack.c.b16 %v1038, %v1037
      %v1052 = vpack.c.b16 %v1040, %v1039
      %v1053 = vpack.c.b16 %v1042, %v1041
      %v1054 = vpack.c.b16 %v1044, %v1043
      %v1055 = vpack.c.b16 %v1046, %v1045
      %v1056 = vpack.c.b16 %v1048, %v1047
      %1065 = vmatprep.subr.bf16.mxu0 0
      %1066 = vmatpush1.bf16.msra.mxu0 %v1049
      %1067 = vmatprep.subr.bf16.mxu0 0
      %1068 = vmatpush1.bf16.msra.mxu0 %v1050
      %1069 = vmatprep.subr.bf16.mxu0 0
      %1070 = vmatpush1.bf16.msra.mxu0 %v1051
      %1071 = vmatprep.subr.bf16.mxu0 0
      %1072 = vmatpush1.bf16.msra.mxu0 %v1052
      %1073 = vmatprep.subr.bf16.mxu0 0
      %1074 = vmatpush1.bf16.msra.mxu0 %v1053
      %1075 = vmatprep.subr.bf16.mxu0 0
      %1076 = vmatpush1.bf16.msra.mxu0 %v1054
      %1077 = vmatprep.subr.bf16.mxu0 0
      %1078 = vmatpush1.bf16.msra.mxu0 %v1055
      %1079 = vmatprep.subr.bf16.mxu0 0
      %1080 = vmatpush1.bf16.msra.mxu0 %v1056
      %1081 = vmatprep.subr.bf16.mxu0 0
      %1082 = vmatpush1.bf16.msra.mxu0 0
      %1083 = vmatprep.subr.bf16.mxu0 0
      %1084 = vmatpush1.bf16.msra.mxu0 0
      %1085 = vmatprep.subr.bf16.mxu0 0
      %1086 = vmatpush1.bf16.msra.mxu0 0
      %1087 = vmatprep.subr.bf16.mxu0 0
      %1088 = vmatpush1.bf16.msra.mxu0 0
      %1089 = vmatprep.subr.bf16.mxu0 0
      %1090 = vmatpush1.bf16.msra.mxu0 0
      %1091 = vmatprep.subr.bf16.mxu0 0
      %1092 = vmatpush1.bf16.msra.mxu0 0
      %1093 = vmatprep.subr.bf16.mxu0 0
      %1094 = vmatpush1.bf16.msra.mxu0 0
      %1095 = vmatprep.subr.bf16.mxu0 0
      %1096 = vmatpush1.bf16.msra.mxu0 0
      %1097 = vmatprep.mubr.bf16.mxu0 0
      %1098 = vmatmul.mubr.bf16.gmra.mrb[0].mxu0 %v807
      %v1099 = vpop.f32.mrb[0].mxu0
      %v1100 = vadd.f32 %v955, %v1099
      %v1101 = vpop.f32.mrb[0].mxu0
      %v1102 = vpop.f32.mrb[0].mxu0
      %v1103 = vadd.f32 %v958, %v1102
      %v1104 = vpop.f32.mrb[0].mxu0
      %1105 = vmatprep.mubr.bf16.mxu0 0
      %1106 = vmatmul.mubr.bf16.gmra.mrb[0].mxu0 %v808
      %v1107 = vpop.f32.mrb[0].mxu0
      %v1108 = vadd.f32 %v963, %v1107
      %v1109 = vpop.f32.mrb[0].mxu0
      %v1110 = vpop.f32.mrb[0].mxu0
      %v1111 = vadd.f32 %v966, %v1110
      %v1112 = vpop.f32.mrb[0].mxu0
      %1113 = vmatprep.mubr.bf16.mxu0 0
      %1114 = vmatmul.mubr.bf16.gmra.mrb[0].mxu0 %v809
      %v1115 = vpop.f32.mrb[0].mxu0
      %v1116 = vadd.f32 %v971, %v1115
      %v1117 = vpop.f32.mrb[0].mxu0
      %v1118 = vpop.f32.mrb[0].mxu0
      %v1119 = vadd.f32 %v974, %v1118
      %v1120 = vpop.f32.mrb[0].mxu0
      %1121 = vmatprep.mubr.bf16.mxu0 0
      %1122 = vmatmul.mubr.bf16.gmra.mrb[0].mxu0 %v810
      %v1123 = vpop.f32.mrb[0].mxu0
      %v1124 = vadd.f32 %v979, %v1123
      %v1125 = vpop.f32.mrb[0].mxu0
      %v1126 = vpop.f32.mrb[0].mxu0
      %v1127 = vadd.f32 %v982, %v1126
      %v1128 = vpop.f32.mrb[0].mxu0
      %1129 = vmatprep.mubr.bf16.mxu0 0
      %1130 = vmatmul.mubr.bf16.gmra.mrb[0].mxu0 %v811
      %v1131 = vpop.f32.mrb[0].mxu0
      %v1132 = vadd.f32 %v987, %v1131
      %v1133 = vpop.f32.mrb[0].mxu0
      %v1134 = vpop.f32.mrb[0].mxu0
      %v1135 = vadd.f32 %v990, %v1134
      %v1136 = vpop.f32.mrb[0].mxu0
      %1137 = vmatprep.mubr.bf16.mxu0 0
      %1138 = vmatmul.mubr.bf16.gmra.mrb[0].mxu0 %v812
      %v1139 = vpop.f32.mrb[0].mxu0
      %v1140 = vadd.f32 %v995, %v1139
      %v1141 = vpop.f32.mrb[0].mxu0
      %v1142 = vpop.f32.mrb[0].mxu0
      %v1143 = vadd.f32 %v998, %v1142
      %v1144 = vpop.f32.mrb[0].mxu0
      %1145 = vmatprep.mubr.bf16.mxu0 0
      %1146 = vmatmul.mubr.bf16.gmra.mrb[0].mxu0 %v813
      %v1147 = vpop.f32.mrb[0].mxu0
      %v1148 = vadd.f32 %v1003, %v1147
      %v1149 = vpop.f32.mrb[0].mxu0
      %v1150 = vpop.f32.mrb[0].mxu0
      %v1151 = vadd.f32 %v1006, %v1150
      %v1152 = vpop.f32.mrb[0].mxu0
      %1153 = vmatprep.mubr.bf16.mxu0 0
      %1154 = vmatmul.mubr.bf16.gmra.mrb[0].mxu0 %v814
      %v1155 = vpop.f32.mrb[0].mxu0
      %v1156 = vadd.f32 %v1011, %v1155
      %v1157 = vpop.f32.mrb[0].mxu0
      %v1158 = vpop.f32.mrb[0].mxu0
      %v1159 = vadd.f32 %v1014, %v1158
      %v1160 = vpop.f32.mrb[0].mxu0
      %1161 = vdwg.mxu0
      %v1162 = vld [vmem:[%s790 + $0x2] sm:$0xff]
      %v1163 = vld [vmem:[%s790 + $0xa] sm:$0xff]
      %v1164 = vld [vmem:[%s790 + $0x1a] sm:$0xff]
      %v1165 = vld [vmem:[%s790 + $0x22] sm:$0xff]
      %v1166 = vld [vmem:[%s790 + $0x32] sm:$0xff]
      %v1167 = vld [vmem:[%s790 + $0x3a] sm:$0xff]
      %v1168 = vld [vmem:[%s790 + $0x4a] sm:$0xff]
      %v1169 = vld [vmem:[%s790 + $0x52] sm:$0xff]
      %v1170 = vld [vmem:[%s790 + $0x62] sm:$0xff]
      %v1171 = vld [vmem:[%s790 + $0x6a] sm:$0xff]
      %v1172 = vld [vmem:[%s790 + $0x7a] sm:$0xff]
      %v1173 = vld [vmem:[%s790 + $0x82] sm:$0xff]
      %v1174 = vld [vmem:[%s790 + $0x92] sm:$0xff]
      %v1175 = vld [vmem:[%s790 + $0x9a] sm:$0xff]
      %v1176 = vld [vmem:[%s790 + $0xaa] sm:$0xff]
      %v1177 = vld [vmem:[%s790 + $0xb2] sm:$0xff]
      %v1178 = vpack.c.bf16 %v1163, %v1162
      %v1179 = vpack.c.bf16 %v1165, %v1164
      %v1180 = vpack.c.bf16 %v1167, %v1166
      %v1181 = vpack.c.bf16 %v1169, %v1168
      %v1182 = vpack.c.bf16 %v1171, %v1170
      %v1183 = vpack.c.bf16 %v1173, %v1172
      %v1184 = vpack.c.bf16 %v1175, %v1174
      %v1185 = vpack.c.bf16 %v1177, %v1176
      %s1186 = scalar_lea.vmem %s2, 128
      %v1187 = vld [vmem:[%s1186] sm:$0xf]
      %v1188 = vld [vmem:[%s1186 + $0x4] sm:$0xf]
      %v1189 = vld [vmem:[%s1186 + $0x8] sm:$0xf]
      %v1190 = vld [vmem:[%s1186 + $0xc] sm:$0xf]
      %v1191 = vld [vmem:[%s1186 + $0x10] sm:$0xf]
      %v1192 = vld [vmem:[%s1186 + $0x14] sm:$0xf]
      %v1193 = vld [vmem:[%s1186 + $0x18] sm:$0xf]
      %v1194 = vld [vmem:[%s1186 + $0x1c] sm:$0xf]
      %v1195 = vld [vmem:[%s1186 + $0x20] sm:$0xf]
      %v1196 = vld [vmem:[%s1186 + $0x24] sm:$0xf]
      %v1197 = vld [vmem:[%s1186 + $0x28] sm:$0xf]
      %v1198 = vld [vmem:[%s1186 + $0x2c] sm:$0xf]
      %v1199 = vld [vmem:[%s1186 + $0x30] sm:$0xf]
      %v1200 = vld [vmem:[%s1186 + $0x34] sm:$0xf]
      %v1201 = vld [vmem:[%s1186 + $0x38] sm:$0xf]
      %v1202 = vld [vmem:[%s1186 + $0x3c] sm:$0xf]
      %v1219 = vunpack.c.l.b16 %v1187
      %v1220 = vunpack.c.l.b16 %v1188
      %v1221 = vunpack.c.l.b16 %v1189
      %v1222 = vunpack.c.l.b16 %v1190
      %v1223 = vunpack.c.l.b16 %v1191
      %v1224 = vunpack.c.l.b16 %v1192
      %v1225 = vunpack.c.l.b16 %v1193
      %v1226 = vunpack.c.l.b16 %v1194
      %v1227 = vunpack.c.l.b16 %v1195
      %v1228 = vunpack.c.l.b16 %v1196
      %v1229 = vunpack.c.l.b16 %v1197
      %v1230 = vunpack.c.l.b16 %v1198
      %v1231 = vunpack.c.l.b16 %v1199
      %v1232 = vunpack.c.l.b16 %v1200
      %v1233 = vunpack.c.l.b16 %v1201
      %v1234 = vunpack.c.l.b16 %v1202
      %v1235 = vpack.c.b16 %v1220, %v1219
      %v1236 = vpack.c.b16 %v1222, %v1221
      %v1237 = vpack.c.b16 %v1224, %v1223
      %v1238 = vpack.c.b16 %v1226, %v1225
      %v1239 = vpack.c.b16 %v1228, %v1227
      %v1240 = vpack.c.b16 %v1230, %v1229
      %v1241 = vpack.c.b16 %v1232, %v1231
      %v1242 = vpack.c.b16 %v1234, %v1233
      %1251 = vmatprep.subr.bf16.mxu0 0
      %1252 = vmatpush1.bf16.msra.mxu0 %v1235
      %1253 = vmatprep.subr.bf16.mxu0 0
      %1254 = vmatpush1.bf16.msra.mxu0 %v1236
      %1255 = vmatprep.subr.bf16.mxu0 0
      %1256 = vmatpush1.bf16.msra.mxu0 %v1237
      %1257 = vmatprep.subr.bf16.mxu0 0
      %1258 = vmatpush1.bf16.msra.mxu0 %v1238
      %1259 = vmatprep.subr.bf16.mxu0 0
      %1260 = vmatpush1.bf16.msra.mxu0 %v1239
      %1261 = vmatprep.subr.bf16.mxu0 0
      %1262 = vmatpush1.bf16.msra.mxu0 %v1240
      %1263 = vmatprep.subr.bf16.mxu0 0
      %1264 = vmatpush1.bf16.msra.mxu0 %v1241
      %1265 = vmatprep.subr.bf16.mxu0 0
      %1266 = vmatpush1.bf16.msra.mxu0 %v1242
      %1267 = vmatprep.subr.bf16.mxu0 0
      %1268 = vmatpush1.bf16.msra.mxu0 0
      %1269 = vmatprep.subr.bf16.mxu0 0
      %1270 = vmatpush1.bf16.msra.mxu0 0
      %1271 = vmatprep.subr.bf16.mxu0 0
      %1272 = vmatpush1.bf16.msra.mxu0 0
      %1273 = vmatprep.subr.bf16.mxu0 0
      %1274 = vmatpush1.bf16.msra.mxu0 0
      %1275 = vmatprep.subr.bf16.mxu0 0
      %1276 = vmatpush1.bf16.msra.mxu0 0
      %1277 = vmatprep.subr.bf16.mxu0 0
      %1278 = vmatpush1.bf16.msra.mxu0 0
      %1279 = vmatprep.subr.bf16.mxu0 0
      %1280 = vmatpush1.bf16.msra.mxu0 0
      %1281 = vmatprep.subr.bf16.mxu0 0
      %1282 = vmatpush1.bf16.msra.mxu0 0
      %1283 = vmatprep.mubr.bf16.mxu0 0
      %1284 = vmatmul.mubr.bf16.gmra.mrb[0].mxu0 %v1178
      %v1285 = vpop.f32.mrb[0].mxu0
      %v1286 = vadd.f32 0.0, %v1285
      %v1287 = vpop.f32.mrb[0].mxu0
      %v1288 = vpop.f32.mrb[0].mxu0
      %v1289 = vadd.f32 0.0, %v1288
      %v1290 = vpop.f32.mrb[0].mxu0
      %1291 = vmatprep.mubr.bf16.mxu0 0
      %1292 = vmatmul.mubr.bf16.gmra.mrb[0].mxu0 %v1179
      %v1293 = vpop.f32.mrb[0].mxu0
      %v1294 = vadd.f32 0.0, %v1293
      %v1295 = vpop.f32.mrb[0].mxu0
      %v1296 = vpop.f32.mrb[0].mxu0
      %v1297 = vadd.f32 0.0, %v1296
      %v1298 = vpop.f32.mrb[0].mxu0
      %1299 = vmatprep.mubr.bf16.mxu0 0
      %1300 = vmatmul.mubr.bf16.gmra.mrb[0].mxu0 %v1180
      %v1301 = vpop.f32.mrb[0].mxu0
      %v1302 = vadd.f32 0.0, %v1301
      %v1303 = vpop.f32.mrb[0].mxu0
      %v1304 = vpop.f32.mrb[0].mxu0
      %v1305 = vadd.f32 0.0, %v1304
      %v1306 = vpop.f32.mrb[0].mxu0
      %1307 = vmatprep.mubr.bf16.mxu0 0
      %1308 = vmatmul.mubr.bf16.gmra.mrb[0].mxu0 %v1181
      %v1309 = vpop.f32.mrb[0].mxu0
      %v1310 = vadd.f32 0.0, %v1309
      %v1311 = vpop.f32.mrb[0].mxu0
      %v1312 = vpop.f32.mrb[0].mxu0
      %v1313 = vadd.f32 0.0, %v1312
      %v1314 = vpop.f32.mrb[0].mxu0
      %1315 = vmatprep.mubr.bf16.mxu0 0
      %1316 = vmatmul.mubr.bf16.gmra.mrb[0].mxu0 %v1182
      %v1317 = vpop.f32.mrb[0].mxu0
      %v1318 = vadd.f32 0.0, %v1317
      %v1319 = vpop.f32.mrb[0].mxu0
      %v1320 = vpop.f32.mrb[0].mxu0
      %v1321 = vadd.f32 0.0, %v1320
      %v1322 = vpop.f32.mrb[0].mxu0
      %1323 = vmatprep.mubr.bf16.mxu0 0
      %1324 = vmatmul.mubr.bf16.gmra.mrb[0].mxu0 %v1183
      %v1325 = vpop.f32.mrb[0].mxu0
      %v1326 = vadd.f32 0.0, %v1325
      %v1327 = vpop.f32.mrb[0].mxu0
      %v1328 = vpop.f32.mrb[0].mxu0
      %v1329 = vadd.f32 0.0, %v1328
      %v1330 = vpop.f32.mrb[0].mxu0
      %1331 = vmatprep.mubr.bf16.mxu0 0
      %1332 = vmatmul.mubr.bf16.gmra.mrb[0].mxu0 %v1184
      %v1333 = vpop.f32.mrb[0].mxu0
      %v1334 = vadd.f32 0.0, %v1333
      %v1335 = vpop.f32.mrb[0].mxu0
      %v1336 = vpop.f32.mrb[0].mxu0
      %v1337 = vadd.f32 0.0, %v1336
      %v1338 = vpop.f32.mrb[0].mxu0
      %1339 = vmatprep.mubr.bf16.mxu0 0
      %1340 = vmatmul.mubr.bf16.gmra.mrb[0].mxu0 %v1185
      %v1341 = vpop.f32.mrb[0].mxu0
      %v1342 = vadd.f32 0.0, %v1341
      %v1343 = vpop.f32.mrb[0].mxu0
      %v1344 = vpop.f32.mrb[0].mxu0
      %v1345 = vadd.f32 0.0, %v1344
      %v1346 = vpop.f32.mrb[0].mxu0
      %1347 = vdwg.mxu0
      %v1348 = vadd.f32 %v1100, %v1286
      %v1349 = vadd.f32 %v1103, %v1289
      %v1350 = vadd.f32 %v1108, %v1294
      %v1351 = vadd.f32 %v1111, %v1297
      %v1352 = vadd.f32 %v1116, %v1302
      %v1353 = vadd.f32 %v1119, %v1305
      %v1354 = vadd.f32 %v1124, %v1310
      %v1355 = vadd.f32 %v1127, %v1313
      %v1356 = vadd.f32 %v1132, %v1318
      %v1357 = vadd.f32 %v1135, %v1321
      %v1358 = vadd.f32 %v1140, %v1326
      %v1359 = vadd.f32 %v1143, %v1329
      %v1360 = vadd.f32 %v1148, %v1334
      %v1361 = vadd.f32 %v1151, %v1337
      %v1362 = vadd.f32 %v1156, %v1342
      %v1363 = vadd.f32 %v1159, %v1345
      %s1364 = sadd.s32 %s788, 1
      %s1365 = smul.u32 %s1364, 24
      %s1366 = scalar_lea.vmem [#allocation2], %s1365
      %v1367 = vld [vmem:[%s1366] sm:$0xff]
      %v1368 = vld [vmem:[%s1366 + $0x8] sm:$0xff]
      %v1369 = vld [vmem:[%s1366 + $0x18] sm:$0xff]
      %v1370 = vld [vmem:[%s1366 + $0x20] sm:$0xff]
      %v1371 = vld [vmem:[%s1366 + $0x30] sm:$0xff]
      %v1372 = vld [vmem:[%s1366 + $0x38] sm:$0xff]
      %v1373 = vld [vmem:[%s1366 + $0x48] sm:$0xff]
      %v1374 = vld [vmem:[%s1366 + $0x50] sm:$0xff]
      %v1375 = vld [vmem:[%s1366 + $0x60] sm:$0xff]
      %v1376 = vld [vmem:[%s1366 + $0x68] sm:$0xff]
      %v1377 = vld [vmem:[%s1366 + $0x78] sm:$0xff]
      %v1378 = vld [vmem:[%s1366 + $0x80] sm:$0xff]
      %v1379 = vld [vmem:[%s1366 + $0x90] sm:$0xff]
      %v1380 = vld [vmem:[%s1366 + $0x98] sm:$0xff]
      %v1381 = vld [vmem:[%s1366 + $0xa8] sm:$0xff]
      %v1382 = vld [vmem:[%s1366 + $0xb0] sm:$0xff]
      %v1383 = vpack.c.bf16 %v1368, %v1367
      %v1384 = vpack.c.bf16 %v1370, %v1369
      %v1385 = vpack.c.bf16 %v1372, %v1371
      %v1386 = vpack.c.bf16 %v1374, %v1373
      %v1387 = vpack.c.bf16 %v1376, %v1375
      %v1388 = vpack.c.bf16 %v1378, %v1377
      %v1389 = vpack.c.bf16 %v1380, %v1379
      %v1390 = vpack.c.bf16 %v1382, %v1381
      %s1391 = scalar_lea.vmem %s2, 192
      %v1392 = vld [vmem:[%s1391] sm:$0xf]
      %v1393 = vld [vmem:[%s1391 + $0x4] sm:$0xf]
      %v1394 = vld [vmem:[%s1391 + $0x8] sm:$0xf]
      %v1395 = vld [vmem:[%s1391 + $0xc] sm:$0xf]
      %v1396 = vld [vmem:[%s1391 + $0x10] sm:$0xf]
      %v1397 = vld [vmem:[%s1391 + $0x14] sm:$0xf]
      %v1398 = vld [vmem:[%s1391 + $0x18] sm:$0xf]
      %v1399 = vld [vmem:[%s1391 + $0x1c] sm:$0xf]
      %v1400 = vld [vmem:[%s1391 + $0x20] sm:$0xf]
      %v1401 = vld [vmem:[%s1391 + $0x24] sm:$0xf]
      %v1402 = vld [vmem:[%s1391 + $0x28] sm:$0xf]
      %v1403 = vld [vmem:[%s1391 + $0x2c] sm:$0xf]
      %v1404 = vld [vmem:[%s1391 + $0x30] sm:$0xf]
      %v1405 = vld [vmem:[%s1391 + $0x34] sm:$0xf]
      %v1406 = vld [vmem:[%s1391 + $0x38] sm:$0xf]
      %v1407 = vld [vmem:[%s1391 + $0x3c] sm:$0xf]
      %v1424 = vunpack.c.l.b16 %v1392
      %v1425 = vunpack.c.l.b16 %v1393
      %v1426 = vunpack.c.l.b16 %v1394
      %v1427 = vunpack.c.l.b16 %v1395
      %v1428 = vunpack.c.l.b16 %v1396
      %v1429 = vunpack.c.l.b16 %v1397
      %v1430 = vunpack.c.l.b16 %v1398
      %v1431 = vunpack.c.l.b16 %v1399
      %v1432 = vunpack.c.l.b16 %v1400
      %v1433 = vunpack.c.l.b16 %v1401
      %v1434 = vunpack.c.l.b16 %v1402
      %v1435 = vunpack.c.l.b16 %v1403
      %v1436 = vunpack.c.l.b16 %v1404
      %v1437 = vunpack.c.l.b16 %v1405
      %v1438 = vunpack.c.l.b16 %v1406
      %v1439 = vunpack.c.l.b16 %v1407
      %v1440 = vpack.c.b16 %v1425, %v1424
      %v1441 = vpack.c.b16 %v1427, %v1426
      %v1442 = vpack.c.b16 %v1429, %v1428
      %v1443 = vpack.c.b16 %v1431, %v1430
      %v1444 = vpack.c.b16 %v1433, %v1432
      %v1445 = vpack.c.b16 %v1435, %v1434
      %v1446 = vpack.c.b16 %v1437, %v1436
      %v1447 = vpack.c.b16 %v1439, %v1438
      %1456 = vmatprep.subr.bf16.mxu0 0
      %1457 = vmatpush1.bf16.msra.mxu0 %v1440
      %1458 = vmatprep.subr.bf16.mxu0 0
      %1459 = vmatpush1.bf16.msra.mxu0 %v1441
      %1460 = vmatprep.subr.bf16.mxu0 0
      %1461 = vmatpush1.bf16.msra.mxu0 %v1442
      %1462 = vmatprep.subr.bf16.mxu0 0
      %1463 = vmatpush1.bf16.msra.mxu0 %v1443
      %1464 = vmatprep.subr.bf16.mxu0 0
      %1465 = vmatpush1.bf16.msra.mxu0 %v1444
      %1466 = vmatprep.subr.bf16.mxu0 0
      %1467 = vmatpush1.bf16.msra.mxu0 %v1445
      %1468 = vmatprep.subr.bf16.mxu0 0
      %1469 = vmatpush1.bf16.msra.mxu0 %v1446
      %1470 = vmatprep.subr.bf16.mxu0 0
      %1471 = vmatpush1.bf16.msra.mxu0 %v1447
      %1472 = vmatprep.subr.bf16.mxu0 0
      %1473 = vmatpush1.bf16.msra.mxu0 0
      %1474 = vmatprep.subr.bf16.mxu0 0
      %1475 = vmatpush1.bf16.msra.mxu0 0
      %1476 = vmatprep.subr.bf16.mxu0 0
      %1477 = vmatpush1.bf16.msra.mxu0 0
      %1478 = vmatprep.subr.bf16.mxu0 0
      %1479 = vmatpush1.bf16.msra.mxu0 0
      %1480 = vmatprep.subr.bf16.mxu0 0
      %1481 = vmatpush1.bf16.msra.mxu0 0
      %1482 = vmatprep.subr.bf16.mxu0 0
      %1483 = vmatpush1.bf16.msra.mxu0 0
      %1484 = vmatprep.subr.bf16.mxu0 0
      %1485 = vmatpush1.bf16.msra.mxu0 0
      %1486 = vmatprep.subr.bf16.mxu0 0
      %1487 = vmatpush1.bf16.msra.mxu0 0
      %1488 = vmatprep.mubr.bf16.mxu0 0
      %1489 = vmatmul.mubr.bf16.gmra.mrb[0].mxu0 %v1383
      %v1490 = vpop.f32.mrb[0].mxu0
      %v1491 = vadd.f32 0.0, %v1490
      %v1492 = vpop.f32.mrb[0].mxu0
      %v1493 = vpop.f32.mrb[0].mxu0
      %v1494 = vadd.f32 0.0, %v1493
      %v1495 = vpop.f32.mrb[0].mxu0
      %1496 = vmatprep.mubr.bf16.mxu0 0
      %1497 = vmatmul.mubr.bf16.gmra.mrb[0].mxu0 %v1384
      %v1498 = vpop.f32.mrb[0].mxu0
      %v1499 = vadd.f32 0.0, %v1498
      %v1500 = vpop.f32.mrb[0].mxu0
      %v1501 = vpop.f32.mrb[0].mxu0
      %v1502 = vadd.f32 0.0, %v1501
      %v1503 = vpop.f32.mrb[0].mxu0
      %1504 = vmatprep.mubr.bf16.mxu0 0
      %1505 = vmatmul.mubr.bf16.gmra.mrb[0].mxu0 %v1385
      %v1506 = vpop.f32.mrb[0].mxu0
      %v1507 = vadd.f32 0.0, %v1506
      %v1508 = vpop.f32.mrb[0].mxu0
      %v1509 = vpop.f32.mrb[0].mxu0
      %v1510 = vadd.f32 0.0, %v1509
      %v1511 = vpop.f32.mrb[0].mxu0
      %1512 = vmatprep.mubr.bf16.mxu0 0
      %1513 = vmatmul.mubr.bf16.gmra.mrb[0].mxu0 %v1386
      %v1514 = vpop.f32.mrb[0].mxu0
      %v1515 = vadd.f32 0.0, %v1514
      %v1516 = vpop.f32.mrb[0].mxu0
      %v1517 = vpop.f32.mrb[0].mxu0
      %v1518 = vadd.f32 0.0, %v1517
      %v1519 = vpop.f32.mrb[0].mxu0
      %1520 = vmatprep.mubr.bf16.mxu0 0
      %1521 = vmatmul.mubr.bf16.gmra.mrb[0].mxu0 %v1387
      %v1522 = vpop.f32.mrb[0].mxu0
      %v1523 = vadd.f32 0.0, %v1522
      %v1524 = vpop.f32.mrb[0].mxu0
      %v1525 = vpop.f32.mrb[0].mxu0
      %v1526 = vadd.f32 0.0, %v1525
      %v1527 = vpop.f32.mrb[0].mxu0
      %1528 = vmatprep.mubr.bf16.mxu0 0
      %1529 = vmatmul.mubr.bf16.gmra.mrb[0].mxu0 %v1388
      %v1530 = vpop.f32.mrb[0].mxu0
      %v1531 = vadd.f32 0.0, %v1530
      %v1532 = vpop.f32.mrb[0].mxu0
      %v1533 = vpop.f32.mrb[0].mxu0
      %v1534 = vadd.f32 0.0, %v1533
      %v1535 = vpop.f32.mrb[0].mxu0
      %1536 = vmatprep.mubr.bf16.mxu0 0
      %1537 = vmatmul.mubr.bf16.gmra.mrb[0].mxu0 %v1389
      %v1538 = vpop.f32.mrb[0].mxu0
      %v1539 = vadd.f32 0.0, %v1538
      %v1540 = vpop.f32.mrb[0].mxu0
      %v1541 = vpop.f32.mrb[0].mxu0
      %v1542 = vadd.f32 0.0, %v1541
      %v1543 = vpop.f32.mrb[0].mxu0
      %1544 = vmatprep.mubr.bf16.mxu0 0
      %1545 = vmatmul.mubr.bf16.gmra.mrb[0].mxu0 %v1390
      %v1546 = vpop.f32.mrb[0].mxu0
      %v1547 = vadd.f32 0.0, %v1546
      %v1548 = vpop.f32.mrb[0].mxu0
      %v1549 = vpop.f32.mrb[0].mxu0
      %v1550 = vadd.f32 0.0, %v1549
      %v1551 = vpop.f32.mrb[0].mxu0
      %1552 = vdwg.mxu0
      %v1553 = vadd.f32 %v1348, %v1491
      %v1554 = vadd.f32 %v1349, %v1494
      %v1555 = vadd.f32 %v1350, %v1499
      %v1556 = vadd.f32 %v1351, %v1502
      %v1557 = vadd.f32 %v1352, %v1507
      %v1558 = vadd.f32 %v1353, %v1510
      %v1559 = vadd.f32 %v1354, %v1515
      %v1560 = vadd.f32 %v1355, %v1518
      %v1561 = vadd.f32 %v1356, %v1523
      %v1562 = vadd.f32 %v1357, %v1526
      %v1563 = vadd.f32 %v1358, %v1531
      %v1564 = vadd.f32 %v1359, %v1534
      %v1565 = vadd.f32 %v1360, %v1539
      %v1566 = vadd.f32 %v1361, %v1542
      %v1567 = vadd.f32 %v1362, %v1547
      %v1568 = vadd.f32 %v1363, %v1550
      %v1569 = vld [vmem:[%s1366 + $0x1] sm:$0xff]
      %v1570 = vld [vmem:[%s1366 + $0x9] sm:$0xff]
      %v1571 = vld [vmem:[%s1366 + $0x19] sm:$0xff]
      %v1572 = vld [vmem:[%s1366 + $0x21] sm:$0xff]
      %v1573 = vld [vmem:[%s1366 + $0x31] sm:$0xff]
      %v1574 = vld [vmem:[%s1366 + $0x39] sm:$0xff]
      %v1575 = vld [vmem:[%s1366 + $0x49] sm:$0xff]
      %v1576 = vld [vmem:[%s1366 + $0x51] sm:$0xff]
      %v1577 = vld [vmem:[%s1366 + $0x61] sm:$0xff]
      %v1578 = vld [vmem:[%s1366 + $0x69] sm:$0xff]
      %v1579 = vld [vmem:[%s1366 + $0x79] sm:$0xff]
      %v1580 = vld [vmem:[%s1366 + $0x81] sm:$0xff]
      %v1581 = vld [vmem:[%s1366 + $0x91] sm:$0xff]
      %v1582 = vld [vmem:[%s1366 + $0x99] sm:$0xff]
      %v1583 = vld [vmem:[%s1366 + $0xa9] sm:$0xff]
      %v1584 = vld [vmem:[%s1366 + $0xb1] sm:$0xff]
      %v1585 = vpack.c.bf16 %v1570, %v1569
      %v1586 = vpack.c.bf16 %v1572, %v1571
      %v1587 = vpack.c.bf16 %v1574, %v1573
      %v1588 = vpack.c.bf16 %v1576, %v1575
      %v1589 = vpack.c.bf16 %v1578, %v1577
      %v1590 = vpack.c.bf16 %v1580, %v1579
      %v1591 = vpack.c.bf16 %v1582, %v1581
      %v1592 = vpack.c.bf16 %v1584, %v1583
      %s1593 = scalar_lea.vmem %s2, 256
      %v1594 = vld [vmem:[%s1593] sm:$0xf]
      %v1595 = vld [vmem:[%s1593 + $0x4] sm:$0xf]
      %v1596 = vld [vmem:[%s1593 + $0x8] sm:$0xf]
      %v1597 = vld [vmem:[%s1593 + $0xc] sm:$0xf]
      %v1598 = vld [vmem:[%s1593 + $0x10] sm:$0xf]
      %v1599 = vld [vmem:[%s1593 + $0x14] sm:$0xf]
      %v1600 = vld [vmem:[%s1593 + $0x18] sm:$0xf]
      %v1601 = vld [vmem:[%s1593 + $0x1c] sm:$0xf]
      %v1602 = vld [vmem:[%s1593 + $0x20] sm:$0xf]
      %v1603 = vld [vmem:[%s1593 + $0x24] sm:$0xf]
      %v1604 = vld [vmem:[%s1593 + $0x28] sm:$0xf]
      %v1605 = vld [vmem:[%s1593 + $0x2c] sm:$0xf]
      %v1606 = vld [vmem:[%s1593 + $0x30] sm:$0xf]
      %v1607 = vld [vmem:[%s1593 + $0x34] sm:$0xf]
      %v1608 = vld [vmem:[%s1593 + $0x38] sm:$0xf]
      %v1609 = vld [vmem:[%s1593 + $0x3c] sm:$0xf]
      %v1626 = vunpack.c.l.b16 %v1594
      %v1627 = vunpack.c.l.b16 %v1595
      %v1628 = vunpack.c.l.b16 %v1596
      %v1629 = vunpack.c.l.b16 %v1597
      %v1630 = vunpack.c.l.b16 %v1598
      %v1631 = vunpack.c.l.b16 %v1599
      %v1632 = vunpack.c.l.b16 %v1600
      %v1633 = vunpack.c.l.b16 %v1601
      %v1634 = vunpack.c.l.b16 %v1602
      %v1635 = vunpack.c.l.b16 %v1603
      %v1636 = vunpack.c.l.b16 %v1604
      %v1637 = vunpack.c.l.b16 %v1605
      %v1638 = vunpack.c.l.b16 %v1606
      %v1639 = vunpack.c.l.b16 %v1607
      %v1640 = vunpack.c.l.b16 %v1608
      %v1641 = vunpack.c.l.b16 %v1609
      %v1642 = vpack.c.b16 %v1627, %v1626
      %v1643 = vpack.c.b16 %v1629, %v1628
      %v1644 = vpack.c.b16 %v1631, %v1630
      %v1645 = vpack.c.b16 %v1633, %v1632
      %v1646 = vpack.c.b16 %v1635, %v1634
      %v1647 = vpack.c.b16 %v1637, %v1636
      %v1648 = vpack.c.b16 %v1639, %v1638
      %v1649 = vpack.c.b16 %v1641, %v1640
      %1658 = vmatprep.subr.bf16.mxu0 0
      %1659 = vmatpush1.bf16.msra.mxu0 %v1642
      %1660 = vmatprep.subr.bf16.mxu0 0
      %1661 = vmatpush1.bf16.msra.mxu0 %v1643
      %1662 = vmatprep.subr.bf16.mxu0 0
      %1663 = vmatpush1.bf16.msra.mxu0 %v1644
      %1664 = vmatprep.subr.bf16.mxu0 0
      %1665 = vmatpush1.bf16.msra.mxu0 %v1645
      %1666 = vmatprep.subr.bf16.mxu0 0
      %1667 = vmatpush1.bf16.msra.mxu0 %v1646
      %1668 = vmatprep.subr.bf16.mxu0 0
      %1669 = vmatpush1.bf16.msra.mxu0 %v1647
      %1670 = vmatprep.subr.bf16.mxu0 0
      %1671 = vmatpush1.bf16.msra.mxu0 %v1648
      %1672 = vmatprep.subr.bf16.mxu0 0
      %1673 = vmatpush1.bf16.msra.mxu0 %v1649
      %1674 = vmatprep.subr.bf16.mxu0 0
      %1675 = vmatpush1.bf16.msra.mxu0 0
      %1676 = vmatprep.subr.bf16.mxu0 0
      %1677 = vmatpush1.bf16.msra.mxu0 0
      %1678 = vmatprep.subr.bf16.mxu0 0
      %1679 = vmatpush1.bf16.msra.mxu0 0
      %1680 = vmatprep.subr.bf16.mxu0 0
      %1681 = vmatpush1.bf16.msra.mxu0 0
      %1682 = vmatprep.subr.bf16.mxu0 0
      %1683 = vmatpush1.bf16.msra.mxu0 0
      %1684 = vmatprep.subr.bf16.mxu0 0
      %1685 = vmatpush1.bf16.msra.mxu0 0
      %1686 = vmatprep.subr.bf16.mxu0 0
      %1687 = vmatpush1.bf16.msra.mxu0 0
      %1688 = vmatprep.subr.bf16.mxu0 0
      %1689 = vmatpush1.bf16.msra.mxu0 0
      %1690 = vmatprep.mubr.bf16.mxu0 0
      %1691 = vmatmul.mubr.bf16.gmra.mrb[0].mxu0 %v1585
      %v1692 = vpop.f32.mrb[0].mxu0
      %v1693 = vadd.f32 0.0, %v1692
      %v1694 = vpop.f32.mrb[0].mxu0
      %v1695 = vpop.f32.mrb[0].mxu0
      %v1696 = vadd.f32 0.0, %v1695
      %v1697 = vpop.f32.mrb[0].mxu0
      %1698 = vmatprep.mubr.bf16.mxu0 0
      %1699 = vmatmul.mubr.bf16.gmra.mrb[0].mxu0 %v1586
      %v1700 = vpop.f32.mrb[0].mxu0
      %v1701 = vadd.f32 0.0, %v1700
      %v1702 = vpop.f32.mrb[0].mxu0
      %v1703 = vpop.f32.mrb[0].mxu0
      %v1704 = vadd.f32 0.0, %v1703
      %v1705 = vpop.f32.mrb[0].mxu0
      %1706 = vmatprep.mubr.bf16.mxu0 0
      %1707 = vmatmul.mubr.bf16.gmra.mrb[0].mxu0 %v1587
      %v1708 = vpop.f32.mrb[0].mxu0
      %v1709 = vadd.f32 0.0, %v1708
      %v1710 = vpop.f32.mrb[0].mxu0
      %v1711 = vpop.f32.mrb[0].mxu0
      %v1712 = vadd.f32 0.0, %v1711
      %v1713 = vpop.f32.mrb[0].mxu0
      %1714 = vmatprep.mubr.bf16.mxu0 0
      %1715 = vmatmul.mubr.bf16.gmra.mrb[0].mxu0 %v1588
      %v1716 = vpop.f32.mrb[0].mxu0
      %v1717 = vadd.f32 0.0, %v1716
      %v1718 = vpop.f32.mrb[0].mxu0
      %v1719 = vpop.f32.mrb[0].mxu0
      %v1720 = vadd.f32 0.0, %v1719
      %v1721 = vpop.f32.mrb[0].mxu0
      %1722 = vmatprep.mubr.bf16.mxu0 0
      %1723 = vmatmul.mubr.bf16.gmra.mrb[0].mxu0 %v1589
      %v1724 = vpop.f32.mrb[0].mxu0
      %v1725 = vadd.f32 0.0, %v1724
      %v1726 = vpop.f32.mrb[0].mxu0
      %v1727 = vpop.f32.mrb[0].mxu0
      %v1728 = vadd.f32 0.0, %v1727
      %v1729 = vpop.f32.mrb[0].mxu0
      %1730 = vmatprep.mubr.bf16.mxu0 0
      %1731 = vmatmul.mubr.bf16.gmra.mrb[0].mxu0 %v1590
      %v1732 = vpop.f32.mrb[0].mxu0
      %v1733 = vadd.f32 0.0, %v1732
      %v1734 = vpop.f32.mrb[0].mxu0
      %v1735 = vpop.f32.mrb[0].mxu0
      %v1736 = vadd.f32 0.0, %v1735
      %v1737 = vpop.f32.mrb[0].mxu0
      %1738 = vmatprep.mubr.bf16.mxu0 0
      %1739 = vmatmul.mubr.bf16.gmra.mrb[0].mxu0 %v1591
      %v1740 = vpop.f32.mrb[0].mxu0
      %v1741 = vadd.f32 0.0, %v1740
      %v1742 = vpop.f32.mrb[0].mxu0
      %v1743 = vpop.f32.mrb[0].mxu0
      %v1744 = vadd.f32 0.0, %v1743
      %v1745 = vpop.f32.mrb[0].mxu0
      %1746 = vmatprep.mubr.bf16.mxu0 0
      %1747 = vmatmul.mubr.bf16.gmra.mrb[0].mxu0 %v1592
      %v1748 = vpop.f32.mrb[0].mxu0
      %v1749 = vadd.f32 0.0, %v1748
      %v1750 = vpop.f32.mrb[0].mxu0
      %v1751 = vpop.f32.mrb[0].mxu0
      %v1752 = vadd.f32 0.0, %v1751
      %v1753 = vpop.f32.mrb[0].mxu0
      %1754 = vdwg.mxu0
      %v1755 = vadd.f32 %v1553, %v1693
      %v1756 = vadd.f32 %v1554, %v1696
      %v1757 = vadd.f32 %v1555, %v1701
      %v1758 = vadd.f32 %v1556, %v1704
      %v1759 = vadd.f32 %v1557, %v1709
      %v1760 = vadd.f32 %v1558, %v1712
      %v1761 = vadd.f32 %v1559, %v1717
      %v1762 = vadd.f32 %v1560, %v1720
      %v1763 = vadd.f32 %v1561, %v1725
      %v1764 = vadd.f32 %v1562, %v1728
      %v1765 = vadd.f32 %v1563, %v1733
      %v1766 = vadd.f32 %v1564, %v1736
      %v1767 = vadd.f32 %v1565, %v1741
      %v1768 = vadd.f32 %v1566, %v1744
      %v1769 = vadd.f32 %v1567, %v1749
      %v1770 = vadd.f32 %v1568, %v1752
      %v1771 = vld [vmem:[%s1366 + $0x2] sm:$0xff]
      %v1772 = vld [vmem:[%s1366 + $0xa] sm:$0xff]
      %v1773 = vld [vmem:[%s1366 + $0x1a] sm:$0xff]
      %v1774 = vld [vmem:[%s1366 + $0x22] sm:$0xff]
      %v1775 = vld [vmem:[%s1366 + $0x32] sm:$0xff]
      %v1776 = vld [vmem:[%s1366 + $0x3a] sm:$0xff]
      %v1777 = vld [vmem:[%s1366 + $0x4a] sm:$0xff]
      %v1778 = vld [vmem:[%s1366 + $0x52] sm:$0xff]
      %v1779 = vld [vmem:[%s1366 + $0x62] sm:$0xff]
      %v1780 = vld [vmem:[%s1366 + $0x6a] sm:$0xff]
      %v1781 = vld [vmem:[%s1366 + $0x7a] sm:$0xff]
      %v1782 = vld [vmem:[%s1366 + $0x82] sm:$0xff]
      %v1783 = vld [vmem:[%s1366 + $0x92] sm:$0xff]
      %v1784 = vld [vmem:[%s1366 + $0x9a] sm:$0xff]
      %v1785 = vld [vmem:[%s1366 + $0xaa] sm:$0xff]
      %v1786 = vld [vmem:[%s1366 + $0xb2] sm:$0xff]
      %v1787 = vpack.c.bf16 %v1772, %v1771
      %v1788 = vpack.c.bf16 %v1774, %v1773
      %v1789 = vpack.c.bf16 %v1776, %v1775
      %v1790 = vpack.c.bf16 %v1778, %v1777
      %v1791 = vpack.c.bf16 %v1780, %v1779
      %v1792 = vpack.c.bf16 %v1782, %v1781
      %v1793 = vpack.c.bf16 %v1784, %v1783
      %v1794 = vpack.c.bf16 %v1786, %v1785
      %s1795 = scalar_lea.vmem %s2, 320
      %v1796 = vld [vmem:[%s1795] sm:$0xf]
      %v1797 = vld [vmem:[%s1795 + $0x4] sm:$0xf]
      %v1798 = vld [vmem:[%s1795 + $0x8] sm:$0xf]
      %v1799 = vld [vmem:[%s1795 + $0xc] sm:$0xf]
      %v1800 = vld [vmem:[%s1795 + $0x10] sm:$0xf]
      %v1801 = vld [vmem:[%s1795 + $0x14] sm:$0xf]
      %v1802 = vld [vmem:[%s1795 + $0x18] sm:$0xf]
      %v1803 = vld [vmem:[%s1795 + $0x1c] sm:$0xf]
      %v1804 = vld [vmem:[%s1795 + $0x20] sm:$0xf]
      %v1805 = vld [vmem:[%s1795 + $0x24] sm:$0xf]
      %v1806 = vld [vmem:[%s1795 + $0x28] sm:$0xf]
      %v1807 = vld [vmem:[%s1795 + $0x2c] sm:$0xf]
      %v1808 = vld [vmem:[%s1795 + $0x30] sm:$0xf]
      %v1809 = vld [vmem:[%s1795 + $0x34] sm:$0xf]
      %v1810 = vld [vmem:[%s1795 + $0x38] sm:$0xf]
      %v1811 = vld [vmem:[%s1795 + $0x3c] sm:$0xf]
      %v1828 = vunpack.c.l.b16 %v1796
      %v1829 = vunpack.c.l.b16 %v1797
      %v1830 = vunpack.c.l.b16 %v1798
      %v1831 = vunpack.c.l.b16 %v1799
      %v1832 = vunpack.c.l.b16 %v1800
      %v1833 = vunpack.c.l.b16 %v1801
      %v1834 = vunpack.c.l.b16 %v1802
      %v1835 = vunpack.c.l.b16 %v1803
      %v1836 = vunpack.c.l.b16 %v1804
      %v1837 = vunpack.c.l.b16 %v1805
      %v1838 = vunpack.c.l.b16 %v1806
      %v1839 = vunpack.c.l.b16 %v1807
      %v1840 = vunpack.c.l.b16 %v1808
      %v1841 = vunpack.c.l.b16 %v1809
      %v1842 = vunpack.c.l.b16 %v1810
      %v1843 = vunpack.c.l.b16 %v1811
      %v1844 = vpack.c.b16 %v1829, %v1828
      %v1845 = vpack.c.b16 %v1831, %v1830
      %v1846 = vpack.c.b16 %v1833, %v1832
      %v1847 = vpack.c.b16 %v1835, %v1834
      %v1848 = vpack.c.b16 %v1837, %v1836
      %v1849 = vpack.c.b16 %v1839, %v1838
      %v1850 = vpack.c.b16 %v1841, %v1840
      %v1851 = vpack.c.b16 %v1843, %v1842
      %1860 = vmatprep.subr.bf16.mxu0 0
      %1861 = vmatpush1.bf16.msra.mxu0 %v1844
      %1862 = vmatprep.subr.bf16.mxu0 0
      %1863 = vmatpush1.bf16.msra.mxu0 %v1845
      %1864 = vmatprep.subr.bf16.mxu0 0
      %1865 = vmatpush1.bf16.msra.mxu0 %v1846
      %1866 = vmatprep.subr.bf16.mxu0 0
      %1867 = vmatpush1.bf16.msra.mxu0 %v1847
      %1868 = vmatprep.subr.bf16.mxu0 0
      %1869 = vmatpush1.bf16.msra.mxu0 %v1848
      %1870 = vmatprep.subr.bf16.mxu0 0
      %1871 = vmatpush1.bf16.msra.mxu0 %v1849
      %1872 = vmatprep.subr.bf16.mxu0 0
      %1873 = vmatpush1.bf16.msra.mxu0 %v1850
      %1874 = vmatprep.subr.bf16.mxu0 0
      %1875 = vmatpush1.bf16.msra.mxu0 %v1851
      %1876 = vmatprep.subr.bf16.mxu0 0
      %1877 = vmatpush1.bf16.msra.mxu0 0
      %1878 = vmatprep.subr.bf16.mxu0 0
      %1879 = vmatpush1.bf16.msra.mxu0 0
      %1880 = vmatprep.subr.bf16.mxu0 0
      %1881 = vmatpush1.bf16.msra.mxu0 0
      %1882 = vmatprep.subr.bf16.mxu0 0
      %1883 = vmatpush1.bf16.msra.mxu0 0
      %1884 = vmatprep.subr.bf16.mxu0 0
      %1885 = vmatpush1.bf16.msra.mxu0 0
      %1886 = vmatprep.subr.bf16.mxu0 0
      %1887 = vmatpush1.bf16.msra.mxu0 0
      %1888 = vmatprep.subr.bf16.mxu0 0
      %1889 = vmatpush1.bf16.msra.mxu0 0
      %1890 = vmatprep.subr.bf16.mxu0 0
      %1891 = vmatpush1.bf16.msra.mxu0 0
      %1892 = vmatprep.mubr.bf16.mxu0 0
      %1893 = vmatmul.mubr.bf16.gmra.mrb[0].mxu0 %v1787
      %v1894 = vpop.f32.mrb[0].mxu0
      %v1895 = vadd.f32 0.0, %v1894
      %v1896 = vpop.f32.mrb[0].mxu0
      %v1897 = vpop.f32.mrb[0].mxu0
      %v1898 = vadd.f32 0.0, %v1897
      %v1899 = vpop.f32.mrb[0].mxu0
      %1900 = vmatprep.mubr.bf16.mxu0 0
      %1901 = vmatmul.mubr.bf16.gmra.mrb[0].mxu0 %v1788
      %v1902 = vpop.f32.mrb[0].mxu0
      %v1903 = vadd.f32 0.0, %v1902
      %v1904 = vpop.f32.mrb[0].mxu0
      %v1905 = vpop.f32.mrb[0].mxu0
      %v1906 = vadd.f32 0.0, %v1905
      %v1907 = vpop.f32.mrb[0].mxu0
      %1908 = vmatprep.mubr.bf16.mxu0 0
      %1909 = vmatmul.mubr.bf16.gmra.mrb[0].mxu0 %v1789
      %v1910 = vpop.f32.mrb[0].mxu0
      %v1911 = vadd.f32 0.0, %v1910
      %v1912 = vpop.f32.mrb[0].mxu0
      %v1913 = vpop.f32.mrb[0].mxu0
      %v1914 = vadd.f32 0.0, %v1913
      %v1915 = vpop.f32.mrb[0].mxu0
      %1916 = vmatprep.mubr.bf16.mxu0 0
      %1917 = vmatmul.mubr.bf16.gmra.mrb[0].mxu0 %v1790
      %v1918 = vpop.f32.mrb[0].mxu0
      %v1919 = vadd.f32 0.0, %v1918
      %v1920 = vpop.f32.mrb[0].mxu0
      %v1921 = vpop.f32.mrb[0].mxu0
      %v1922 = vadd.f32 0.0, %v1921
      %v1923 = vpop.f32.mrb[0].mxu0
      %1924 = vmatprep.mubr.bf16.mxu0 0
      %1925 = vmatmul.mubr.bf16.gmra.mrb[0].mxu0 %v1791
      %v1926 = vpop.f32.mrb[0].mxu0
      %v1927 = vadd.f32 0.0, %v1926
      %v1928 = vpop.f32.mrb[0].mxu0
      %v1929 = vpop.f32.mrb[0].mxu0
      %v1930 = vadd.f32 0.0, %v1929
      %v1931 = vpop.f32.mrb[0].mxu0
      %1932 = vmatprep.mubr.bf16.mxu0 0
      %1933 = vmatmul.mubr.bf16.gmra.mrb[0].mxu0 %v1792
      %v1934 = vpop.f32.mrb[0].mxu0
      %v1935 = vadd.f32 0.0, %v1934
      %v1936 = vpop.f32.mrb[0].mxu0
      %v1937 = vpop.f32.mrb[0].mxu0
      %v1938 = vadd.f32 0.0, %v1937
      %v1939 = vpop.f32.mrb[0].mxu0
      %1940 = vmatprep.mubr.bf16.mxu0 0
      %1941 = vmatmul.mubr.bf16.gmra.mrb[0].mxu0 %v1793
      %v1942 = vpop.f32.mrb[0].mxu0
      %v1943 = vadd.f32 0.0, %v1942
      %v1944 = vpop.f32.mrb[0].mxu0
      %v1945 = vpop.f32.mrb[0].mxu0
      %v1946 = vadd.f32 0.0, %v1945
      %v1947 = vpop.f32.mrb[0].mxu0
      %1948 = vmatprep.mubr.bf16.mxu0 0
      %1949 = vmatmul.mubr.bf16.gmra.mrb[0].mxu0 %v1794
      %v1950 = vpop.f32.mrb[0].mxu0
      %v1951 = vadd.f32 0.0, %v1950
      %v1952 = vpop.f32.mrb[0].mxu0
      %v1953 = vpop.f32.mrb[0].mxu0
      %v1954 = vadd.f32 0.0, %v1953
      %v1955 = vpop.f32.mrb[0].mxu0
      %1956 = vdwg.mxu0
      %v1957 = vadd.f32 %v1755, %v1895
      %v1958 = vadd.f32 %v1756, %v1898
      %v1959 = vadd.f32 %v1757, %v1903
      %v1960 = vadd.f32 %v1758, %v1906
      %v1961 = vadd.f32 %v1759, %v1911
      %v1962 = vadd.f32 %v1760, %v1914
      %v1963 = vadd.f32 %v1761, %v1919
      %v1964 = vadd.f32 %v1762, %v1922
      %v1965 = vadd.f32 %v1763, %v1927
      %v1966 = vadd.f32 %v1764, %v1930
      %v1967 = vadd.f32 %v1765, %v1935
      %v1968 = vadd.f32 %v1766, %v1938
      %v1969 = vadd.f32 %v1767, %v1943
      %v1970 = vadd.f32 %v1768, %v1946
      %v1971 = vadd.f32 %v1769, %v1951
      %v1972 = vadd.f32 %v1770, %v1954
      %s1973 = sadd.s32 %s788, 2
      %s1974 = smul.u32 %s1973, 24
      %s1975 = scalar_lea.vmem [#allocation2], %s1974
      %v1976 = vld [vmem:[%s1975] sm:$0xff]
      %v1977 = vld [vmem:[%s1975 + $0x8] sm:$0xff]
      %v1978 = vld [vmem:[%s1975 + $0x18] sm:$0xff]
      %v1979 = vld [vmem:[%s1975 + $0x20] sm:$0xff]
      %v1980 = vld [vmem:[%s1975 + $0x30] sm:$0xff]
      %v1981 = vld [vmem:[%s1975 + $0x38] sm:$0xff]
      %v1982 = vld [vmem:[%s1975 + $0x48] sm:$0xff]
      %v1983 = vld [vmem:[%s1975 + $0x50] sm:$0xff]
      %v1984 = vld [vmem:[%s1975 + $0x60] sm:$0xff]
      %v1985 = vld [vmem:[%s1975 + $0x68] sm:$0xff]
      %v1986 = vld [vmem:[%s1975 + $0x78] sm:$0xff]
      %v1987 = vld [vmem:[%s1975 + $0x80] sm:$0xff]
      %v1988 = vld [vmem:[%s1975 + $0x90] sm:$0xff]
      %v1989 = vld [vmem:[%s1975 + $0x98] sm:$0xff]
      %v1990 = vld [vmem:[%s1975 + $0xa8] sm:$0xff]
      %v1991 = vld [vmem:[%s1975 + $0xb0] sm:$0xff]
      %v1992 = vpack.c.bf16 %v1977, %v1976
      %v1993 = vpack.c.bf16 %v1979, %v1978
      %v1994 = vpack.c.bf16 %v1981, %v1980
      %v1995 = vpack.c.bf16 %v1983, %v1982
      %v1996 = vpack.c.bf16 %v1985, %v1984
      %v1997 = vpack.c.bf16 %v1987, %v1986
      %v1998 = vpack.c.bf16 %v1989, %v1988
      %v1999 = vpack.c.bf16 %v1991, %v1990
      %s2000 = scalar_lea.vmem %s2, 384
      %v2001 = vld [vmem:[%s2000] sm:$0xf]
      %v2002 = vld [vmem:[%s2000 + $0x4] sm:$0xf]
      %v2003 = vld [vmem:[%s2000 + $0x8] sm:$0xf]
      %v2004 = vld [vmem:[%s2000 + $0xc] sm:$0xf]
      %v2005 = vld [vmem:[%s2000 + $0x10] sm:$0xf]
      %v2006 = vld [vmem:[%s2000 + $0x14] sm:$0xf]
      %v2007 = vld [vmem:[%s2000 + $0x18] sm:$0xf]
      %v2008 = vld [vmem:[%s2000 + $0x1c] sm:$0xf]
      %v2009 = vld [vmem:[%s2000 + $0x20] sm:$0xf]
      %v2010 = vld [vmem:[%s2000 + $0x24] sm:$0xf]
      %v2011 = vld [vmem:[%s2000 + $0x28] sm:$0xf]
      %v2012 = vld [vmem:[%s2000 + $0x2c] sm:$0xf]
      %v2013 = vld [vmem:[%s2000 + $0x30] sm:$0xf]
      %v2014 = vld [vmem:[%s2000 + $0x34] sm:$0xf]
      %v2015 = vld [vmem:[%s2000 + $0x38] sm:$0xf]
      %v2016 = vld [vmem:[%s2000 + $0x3c] sm:$0xf]
      %v2033 = vunpack.c.l.b16 %v2001
      %v2034 = vunpack.c.l.b16 %v2002
      %v2035 = vunpack.c.l.b16 %v2003
      %v2036 = vunpack.c.l.b16 %v2004
      %v2037 = vunpack.c.l.b16 %v2005
      %v2038 = vunpack.c.l.b16 %v2006
      %v2039 = vunpack.c.l.b16 %v2007
      %v2040 = vunpack.c.l.b16 %v2008
      %v2041 = vunpack.c.l.b16 %v2009
      %v2042 = vunpack.c.l.b16 %v2010
      %v2043 = vunpack.c.l.b16 %v2011
      %v2044 = vunpack.c.l.b16 %v2012
      %v2045 = vunpack.c.l.b16 %v2013
      %v2046 = vunpack.c.l.b16 %v2014
      %v2047 = vunpack.c.l.b16 %v2015
      %v2048 = vunpack.c.l.b16 %v2016
      %v2049 = vpack.c.b16 %v2034, %v2033
      %v2050 = vpack.c.b16 %v2036, %v2035
      %v2051 = vpack.c.b16 %v2038, %v2037
      %v2052 = vpack.c.b16 %v2040, %v2039
      %v2053 = vpack.c.b16 %v2042, %v2041
      %v2054 = vpack.c.b16 %v2044, %v2043
      %v2055 = vpack.c.b16 %v2046, %v2045
      %v2056 = vpack.c.b16 %v2048, %v2047
      %2065 = vmatprep.subr.bf16.mxu0 0
      %2066 = vmatpush1.bf16.msra.mxu0 %v2049
      %2067 = vmatprep.subr.bf16.mxu0 0
      %2068 = vmatpush1.bf16.msra.mxu0 %v2050
      %2069 = vmatprep.subr.bf16.mxu0 0
      %2070 = vmatpush1.bf16.msra.mxu0 %v2051
      %2071 = vmatprep.subr.bf16.mxu0 0
      %2072 = vmatpush1.bf16.msra.mxu0 %v2052
      %2073 = vmatprep.subr.bf16.mxu0 0
      %2074 = vmatpush1.bf16.msra.mxu0 %v2053
      %2075 = vmatprep.subr.bf16.mxu0 0
      %2076 = vmatpush1.bf16.msra.mxu0 %v2054
      %2077 = vmatprep.subr.bf16.mxu0 0
      %2078 = vmatpush1.bf16.msra.mxu0 %v2055
      %2079 = vmatprep.subr.bf16.mxu0 0
      %2080 = vmatpush1.bf16.msra.mxu0 %v2056
      %2081 = vmatprep.subr.bf16.mxu0 0
      %2082 = vmatpush1.bf16.msra.mxu0 0
      %2083 = vmatprep.subr.bf16.mxu0 0
      %2084 = vmatpush1.bf16.msra.mxu0 0
      %2085 = vmatprep.subr.bf16.mxu0 0
      %2086 = vmatpush1.bf16.msra.mxu0 0
      %2087 = vmatprep.subr.bf16.mxu0 0
      %2088 = vmatpush1.bf16.msra.mxu0 0
      %2089 = vmatprep.subr.bf16.mxu0 0
      %2090 = vmatpush1.bf16.msra.mxu0 0
      %2091 = vmatprep.subr.bf16.mxu0 0
      %2092 = vmatpush1.bf16.msra.mxu0 0
      %2093 = vmatprep.subr.bf16.mxu0 0
      %2094 = vmatpush1.bf16.msra.mxu0 0
      %2095 = vmatprep.subr.bf16.mxu0 0
      %2096 = vmatpush1.bf16.msra.mxu0 0
      %2097 = vmatprep.mubr.bf16.mxu0 0
      %2098 = vmatmul.mubr.bf16.gmra.mrb[0].mxu0 %v1992
      %v2099 = vpop.f32.mrb[0].mxu0
      %v2100 = vadd.f32 0.0, %v2099
      %v2101 = vpop.f32.mrb[0].mxu0
      %v2102 = vpop.f32.mrb[0].mxu0
      %v2103 = vadd.f32 0.0, %v2102
      %v2104 = vpop.f32.mrb[0].mxu0
      %2105 = vmatprep.mubr.bf16.mxu0 0
      %2106 = vmatmul.mubr.bf16.gmra.mrb[0].mxu0 %v1993
      %v2107 = vpop.f32.mrb[0].mxu0
      %v2108 = vadd.f32 0.0, %v2107
      %v2109 = vpop.f32.mrb[0].mxu0
      %v2110 = vpop.f32.mrb[0].mxu0
      %v2111 = vadd.f32 0.0, %v2110
      %v2112 = vpop.f32.mrb[0].mxu0
      %2113 = vmatprep.mubr.bf16.mxu0 0
      %2114 = vmatmul.mubr.bf16.gmra.mrb[0].mxu0 %v1994
      %v2115 = vpop.f32.mrb[0].mxu0
      %v2116 = vadd.f32 0.0, %v2115
      %v2117 = vpop.f32.mrb[0].mxu0
      %v2118 = vpop.f32.mrb[0].mxu0
      %v2119 = vadd.f32 0.0, %v2118
      %v2120 = vpop.f32.mrb[0].mxu0
      %2121 = vmatprep.mubr.bf16.mxu0 0
      %2122 = vmatmul.mubr.bf16.gmra.mrb[0].mxu0 %v1995
      %v2123 = vpop.f32.mrb[0].mxu0
      %v2124 = vadd.f32 0.0, %v2123
      %v2125 = vpop.f32.mrb[0].mxu0
      %v2126 = vpop.f32.mrb[0].mxu0
      %v2127 = vadd.f32 0.0, %v2126
      %v2128 = vpop.f32.mrb[0].mxu0
      %2129 = vmatprep.mubr.bf16.mxu0 0
      %2130 = vmatmul.mubr.bf16.gmra.mrb[0].mxu0 %v1996
      %v2131 = vpop.f32.mrb[0].mxu0
      %v2132 = vadd.f32 0.0, %v2131
      %v2133 = vpop.f32.mrb[0].mxu0
      %v2134 = vpop.f32.mrb[0].mxu0
      %v2135 = vadd.f32 0.0, %v2134
      %v2136 = vpop.f32.mrb[0].mxu0
      %2137 = vmatprep.mubr.bf16.mxu0 0
      %2138 = vmatmul.mubr.bf16.gmra.mrb[0].mxu0 %v1997
      %v2139 = vpop.f32.mrb[0].mxu0
      %v2140 = vadd.f32 0.0, %v2139
      %v2141 = vpop.f32.mrb[0].mxu0
      %v2142 = vpop.f32.mrb[0].mxu0
      %v2143 = vadd.f32 0.0, %v2142
      %v2144 = vpop.f32.mrb[0].mxu0
      %2145 = vmatprep.mubr.bf16.mxu0 0
      %2146 = vmatmul.mubr.bf16.gmra.mrb[0].mxu0 %v1998
      %v2147 = vpop.f32.mrb[0].mxu0
      %v2148 = vadd.f32 0.0, %v2147
      %v2149 = vpop.f32.mrb[0].mxu0
      %v2150 = vpop.f32.mrb[0].mxu0
      %v2151 = vadd.f32 0.0, %v2150
      %v2152 = vpop.f32.mrb[0].mxu0
      %2153 = vmatprep.mubr.bf16.mxu0 0
      %2154 = vmatmul.mubr.bf16.gmra.mrb[0].mxu0 %v1999
      %v2155 = vpop.f32.mrb[0].mxu0
      %v2156 = vadd.f32 0.0, %v2155
      %v2157 = vpop.f32.mrb[0].mxu0
      %v2158 = vpop.f32.mrb[0].mxu0
      %v2159 = vadd.f32 0.0, %v2158
      %v2160 = vpop.f32.mrb[0].mxu0
      %2161 = vdwg.mxu0
      %v2162 = vadd.f32 %v1957, %v2100
      %v2163 = vadd.f32 %v1958, %v2103
      %v2164 = vadd.f32 %v1959, %v2108
      %v2165 = vadd.f32 %v1960, %v2111
      %v2166 = vadd.f32 %v1961, %v2116
      %v2167 = vadd.f32 %v1962, %v2119
      %v2168 = vadd.f32 %v1963, %v2124
      %v2169 = vadd.f32 %v1964, %v2127
      %v2170 = vadd.f32 %v1965, %v2132
      %v2171 = vadd.f32 %v1966, %v2135
      %v2172 = vadd.f32 %v1967, %v2140
      %v2173 = vadd.f32 %v1968, %v2143
      %v2174 = vadd.f32 %v1969, %v2148
      %v2175 = vadd.f32 %v1970, %v2151
      %v2176 = vadd.f32 %v1971, %v2156
      %v2177 = vadd.f32 %v1972, %v2159
      %v2178 = vld [vmem:[%s1975 + $0x1] sm:$0xff]
      %v2179 = vld [vmem:[%s1975 + $0x9] sm:$0xff]
      %v2180 = vld [vmem:[%s1975 + $0x19] sm:$0xff]
      %v2181 = vld [vmem:[%s1975 + $0x21] sm:$0xff]
      %v2182 = vld [vmem:[%s1975 + $0x31] sm:$0xff]
      %v2183 = vld [vmem:[%s1975 + $0x39] sm:$0xff]
      %v2184 = vld [vmem:[%s1975 + $0x49] sm:$0xff]
      %v2185 = vld [vmem:[%s1975 + $0x51] sm:$0xff]
      %v2186 = vld [vmem:[%s1975 + $0x61] sm:$0xff]
      %v2187 = vld [vmem:[%s1975 + $0x69] sm:$0xff]
      %v2188 = vld [vmem:[%s1975 + $0x79] sm:$0xff]
      %v2189 = vld [vmem:[%s1975 + $0x81] sm:$0xff]
      %v2190 = vld [vmem:[%s1975 + $0x91] sm:$0xff]
      %v2191 = vld [vmem:[%s1975 + $0x99] sm:$0xff]
      %v2192 = vld [vmem:[%s1975 + $0xa9] sm:$0xff]
      %v2193 = vld [vmem:[%s1975 + $0xb1] sm:$0xff]
      %v2194 = vpack.c.bf16 %v2179, %v2178
      %v2195 = vpack.c.bf16 %v2181, %v2180
      %v2196 = vpack.c.bf16 %v2183, %v2182
      %v2197 = vpack.c.bf16 %v2185, %v2184
      %v2198 = vpack.c.bf16 %v2187, %v2186
      %v2199 = vpack.c.bf16 %v2189, %v2188
      %v2200 = vpack.c.bf16 %v2191, %v2190
      %v2201 = vpack.c.bf16 %v2193, %v2192
      %s2202 = scalar_lea.vmem %s2, 448
      %v2203 = vld [vmem:[%s2202] sm:$0xf]
      %v2204 = vld [vmem:[%s2202 + $0x4] sm:$0xf]
      %v2205 = vld [vmem:[%s2202 + $0x8] sm:$0xf]
      %v2206 = vld [vmem:[%s2202 + $0xc] sm:$0xf]
      %v2207 = vld [vmem:[%s2202 + $0x10] sm:$0xf]
      %v2208 = vld [vmem:[%s2202 + $0x14] sm:$0xf]
      %v2209 = vld [vmem:[%s2202 + $0x18] sm:$0xf]
      %v2210 = vld [vmem:[%s2202 + $0x1c] sm:$0xf]
      %v2211 = vld [vmem:[%s2202 + $0x20] sm:$0xf]
      %v2212 = vld [vmem:[%s2202 + $0x24] sm:$0xf]
      %v2213 = vld [vmem:[%s2202 + $0x28] sm:$0xf]
      %v2214 = vld [vmem:[%s2202 + $0x2c] sm:$0xf]
      %v2215 = vld [vmem:[%s2202 + $0x30] sm:$0xf]
      %v2216 = vld [vmem:[%s2202 + $0x34] sm:$0xf]
      %v2217 = vld [vmem:[%s2202 + $0x38] sm:$0xf]
      %v2218 = vld [vmem:[%s2202 + $0x3c] sm:$0xf]
      %v2235 = vunpack.c.l.b16 %v2203
      %v2236 = vunpack.c.l.b16 %v2204
      %v2237 = vunpack.c.l.b16 %v2205
      %v2238 = vunpack.c.l.b16 %v2206
      %v2239 = vunpack.c.l.b16 %v2207
      %v2240 = vunpack.c.l.b16 %v2208
      %v2241 = vunpack.c.l.b16 %v2209
      %v2242 = vunpack.c.l.b16 %v2210
      %v2243 = vunpack.c.l.b16 %v2211
      %v2244 = vunpack.c.l.b16 %v2212
      %v2245 = vunpack.c.l.b16 %v2213
      %v2246 = vunpack.c.l.b16 %v2214
      %v2247 = vunpack.c.l.b16 %v2215
      %v2248 = vunpack.c.l.b16 %v2216
      %v2249 = vunpack.c.l.b16 %v2217
      %v2250 = vunpack.c.l.b16 %v2218
      %v2251 = vpack.c.b16 %v2236, %v2235
      %v2252 = vpack.c.b16 %v2238, %v2237
      %v2253 = vpack.c.b16 %v2240, %v2239
      %v2254 = vpack.c.b16 %v2242, %v2241
      %v2255 = vpack.c.b16 %v2244, %v2243
      %v2256 = vpack.c.b16 %v2246, %v2245
      %v2257 = vpack.c.b16 %v2248, %v2247
      %v2258 = vpack.c.b16 %v2250, %v2249
      %2267 = vmatprep.subr.bf16.mxu0 0
      %2268 = vmatpush1.bf16.msra.mxu0 %v2251
      %2269 = vmatprep.subr.bf16.mxu0 0
      %2270 = vmatpush1.bf16.msra.mxu0 %v2252
      %2271 = vmatprep.subr.bf16.mxu0 0
      %2272 = vmatpush1.bf16.msra.mxu0 %v2253
      %2273 = vmatprep.subr.bf16.mxu0 0
      %2274 = vmatpush1.bf16.msra.mxu0 %v2254
      %2275 = vmatprep.subr.bf16.mxu0 0
      %2276 = vmatpush1.bf16.msra.mxu0 %v2255
      %2277 = vmatprep.subr.bf16.mxu0 0
      %2278 = vmatpush1.bf16.msra.mxu0 %v2256
      %2279 = vmatprep.subr.bf16.mxu0 0
      %2280 = vmatpush1.bf16.msra.mxu0 %v2257
      %2281 = vmatprep.subr.bf16.mxu0 0
      %2282 = vmatpush1.bf16.msra.mxu0 %v2258
      %2283 = vmatprep.subr.bf16.mxu0 0
      %2284 = vmatpush1.bf16.msra.mxu0 0
      %2285 = vmatprep.subr.bf16.mxu0 0
      %2286 = vmatpush1.bf16.msra.mxu0 0
      %2287 = vmatprep.subr.bf16.mxu0 0
      %2288 = vmatpush1.bf16.msra.mxu0 0
      %2289 = vmatprep.subr.bf16.mxu0 0
      %2290 = vmatpush1.bf16.msra.mxu0 0
      %2291 = vmatprep.subr.bf16.mxu0 0
      %2292 = vmatpush1.bf16.msra.mxu0 0
      %2293 = vmatprep.subr.bf16.mxu0 0
      %2294 = vmatpush1.bf16.msra.mxu0 0
      %2295 = vmatprep.subr.bf16.mxu0 0
      %2296 = vmatpush1.bf16.msra.mxu0 0
      %2297 = vmatprep.subr.bf16.mxu0 0
      %2298 = vmatpush1.bf16.msra.mxu0 0
      %2299 = vmatprep.mubr.bf16.mxu0 0
      %2300 = vmatmul.mubr.bf16.gmra.mrb[0].mxu0 %v2194
      %v2301 = vpop.f32.mrb[0].mxu0
      %v2302 = vadd.f32 0.0, %v2301
      %v2303 = vpop.f32.mrb[0].mxu0
      %v2304 = vpop.f32.mrb[0].mxu0
      %v2305 = vadd.f32 0.0, %v2304
      %v2306 = vpop.f32.mrb[0].mxu0
      %2307 = vmatprep.mubr.bf16.mxu0 0
      %2308 = vmatmul.mubr.bf16.gmra.mrb[0].mxu0 %v2195
      %v2309 = vpop.f32.mrb[0].mxu0
      %v2310 = vadd.f32 0.0, %v2309
      %v2311 = vpop.f32.mrb[0].mxu0
      %v2312 = vpop.f32.mrb[0].mxu0
      %v2313 = vadd.f32 0.0, %v2312
      %v2314 = vpop.f32.mrb[0].mxu0
      %2315 = vmatprep.mubr.bf16.mxu0 0
      %2316 = vmatmul.mubr.bf16.gmra.mrb[0].mxu0 %v2196
      %v2317 = vpop.f32.mrb[0].mxu0
      %v2318 = vadd.f32 0.0, %v2317
      %v2319 = vpop.f32.mrb[0].mxu0
      %v2320 = vpop.f32.mrb[0].mxu0
      %v2321 = vadd.f32 0.0, %v2320
      %v2322 = vpop.f32.mrb[0].mxu0
      %2323 = vmatprep.mubr.bf16.mxu0 0
      %2324 = vmatmul.mubr.bf16.gmra.mrb[0].mxu0 %v2197
      %v2325 = vpop.f32.mrb[0].mxu0
      %v2326 = vadd.f32 0.0, %v2325
      %v2327 = vpop.f32.mrb[0].mxu0
      %v2328 = vpop.f32.mrb[0].mxu0
      %v2329 = vadd.f32 0.0, %v2328
      %v2330 = vpop.f32.mrb[0].mxu0
      %2331 = vmatprep.mubr.bf16.mxu0 0
      %2332 = vmatmul.mubr.bf16.gmra.mrb[0].mxu0 %v2198
      %v2333 = vpop.f32.mrb[0].mxu0
      %v2334 = vadd.f32 0.0, %v2333
      %v2335 = vpop.f32.mrb[0].mxu0
      %v2336 = vpop.f32.mrb[0].mxu0
      %v2337 = vadd.f32 0.0, %v2336
      %v2338 = vpop.f32.mrb[0].mxu0
      %2339 = vmatprep.mubr.bf16.mxu0 0
      %2340 = vmatmul.mubr.bf16.gmra.mrb[0].mxu0 %v2199
      %v2341 = vpop.f32.mrb[0].mxu0
      %v2342 = vadd.f32 0.0, %v2341
      %v2343 = vpop.f32.mrb[0].mxu0
      %v2344 = vpop.f32.mrb[0].mxu0
      %v2345 = vadd.f32 0.0, %v2344
      %v2346 = vpop.f32.mrb[0].mxu0
      %2347 = vmatprep.mubr.bf16.mxu0 0
      %2348 = vmatmul.mubr.bf16.gmra.mrb[0].mxu0 %v2200
      %v2349 = vpop.f32.mrb[0].mxu0
      %v2350 = vadd.f32 0.0, %v2349
      %v2351 = vpop.f32.mrb[0].mxu0
      %v2352 = vpop.f32.mrb[0].mxu0
      %v2353 = vadd.f32 0.0, %v2352
      %v2354 = vpop.f32.mrb[0].mxu0
      %2355 = vmatprep.mubr.bf16.mxu0 0
      %2356 = vmatmul.mubr.bf16.gmra.mrb[0].mxu0 %v2201
      %v2357 = vpop.f32.mrb[0].mxu0
      %v2358 = vadd.f32 0.0, %v2357
      %v2359 = vpop.f32.mrb[0].mxu0
      %v2360 = vpop.f32.mrb[0].mxu0
      %v2361 = vadd.f32 0.0, %v2360
      %v2362 = vpop.f32.mrb[0].mxu0
      %2363 = vdwg.mxu0
      %v2364 = vadd.f32 %v2162, %v2302
      %v2365 = vadd.f32 %v2163, %v2305
      %v2366 = vadd.f32 %v2164, %v2310
      %v2367 = vadd.f32 %v2165, %v2313
      %v2368 = vadd.f32 %v2166, %v2318
      %v2369 = vadd.f32 %v2167, %v2321
      %v2370 = vadd.f32 %v2168, %v2326
      %v2371 = vadd.f32 %v2169, %v2329
      %v2372 = vadd.f32 %v2170, %v2334
      %v2373 = vadd.f32 %v2171, %v2337
      %v2374 = vadd.f32 %v2172, %v2342
      %v2375 = vadd.f32 %v2173, %v2345
      %v2376 = vadd.f32 %v2174, %v2350
      %v2377 = vadd.f32 %v2175, %v2353
      %v2378 = vadd.f32 %v2176, %v2358
      %v2379 = vadd.f32 %v2177, %v2361
      %v2380 = vld [vmem:[%s1975 + $0x2] sm:$0xff]
      %v2381 = vld [vmem:[%s1975 + $0xa] sm:$0xff]
      %v2382 = vld [vmem:[%s1975 + $0x1a] sm:$0xff]
      %v2383 = vld [vmem:[%s1975 + $0x22] sm:$0xff]
      %v2384 = vld [vmem:[%s1975 + $0x32] sm:$0xff]
      %v2385 = vld [vmem:[%s1975 + $0x3a] sm:$0xff]
      %v2386 = vld [vmem:[%s1975 + $0x4a] sm:$0xff]
      %v2387 = vld [vmem:[%s1975 + $0x52] sm:$0xff]
      %v2388 = vld [vmem:[%s1975 + $0x62] sm:$0xff]
      %v2389 = vld [vmem:[%s1975 + $0x6a] sm:$0xff]
      %v2390 = vld [vmem:[%s1975 + $0x7a] sm:$0xff]
      %v2391 = vld [vmem:[%s1975 + $0x82] sm:$0xff]
      %v2392 = vld [vmem:[%s1975 + $0x92] sm:$0xff]
      %v2393 = vld [vmem:[%s1975 + $0x9a] sm:$0xff]
      %v2394 = vld [vmem:[%s1975 + $0xaa] sm:$0xff]
      %v2395 = vld [vmem:[%s1975 + $0xb2] sm:$0xff]
      %v2396 = vpack.c.bf16 %v2381, %v2380
      %v2397 = vpack.c.bf16 %v2383, %v2382
      %v2398 = vpack.c.bf16 %v2385, %v2384
      %v2399 = vpack.c.bf16 %v2387, %v2386
      %v2400 = vpack.c.bf16 %v2389, %v2388
      %v2401 = vpack.c.bf16 %v2391, %v2390
      %v2402 = vpack.c.bf16 %v2393, %v2392
      %v2403 = vpack.c.bf16 %v2395, %v2394
      %s2404 = scalar_lea.vmem %s2, 512
      %v2405 = vld [vmem:[%s2404] sm:$0xf]
      %v2406 = vld [vmem:[%s2404 + $0x4] sm:$0xf]
      %v2407 = vld [vmem:[%s2404 + $0x8] sm:$0xf]
      %v2408 = vld [vmem:[%s2404 + $0xc] sm:$0xf]
      %v2409 = vld [vmem:[%s2404 + $0x10] sm:$0xf]
      %v2410 = vld [vmem:[%s2404 + $0x14] sm:$0xf]
      %v2411 = vld [vmem:[%s2404 + $0x18] sm:$0xf]
      %v2412 = vld [vmem:[%s2404 + $0x1c] sm:$0xf]
      %v2413 = vld [vmem:[%s2404 + $0x20] sm:$0xf]
      %v2414 = vld [vmem:[%s2404 + $0x24] sm:$0xf]
      %v2415 = vld [vmem:[%s2404 + $0x28] sm:$0xf]
      %v2416 = vld [vmem:[%s2404 + $0x2c] sm:$0xf]
      %v2417 = vld [vmem:[%s2404 + $0x30] sm:$0xf]
      %v2418 = vld [vmem:[%s2404 + $0x34] sm:$0xf]
      %v2419 = vld [vmem:[%s2404 + $0x38] sm:$0xf]
      %v2420 = vld [vmem:[%s2404 + $0x3c] sm:$0xf]
      %v2437 = vunpack.c.l.b16 %v2405
      %v2438 = vunpack.c.l.b16 %v2406
      %v2439 = vunpack.c.l.b16 %v2407
      %v2440 = vunpack.c.l.b16 %v2408
      %v2441 = vunpack.c.l.b16 %v2409
      %v2442 = vunpack.c.l.b16 %v2410
      %v2443 = vunpack.c.l.b16 %v2411
      %v2444 = vunpack.c.l.b16 %v2412
      %v2445 = vunpack.c.l.b16 %v2413
      %v2446 = vunpack.c.l.b16 %v2414
      %v2447 = vunpack.c.l.b16 %v2415
      %v2448 = vunpack.c.l.b16 %v2416
      %v2449 = vunpack.c.l.b16 %v2417
      %v2450 = vunpack.c.l.b16 %v2418
      %v2451 = vunpack.c.l.b16 %v2419
      %v2452 = vunpack.c.l.b16 %v2420
      %v2453 = vpack.c.b16 %v2438, %v2437
      %v2454 = vpack.c.b16 %v2440, %v2439
      %v2455 = vpack.c.b16 %v2442, %v2441
      %v2456 = vpack.c.b16 %v2444, %v2443
      %v2457 = vpack.c.b16 %v2446, %v2445
      %v2458 = vpack.c.b16 %v2448, %v2447
      %v2459 = vpack.c.b16 %v2450, %v2449
      %v2460 = vpack.c.b16 %v2452, %v2451
      %2469 = vmatprep.subr.bf16.mxu0 0
      %2470 = vmatpush1.bf16.msra.mxu0 %v2453
      %2471 = vmatprep.subr.bf16.mxu0 0
      %2472 = vmatpush1.bf16.msra.mxu0 %v2454
      %2473 = vmatprep.subr.bf16.mxu0 0
      %2474 = vmatpush1.bf16.msra.mxu0 %v2455
      %2475 = vmatprep.subr.bf16.mxu0 0
      %2476 = vmatpush1.bf16.msra.mxu0 %v2456
      %2477 = vmatprep.subr.bf16.mxu0 0
      %2478 = vmatpush1.bf16.msra.mxu0 %v2457
      %2479 = vmatprep.subr.bf16.mxu0 0
      %2480 = vmatpush1.bf16.msra.mxu0 %v2458
      %2481 = vmatprep.subr.bf16.mxu0 0
      %2482 = vmatpush1.bf16.msra.mxu0 %v2459
      %2483 = vmatprep.subr.bf16.mxu0 0
      %2484 = vmatpush1.bf16.msra.mxu0 %v2460
      %2485 = vmatprep.subr.bf16.mxu0 0
      %2486 = vmatpush1.bf16.msra.mxu0 0
      %2487 = vmatprep.subr.bf16.mxu0 0
      %2488 = vmatpush1.bf16.msra.mxu0 0
      %2489 = vmatprep.subr.bf16.mxu0 0
      %2490 = vmatpush1.bf16.msra.mxu0 0
      %2491 = vmatprep.subr.bf16.mxu0 0
      %2492 = vmatpush1.bf16.msra.mxu0 0
      %2493 = vmatprep.subr.bf16.mxu0 0
      %2494 = vmatpush1.bf16.msra.mxu0 0
      %2495 = vmatprep.subr.bf16.mxu0 0
      %2496 = vmatpush1.bf16.msra.mxu0 0
      %2497 = vmatprep.subr.bf16.mxu0 0
      %2498 = vmatpush1.bf16.msra.mxu0 0
      %2499 = vmatprep.subr.bf16.mxu0 0
      %2500 = vmatpush1.bf16.msra.mxu0 0
      %2501 = vmatprep.mubr.bf16.mxu0 0
      %2502 = vmatmul.mubr.bf16.gmra.mrb[0].mxu0 %v2396
      %v2503 = vpop.f32.mrb[0].mxu0
      %v2504 = vadd.f32 0.0, %v2503
      %v2505 = vpop.f32.mrb[0].mxu0
      %v2506 = vpop.f32.mrb[0].mxu0
      %v2507 = vadd.f32 0.0, %v2506
      %v2508 = vpop.f32.mrb[0].mxu0
      %2509 = vmatprep.mubr.bf16.mxu0 0
      %2510 = vmatmul.mubr.bf16.gmra.mrb[0].mxu0 %v2397
      %v2511 = vpop.f32.mrb[0].mxu0
      %v2512 = vadd.f32 0.0, %v2511
      %v2513 = vpop.f32.mrb[0].mxu0
      %v2514 = vpop.f32.mrb[0].mxu0
      %v2515 = vadd.f32 0.0, %v2514
      %v2516 = vpop.f32.mrb[0].mxu0
      %2517 = vmatprep.mubr.bf16.mxu0 0
      %2518 = vmatmul.mubr.bf16.gmra.mrb[0].mxu0 %v2398
      %v2519 = vpop.f32.mrb[0].mxu0
      %v2520 = vadd.f32 0.0, %v2519
      %v2521 = vpop.f32.mrb[0].mxu0
      %v2522 = vpop.f32.mrb[0].mxu0
      %v2523 = vadd.f32 0.0, %v2522
      %v2524 = vpop.f32.mrb[0].mxu0
      %2525 = vmatprep.mubr.bf16.mxu0 0
      %2526 = vmatmul.mubr.bf16.gmra.mrb[0].mxu0 %v2399
      %v2527 = vpop.f32.mrb[0].mxu0
      %v2528 = vadd.f32 0.0, %v2527
      %v2529 = vpop.f32.mrb[0].mxu0
      %v2530 = vpop.f32.mrb[0].mxu0
      %v2531 = vadd.f32 0.0, %v2530
      %v2532 = vpop.f32.mrb[0].mxu0
      %2533 = vmatprep.mubr.bf16.mxu0 0
      %2534 = vmatmul.mubr.bf16.gmra.mrb[0].mxu0 %v2400
      %v2535 = vpop.f32.mrb[0].mxu0
      %v2536 = vadd.f32 0.0, %v2535
      %v2537 = vpop.f32.mrb[0].mxu0
      %v2538 = vpop.f32.mrb[0].mxu0
      %v2539 = vadd.f32 0.0, %v2538
      %v2540 = vpop.f32.mrb[0].mxu0
      %2541 = vmatprep.mubr.bf16.mxu0 0
      %2542 = vmatmul.mubr.bf16.gmra.mrb[0].mxu0 %v2401
      %v2543 = vpop.f32.mrb[0].mxu0
      %v2544 = vadd.f32 0.0, %v2543
      %v2545 = vpop.f32.mrb[0].mxu0
      %v2546 = vpop.f32.mrb[0].mxu0
      %v2547 = vadd.f32 0.0, %v2546
      %v2548 = vpop.f32.mrb[0].mxu0
      %2549 = vmatprep.mubr.bf16.mxu0 0
      %2550 = vmatmul.mubr.bf16.gmra.mrb[0].mxu0 %v2402
      %v2551 = vpop.f32.mrb[0].mxu0
      %v2552 = vadd.f32 0.0, %v2551
      %v2553 = vpop.f32.mrb[0].mxu0
      %v2554 = vpop.f32.mrb[0].mxu0
      %v2555 = vadd.f32 0.0, %v2554
      %v2556 = vpop.f32.mrb[0].mxu0
      %2557 = vmatprep.mubr.bf16.mxu0 0
      %2558 = vmatmul.mubr.bf16.gmra.mrb[0].mxu0 %v2403
      %v2559 = vpop.f32.mrb[0].mxu0
      %v2560 = vadd.f32 0.0, %v2559
      %v2561 = vpop.f32.mrb[0].mxu0
      %v2562 = vpop.f32.mrb[0].mxu0
      %v2563 = vadd.f32 0.0, %v2562
      %v2564 = vpop.f32.mrb[0].mxu0
      %2565 = vdwg.mxu0
      %v2566 = vadd.f32 %v2364, %v2504
      %v2567 = vadd.f32 %v2365, %v2507
      %v2568 = vadd.f32 %v2366, %v2512
      %v2569 = vadd.f32 %v2367, %v2515
      %v2570 = vadd.f32 %v2368, %v2520
      %v2571 = vadd.f32 %v2369, %v2523
      %v2572 = vadd.f32 %v2370, %v2528
      %v2573 = vadd.f32 %v2371, %v2531
      %v2574 = vadd.f32 %v2372, %v2536
      %v2575 = vadd.f32 %v2373, %v2539
      %v2576 = vadd.f32 %v2374, %v2544
      %v2577 = vadd.f32 %v2375, %v2547
      %v2578 = vadd.f32 %v2376, %v2552
      %v2579 = vadd.f32 %v2377, %v2555
      %v2580 = vadd.f32 %v2378, %v2560
      %v2581 = vadd.f32 %v2379, %v2563
      %v2582 = vld [vmem:[%s5] sm:$0x1]
      %v2584 = vlaneseq
      %v2585 = vshrl.u32 %v2584, 7
      %v2586 = vsub.s32 0, %v2585
      %v2587 = vrot.slane %v2582, %v2586
      %v2589 = vadd.f32 %v2566, %v2587
      %v2590 = vadd.f32 %v2567, %v2587
      %v2591 = vadd.f32 %v2568, %v2587
      %v2592 = vadd.f32 %v2569, %v2587
      %v2593 = vadd.f32 %v2570, %v2587
      %v2594 = vadd.f32 %v2571, %v2587
      %v2595 = vadd.f32 %v2572, %v2587
      %v2596 = vadd.f32 %v2573, %v2587
      %v2597 = vadd.f32 %v2574, %v2587
      %v2598 = vadd.f32 %v2575, %v2587
      %v2599 = vadd.f32 %v2576, %v2587
      %v2600 = vadd.f32 %v2577, %v2587
      %v2601 = vadd.f32 %v2578, %v2587
      %v2602 = vadd.f32 %v2579, %v2587
      %v2603 = vadd.f32 %v2580, %v2587
      %v2604 = vadd.f32 %v2581, %v2587
      %v2605 = vmax.f32 %v2589, 0.0
      %v2606 = vmax.f32 %v2590, 0.0
      %v2607 = vmax.f32 %v2591, 0.0
      %v2608 = vmax.f32 %v2592, 0.0
      %v2609 = vmax.f32 %v2593, 0.0
      %v2610 = vmax.f32 %v2594, 0.0
      %v2611 = vmax.f32 %v2595, 0.0
      %v2612 = vmax.f32 %v2596, 0.0
      %v2613 = vmax.f32 %v2597, 0.0
      %v2614 = vmax.f32 %v2598, 0.0
      %v2615 = vmax.f32 %v2599, 0.0
      %v2616 = vmax.f32 %v2600, 0.0
      %v2617 = vmax.f32 %v2601, 0.0
      %v2618 = vmax.f32 %v2602, 0.0
      %v2619 = vmax.f32 %v2603, 0.0
      %v2620 = vmax.f32 %v2604, 0.0
      %v2621 = vpack.c.bf16 %v2606, %v2605
      %v2622 = vpack.c.bf16 %v2608, %v2607
      %v2623 = vpack.c.bf16 %v2610, %v2609
      %v2624 = vpack.c.bf16 %v2612, %v2611
      %v2625 = vpack.c.bf16 %v2614, %v2613
      %v2626 = vpack.c.bf16 %v2616, %v2615
      %v2627 = vpack.c.bf16 %v2618, %v2617
      %v2628 = vpack.c.bf16 %v2620, %v2619
      %v2629 = vld [vmem:[%s3] sm:$0xf]
      %v2630 = vld [vmem:[%s3 + $0x4] sm:$0xf]
      %v2631 = vld [vmem:[%s3 + $0x8] sm:$0xf]
      %v2632 = vld [vmem:[%s3 + $0xc] sm:$0xf]
      %v2633 = vld [vmem:[%s3 + $0x10] sm:$0xf]
      %v2634 = vld [vmem:[%s3 + $0x14] sm:$0xf]
      %v2635 = vld [vmem:[%s3 + $0x18] sm:$0xf]
      %v2636 = vld [vmem:[%s3 + $0x1c] sm:$0xf]
      %v2637 = vld [vmem:[%s3 + $0x20] sm:$0xf]
      %v2638 = vld [vmem:[%s3 + $0x24] sm:$0xf]
      %v2639 = vld [vmem:[%s3 + $0x28] sm:$0xf]
      %v2640 = vld [vmem:[%s3 + $0x2c] sm:$0xf]
      %v2641 = vld [vmem:[%s3 + $0x30] sm:$0xf]
      %v2642 = vld [vmem:[%s3 + $0x34] sm:$0xf]
      %v2643 = vld [vmem:[%s3 + $0x38] sm:$0xf]
      %v2644 = vld [vmem:[%s3 + $0x3c] sm:$0xf]
      %s2645 = smul.u32 %s788, 2
      %s2646 = smul.addr %s2645, 4
      %s2647 = scalar_lea.vmem %s292, %s2646
      %v2648 = vld [vmem:[%s2647] sm:$0xf]
      %v2649 = vld [vmem:[%s2647 + $0x4] sm:$0xf]
      %v2650 = vld [vmem:[%s2647 + $0x8] sm:$0xf]
      %v2651 = vld [vmem:[%s2647 + $0xc] sm:$0xf]
      %v2652 = vld [vmem:[%s2647 + $0x10] sm:$0xf]
      %v2653 = vld [vmem:[%s2647 + $0x14] sm:$0xf]
      %v2654 = vld [vmem:[%s2647 + $0x18] sm:$0xf]
      %v2655 = vld [vmem:[%s2647 + $0x1c] sm:$0xf]
      %v2656 = vld [vmem:[%s2647 + $0x20] sm:$0xf]
      %v2657 = vld [vmem:[%s2647 + $0x24] sm:$0xf]
      %v2658 = vld [vmem:[%s2647 + $0x28] sm:$0xf]
      %v2659 = vld [vmem:[%s2647 + $0x2c] sm:$0xf]
      %v2660 = vld [vmem:[%s2647 + $0x30] sm:$0xf]
      %v2661 = vld [vmem:[%s2647 + $0x34] sm:$0xf]
      %v2662 = vld [vmem:[%s2647 + $0x38] sm:$0xf]
      %v2663 = vld [vmem:[%s2647 + $0x3c] sm:$0xf]
      %v2664 = vunpack.c.l.bf16 %v2648
      %v2665 = vunpack.c.l.bf16 %v2649
      %v2666 = vunpack.c.l.bf16 %v2650
      %v2667 = vunpack.c.l.bf16 %v2651
      %v2668 = vunpack.c.l.bf16 %v2652
      %v2669 = vunpack.c.l.bf16 %v2653
      %v2670 = vunpack.c.l.bf16 %v2654
      %v2671 = vunpack.c.l.bf16 %v2655
      %v2672 = vunpack.c.l.bf16 %v2656
      %v2673 = vunpack.c.l.bf16 %v2657
      %v2674 = vunpack.c.l.bf16 %v2658
      %v2675 = vunpack.c.l.bf16 %v2659
      %v2676 = vunpack.c.l.bf16 %v2660
      %v2677 = vunpack.c.l.bf16 %v2661
      %v2678 = vunpack.c.l.bf16 %v2662
      %v2679 = vunpack.c.l.bf16 %v2663
      %v2680 = vld [vmem:[%s6] sm:$0x1]
      %v2682 = vlaneseq
      %v2683 = vshrl.u32 %v2682, 7
      %v2684 = vsub.s32 0, %v2683
      %v2685 = vrot.slane %v2680, %v2684
      %v2703 = vunpack.c.l.b16 %v2629
      %v2704 = vunpack.c.l.b16 %v2630
      %v2705 = vunpack.c.l.b16 %v2631
      %v2706 = vunpack.c.l.b16 %v2632
      %v2707 = vunpack.c.l.b16 %v2633
      %v2708 = vunpack.c.l.b16 %v2634
      %v2709 = vunpack.c.l.b16 %v2635
      %v2710 = vunpack.c.l.b16 %v2636
      %v2711 = vunpack.c.l.b16 %v2637
      %v2712 = vunpack.c.l.b16 %v2638
      %v2713 = vunpack.c.l.b16 %v2639
      %v2714 = vunpack.c.l.b16 %v2640
      %v2715 = vunpack.c.l.b16 %v2641
      %v2716 = vunpack.c.l.b16 %v2642
      %v2717 = vunpack.c.l.b16 %v2643
      %v2718 = vunpack.c.l.b16 %v2644
      %v2719 = vpack.c.b16 %v2704, %v2703
      %v2720 = vpack.c.b16 %v2706, %v2705
      %v2721 = vpack.c.b16 %v2708, %v2707
      %v2722 = vpack.c.b16 %v2710, %v2709
      %v2723 = vpack.c.b16 %v2712, %v2711
      %v2724 = vpack.c.b16 %v2714, %v2713
      %v2725 = vpack.c.b16 %v2716, %v2715
      %v2726 = vpack.c.b16 %v2718, %v2717
      %2735 = vmatprep.subr.bf16.mxu0 0
      %2736 = vmatpush1.bf16.msra.mxu0 %v2719
      %2737 = vmatprep.subr.bf16.mxu0 0
      %2738 = vmatpush1.bf16.msra.mxu0 %v2720
      %2739 = vmatprep.subr.bf16.mxu0 0
      %2740 = vmatpush1.bf16.msra.mxu0 %v2721
      %2741 = vmatprep.subr.bf16.mxu0 0
      %2742 = vmatpush1.bf16.msra.mxu0 %v2722
      %2743 = vmatprep.subr.bf16.mxu0 0
      %2744 = vmatpush1.bf16.msra.mxu0 %v2723
      %2745 = vmatprep.subr.bf16.mxu0 0
      %2746 = vmatpush1.bf16.msra.mxu0 %v2724
      %2747 = vmatprep.subr.bf16.mxu0 0
      %2748 = vmatpush1.bf16.msra.mxu0 %v2725
      %2749 = vmatprep.subr.bf16.mxu0 0
      %2750 = vmatpush1.bf16.msra.mxu0 %v2726
      %2751 = vmatprep.subr.bf16.mxu0 0
      %2752 = vmatpush1.bf16.msra.mxu0 0
      %2753 = vmatprep.subr.bf16.mxu0 0
      %2754 = vmatpush1.bf16.msra.mxu0 0
      %2755 = vmatprep.subr.bf16.mxu0 0
      %2756 = vmatpush1.bf16.msra.mxu0 0
      %2757 = vmatprep.subr.bf16.mxu0 0
      %2758 = vmatpush1.bf16.msra.mxu0 0
      %2759 = vmatprep.subr.bf16.mxu0 0
      %2760 = vmatpush1.bf16.msra.mxu0 0
      %2761 = vmatprep.subr.bf16.mxu0 0
      %2762 = vmatpush1.bf16.msra.mxu0 0
      %2763 = vmatprep.subr.bf16.mxu0 0
      %2764 = vmatpush1.bf16.msra.mxu0 0
      %2765 = vmatprep.subr.bf16.mxu0 0
      %2766 = vmatpush1.bf16.msra.mxu0 0
      %2767 = vmatprep.mubr.bf16.mxu0 0
      %2768 = vmatmul.mubr.bf16.gmra.mrb[0].mxu0 %v2621
      %v2769 = vpop.f32.mrb[0].mxu0
      %v2770 = vadd.f32 %v2685, %v2769
      %v2771 = vpop.f32.mrb[0].mxu0
      %v2772 = vpop.f32.mrb[0].mxu0
      %v2773 = vadd.f32 %v2685, %v2772
      %v2774 = vpop.f32.mrb[0].mxu0
      %2775 = vmatprep.mubr.bf16.mxu0 0
      %2776 = vmatmul.mubr.bf16.gmra.mrb[0].mxu0 %v2622
      %v2777 = vpop.f32.mrb[0].mxu0
      %v2778 = vadd.f32 %v2685, %v2777
      %v2779 = vpop.f32.mrb[0].mxu0
      %v2780 = vpop.f32.mrb[0].mxu0
      %v2781 = vadd.f32 %v2685, %v2780
      %v2782 = vpop.f32.mrb[0].mxu0
      %2783 = vmatprep.mubr.bf16.mxu0 0
      %2784 = vmatmul.mubr.bf16.gmra.mrb[0].mxu0 %v2623
      %v2785 = vpop.f32.mrb[0].mxu0
      %v2786 = vadd.f32 %v2685, %v2785
      %v2787 = vpop.f32.mrb[0].mxu0
      %v2788 = vpop.f32.mrb[0].mxu0
      %v2789 = vadd.f32 %v2685, %v2788
      %v2790 = vpop.f32.mrb[0].mxu0
      %2791 = vmatprep.mubr.bf16.mxu0 0
      %2792 = vmatmul.mubr.bf16.gmra.mrb[0].mxu0 %v2624
      %v2793 = vpop.f32.mrb[0].mxu0
      %v2794 = vadd.f32 %v2685, %v2793
      %v2795 = vpop.f32.mrb[0].mxu0
      %v2796 = vpop.f32.mrb[0].mxu0
      %v2797 = vadd.f32 %v2685, %v2796
      %v2798 = vpop.f32.mrb[0].mxu0
      %2799 = vmatprep.mubr.bf16.mxu0 0
      %2800 = vmatmul.mubr.bf16.gmra.mrb[0].mxu0 %v2625
      %v2801 = vpop.f32.mrb[0].mxu0
      %v2802 = vadd.f32 %v2685, %v2801
      %v2803 = vpop.f32.mrb[0].mxu0
      %v2804 = vpop.f32.mrb[0].mxu0
      %v2805 = vadd.f32 %v2685, %v2804
      %v2806 = vpop.f32.mrb[0].mxu0
      %2807 = vmatprep.mubr.bf16.mxu0 0
      %2808 = vmatmul.mubr.bf16.gmra.mrb[0].mxu0 %v2626
      %v2809 = vpop.f32.mrb[0].mxu0
      %v2810 = vadd.f32 %v2685, %v2809
      %v2811 = vpop.f32.mrb[0].mxu0
      %v2812 = vpop.f32.mrb[0].mxu0
      %v2813 = vadd.f32 %v2685, %v2812
      %v2814 = vpop.f32.mrb[0].mxu0
      %2815 = vmatprep.mubr.bf16.mxu0 0
      %2816 = vmatmul.mubr.bf16.gmra.mrb[0].mxu0 %v2627
      %v2817 = vpop.f32.mrb[0].mxu0
      %v2818 = vadd.f32 %v2685, %v2817
      %v2819 = vpop.f32.mrb[0].mxu0
      %v2820 = vpop.f32.mrb[0].mxu0
      %v2821 = vadd.f32 %v2685, %v2820
      %v2822 = vpop.f32.mrb[0].mxu0
      %2823 = vmatprep.mubr.bf16.mxu0 0
      %2824 = vmatmul.mubr.bf16.gmra.mrb[0].mxu0 %v2628
      %v2825 = vpop.f32.mrb[0].mxu0
      %v2826 = vadd.f32 %v2685, %v2825
      %v2827 = vpop.f32.mrb[0].mxu0
      %v2828 = vpop.f32.mrb[0].mxu0
      %v2829 = vadd.f32 %v2685, %v2828
      %v2830 = vpop.f32.mrb[0].mxu0
      %2831 = vdwg.mxu0
      %v2832 = vadd.f32 %v2770, %v2664
      %v2833 = vadd.f32 %v2773, %v2665
      %v2834 = vadd.f32 %v2778, %v2666
      %v2835 = vadd.f32 %v2781, %v2667
      %v2836 = vadd.f32 %v2786, %v2668
      %v2837 = vadd.f32 %v2789, %v2669
      %v2838 = vadd.f32 %v2794, %v2670
      %v2839 = vadd.f32 %v2797, %v2671
      %v2840 = vadd.f32 %v2802, %v2672
      %v2841 = vadd.f32 %v2805, %v2673
      %v2842 = vadd.f32 %v2810, %v2674
      %v2843 = vadd.f32 %v2813, %v2675
      %v2844 = vadd.f32 %v2818, %v2676
      %v2845 = vadd.f32 %v2821, %v2677
      %v2846 = vadd.f32 %v2826, %v2678
      %v2847 = vadd.f32 %v2829, %v2679
      %v2848 = vmax.f32 %v2832, 0.0
      %v2849 = vmax.f32 %v2833, 0.0
      %v2850 = vmax.f32 %v2834, 0.0
      %v2851 = vmax.f32 %v2835, 0.0
      %v2852 = vmax.f32 %v2836, 0.0
      %v2853 = vmax.f32 %v2837, 0.0
      %v2854 = vmax.f32 %v2838, 0.0
      %v2855 = vmax.f32 %v2839, 0.0
      %v2856 = vmax.f32 %v2840, 0.0
      %v2857 = vmax.f32 %v2841, 0.0
      %v2858 = vmax.f32 %v2842, 0.0
      %v2859 = vmax.f32 %v2843, 0.0
      %v2860 = vmax.f32 %v2844, 0.0
      %v2861 = vmax.f32 %v2845, 0.0
      %v2862 = vmax.f32 %v2846, 0.0
      %v2863 = vmax.f32 %v2847, 0.0
      %2864 = vst [vmem:[%s302] sm:$0xff] %v2848
      %2865 = vst [vmem:[%s302 + $0x8] sm:$0xff] %v2849
      %2866 = vst [vmem:[%s302 + $0x10] sm:$0xff] %v2850
      %2867 = vst [vmem:[%s302 + $0x18] sm:$0xff] %v2851
      %2868 = vst [vmem:[%s302 + $0x20] sm:$0xff] %v2852
      %2869 = vst [vmem:[%s302 + $0x28] sm:$0xff] %v2853
      %2870 = vst [vmem:[%s302 + $0x30] sm:$0xff] %v2854
      %2871 = vst [vmem:[%s302 + $0x38] sm:$0xff] %v2855
      %2872 = vst [vmem:[%s302 + $0x40] sm:$0xff] %v2856
      %2873 = vst [vmem:[%s302 + $0x48] sm:$0xff] %v2857
      %2874 = vst [vmem:[%s302 + $0x50] sm:$0xff] %v2858
      %2875 = vst [vmem:[%s302 + $0x58] sm:$0xff] %v2859
      %2876 = vst [vmem:[%s302 + $0x60] sm:$0xff] %v2860
      %2877 = vst [vmem:[%s302 + $0x68] sm:$0xff] %v2861
      %2878 = vst [vmem:[%s302 + $0x70] sm:$0xff] %v2862
      %2879 = vst [vmem:[%s302 + $0x78] sm:$0xff] %v2863
      %s2880 = smul.u32 8, %s23
      %p2881 = scmp.lt.s32.totalorder %s22, 1
      %s2882 = scalar_select %p2881, %s22, 1
      %p2883 = scmp.lt.s32.totalorder %s2880, 15
      %s2884 = scalar_select %p2883, %s2880, 15
      %s2885 = smul.addr %s2884, 2
      %s2886 = smul.addr %s2882, 32
      %s2887 = sadd.s32 %s2885, %s2886
      %s2888 = smul.addr %s2887, 8
      %s2889 = scalar_lea.vmem %s7, %s2888
      // Predicated region
      $region53: #{bottleneck_forward.1} parent=47 // pred_check
        %p2890 = pneg %p202
      $region54: #{bottleneck_forward.1} parent=47 // pred_check_branch
        %2892 = sbr.rel (%p2890) target = $region56
      $region55: #{bottleneck_forward.1} parent=47 // pred_region
        %s2893 = smul.u32 8, %s23
      $region56: #{bottleneck_forward.1} parent=47 // pred_fallthru
        _
    $region48: #{bottleneck_forward.1} parent=5 // pred_fallthru
      _
    %p2894 = scmp.le.s32.totalorder 2, %s13
    // Predicated region
    $region57: #{bottleneck_forward.1} parent=5 // pred_check
      %p2895 = pneg %p2894
    $region58: #{bottleneck_forward.1} parent=5 // pred_check_branch
      %2897 = sbr.rel (%p2895) target = $region60
    $region59: #{bottleneck_forward.1} parent=5 // pred_region
      %s2898 = ssub.s32 %s13, 2
      // Predicated region
      $region61: #{bottleneck_forward.1} parent=59 // pred_check
        %p2899 = pneg %p208
      $region62: #{bottleneck_forward.1} parent=59 // pred_check_branch
        %2901 = sbr.rel (%p2899) target = $region64
      $region63: #{bottleneck_forward.1} parent=59 // pred_region
        %s2902 = smul.u32 8, %s25
        %p2903 = scmp.lt.s32.totalorder %s24, 1
        %s2904 = scalar_select %p2903, %s24, 1
        %p2905 = scmp.lt.s32.totalorder %s2902, 15
        %s2906 = scalar_select %p2905, %s2902, 15
        %s2907 = smul.addr %s2906, 2
        %s2908 = smul.addr %s2904, 32
        %s2909 = sadd.s32 %s2907, %s2908
        %s2910 = smul.addr %s2909, 8
        %s2911 = scalar_lea.vmem %s7, %s2910
      $region64: #{bottleneck_forward.1} parent=59 // pred_fallthru
        _
    $region60: #{bottleneck_forward.1} parent=5 // pred_fallthru
      _
  $region6: #{bottleneck_forward.1} parent=0 // loop_footer
    %s17 = sadd.s32 1, %s13
  $region7: #{bottleneck_forward.1} parent=0 // loop_footer_branch
    %12 = sbr.rel target = $region3
  $region8: #{bottleneck_forward.1} parent=0 // loop_exit
    _

</llo_original>
